<compile_context>
chip_gen: v5e
topology: v5e:2x2
jax: 0.10.0
libtpu: 0.0.40
codegen_flags: <defaults>
</compile_context>

<pallas_src>
import functools

import jax
import jax.numpy as jnp
from jax import lax
from jax.experimental import pallas as pl
from jax.experimental.pallas import tpu as pltpu

BN_EPS = 1e-5
LANE = 128


def _round_up(v, m):
    return (v + m - 1) // m * m


def _full_block_spec(shape):
    nd = len(shape)
    return pl.BlockSpec(tuple(shape), lambda i, nd=nd: (0,) * nd)


# ----------------------------------------------------------------------------
# Fused kernel builder (all shape/config info is static / closed over)
# ----------------------------------------------------------------------------
def _make_block_kernel(*, N, H, W, Ho, Wo, stride, equal_in_out,
                       Cin, Cmid, Cout, K1p, K2p):
    s = stride
    nslab = s * s                      # stride-parity sub-grids of the input
    Hs, Ws = H // s, W // s            # spatial dims of one parity slab
    Ms = N * Hs * Ws                   # pixels per slab
    M1 = N * Ho * Wo                   # output pixels
    inv_n1 = 1.0 / float(N * H * W)    # BN1 population size
    inv_n2 = 1.0 / float(M1)           # BN2 population size
    CP = LANE

    # 3x3 conv tap d in {0,1,2}: source index r = s*i + d - 1
    #   -> parity p = (d-1) mod s, window start inside the 1-padded slab.
    def _tap(d):
        p = (d - 1) % s
        return p, (d - 1 - p) // s + 1

    taps = [_tap(d) for d in range(3)]

    def _halo_fill(buf, interior, hh, ww, c):
        # Zero only the 1-pixel halo border, then write the interior
        # (no redundant full-buffer zero fill).
        buf[:, 0:1, :, :] = jnp.zeros((N, 1, ww + 2, c), jnp.float32)
        buf[:, hh + 1:hh + 2, :, :] = jnp.zeros((N, 1, ww + 2, c), jnp.float32)
        buf[:, 1:hh + 1, 0:1, :] = jnp.zeros((N, hh, 1, c), jnp.float32)
        buf[:, 1:hh + 1, ww + 1:ww + 2, :] = jnp.zeros((N, hh, 1, c), jnp.float32)
        buf[:, 1:hh + 1, 1:ww + 1, :] = interior

    def kernel(*refs):
        it = iter(refs)
        x_refs = [next(it) for _ in range(nslab)]       # (N,Hs,Ws,Cin) f32
        g1_ref, b1_ref, w1_ref, g2_ref, b2_ref, w2_ref, o_ref = (
            next(it) for _ in range(7))
        a1_scr = [next(it) for _ in range(nslab)]       # (N,Hs+2,Ws+2,Cin) f32
        a2_scr = next(it)                               # (N,Ho+2,Wo+2,Cmid) f32

        # ---- BN1: two-pass batch statistics over the whole input ----------
        x2d = [x_refs[k][...].reshape(Ms, Cin) for k in range(nslab)]
        tot = x2d[0].sum(axis=0, keepdims=True)
        for k in range(1, nslab):
            tot = tot + x2d[k].sum(axis=0, keepdims=True)
        mean1 = tot * inv_n1
        vtot = jnp.square(x2d[0] - mean1).sum(axis=0, keepdims=True)
        for k in range(1, nslab):
            vtot = vtot + jnp.square(x2d[k] - mean1).sum(axis=0, keepdims=True)
        var1 = jnp.maximum(vtot * inv_n1, 0.0)
        scale1 = g1_ref[...] * lax.rsqrt(var1 + BN_EPS)
        shift1 = b1_ref[...] - mean1 * scale1

        # ---- a1 = relu(bn1(x)) into zero-haloed VMEM scratch (per slab) ----
        for k in range(nslab):
            a1 = jnp.maximum(x2d[k] * scale1 + shift1, 0.0)
            _halo_fill(a1_scr[k], a1.reshape(N, Hs, Ws, Cin), Hs, Ws, Cin)

        # ---- conv1 (+ fused 1x1 shortcut): ONE im2col MXU matmul -----------
        cols = []
        for dh in range(3):
            ph, oh = taps[dh]
            for dw in range(3):
                pw, ow = taps[dw]
                win = a1_scr[ph * s + pw][:, oh:oh + Ho, ow:ow + Wo, :]
                cols.append(win.reshape(M1, Cin))
        if K1p > 9 * Cin:
            cols.append(jnp.zeros((M1, K1p - 9 * Cin), jnp.float32))
        p1 = jnp.concatenate(cols, axis=-1).astype(jnp.bfloat16)    # (M1,K1p)
        acc = jnp.dot(p1, w1_ref[...], preferred_element_type=jnp.float32)
        acc1 = acc[:, :Cmid]
        if not equal_in_out:
            # 1x1 stride-s shortcut input == centre-tap columns of p1; its
            # weights occupy columns [CP, CP+Cout) of w1.  Stage the result in
            # o_ref (VMEM) so it does not stay live across BN2/conv2.
            o_ref[...] = acc[:, CP:CP + Cout]

        # ---- BN2 (two-pass stats of the conv1 output) + ReLU ---------------
        mean2 = acc1.sum(axis=0, keepdims=True) * inv_n2
        var2 = jnp.maximum(
            jnp.square(acc1 - mean2).sum(axis=0, keepdims=True) * inv_n2, 0.0)
        scale2 = g2_ref[...] * lax.rsqrt(var2 + BN_EPS)
        shift2 = b2_ref[...] - mean2 * scale2
        a2 = jnp.maximum(acc1 * scale2 + shift2, 0.0)
        _halo_fill(a2_scr, a2.reshape(N, Ho, Wo, Cmid), Ho, Wo, Cmid)

        # ---- conv2 (3x3, stride 1): ONE im2col matmul + residual add -------
        cols2 = []
        for dh in range(3):
            for dw in range(3):
                win = a2_scr[:, dh:dh + Ho, dw:dw + Wo, :]
                cols2.append(win.reshape(M1, Cmid))
        if K2p > 9 * Cmid:
            cols2.append(jnp.zeros((M1, K2p - 9 * Cmid), jnp.float32))
        p2 = jnp.concatenate(cols2, axis=-1).astype(jnp.bfloat16)   # (M1,K2p)
        out = jnp.dot(p2, w2_ref[...],
                      preferred_element_type=jnp.float32)[:, :Cout]

        if equal_in_out:
            # Identity residual: re-load the raw input at the point of use.
            o_ref[...] = out + x_refs[0][...].reshape(M1, Cin)
        else:
            o_ref[...] = o_ref[...] + out

    return kernel


# ----------------------------------------------------------------------------
# Wrapper: layout plumbing only (NCHW->NHWC, stride-parity split of the raw
# input, im2col weight repacking).  No activation padding touches HBM.
# ----------------------------------------------------------------------------
@functools.partial(jax.jit, static_argnames=("stride", "equal_in_out"))
def wrn_basic_block_forward(x_nchw, params, stride, equal_in_out):
    N, Cin, H, W = x_nchw.shape
    s = int(stride)
    if s not in (1, 2):
        raise ValueError("WRN blocks use stride 1 or 2")
    if equal_in_out and s != 1:
        raise ValueError("equalInOut residual requires stride == 1")
    if H % s or W % s:
        raise ValueError("spatial dims must be divisible by the stride")

    Cmid = params["conv1_w"].shape[0]
    Cout = params["conv2_w"].shape[0]
    if equal_in_out and Cin != Cout:
        raise ValueError("equalInOut requires in_planes == out_planes")
    Ho, Wo = H // s, W // s
    Hs, Ws = H // s, W // s
    M1 = N * Ho * Wo
    K1p = _round_up(9 * Cin, LANE)
    K2p = _round_up(9 * Cmid, LANE)

    # NCHW -> NHWC; real channels only (lane padding happens in VMEM, not HBM).
    x_nhwc = jnp.transpose(x_nchw, (0, 2, 3, 1)).astype(jnp.float32)
    # Stride-s parity (space-to-depth style) split of the RAW input so every
    # in-kernel conv window is a contiguous (un-strided) slice.
    slabs = [x_nhwc[:, ph::s, pw::s, :] for ph in range(s) for pw in range(s)]

    def pack3x3(w, kp, npad):
        co, ci = w.shape[0], w.shape[1]
        wt = jnp.transpose(w, (2, 3, 1, 0)).reshape(9 * ci, co)
        return jnp.pad(wt.astype(jnp.float32), ((0, kp - 9 * ci), (0, npad - co)))

    w1p = pack3x3(params["conv1_w"], K1p, LANE)
    if not equal_in_out:
        # Fold the 1x1 projection shortcut into extra output columns of w1.
        wsc = jnp.transpose(params["conv_sc_w"][:, :, 0, 0], (1, 0))
        wsc_full = jnp.zeros((K1p, LANE), jnp.float32)
        wsc_full = wsc_full.at[4 * Cin:5 * Cin, :Cout].set(wsc.astype(jnp.float32))
        w1p = jnp.concatenate([w1p, wsc_full], axis=1)
    w1p = w1p.astype(jnp.bfloat16)
    w2p = pack3x3(params["conv2_w"], K2p, LANE).astype(jnp.bfloat16)

    def bn_vec(v):
        return v.reshape(1, -1).astype(jnp.float32)

    inputs = list(slabs) + [
        bn_vec(params["bn1_gamma"]), bn_vec(params["bn1_beta"]), w1p,
        bn_vec(params["bn2_gamma"]), bn_vec(params["bn2_beta"]), w2p,
    ]

    kernel = _make_block_kernel(
        N=N, H=H, W=W, Ho=Ho, Wo=Wo, stride=s, equal_in_out=equal_in_out,
        Cin=Cin, Cmid=Cmid, Cout=Cout, K1p=K1p, K2p=K2p)

    scratch = [pltpu.VMEM((N, Hs + 2, Ws + 2, Cin), jnp.float32)
               for _ in range(s * s)]
    scratch.append(pltpu.VMEM((N, Ho + 2, Wo + 2, Cmid), jnp.float32))

    flops = int(2 * M1 * 9 * Cin * Cmid + 2 * M1 * 9 * Cmid * Cout
                + (0 if equal_in_out else 2 * M1 * Cin * Cout)
                + 20 * (N * H * W * Cin + M1 * Cmid))
    bytes_accessed = int(N * H * W * Cin * 4 + M1 * Cout * 4
                         + w1p.size * 2 + w2p.size * 2)

    out2d = pl.pallas_call(
        kernel,
        grid=(1,),
        in_specs=[_full_block_spec(a.shape) for a in inputs],
        out_specs=_full_block_spec((M1, Cout)),
        out_shape=jax.ShapeDtypeStruct((M1, Cout), jnp.float32),
        scratch_shapes=scratch,
        compiler_params=pltpu.CompilerParams(
            dimension_semantics=("arbitrary",),
            vmem_limit_bytes=32 * 1024 * 1024),
        cost_estimate=pl.CostEstimate(
            flops=flops, transcendentals=int(Cin + Cmid),
            bytes_accessed=bytes_accessed),
    )(*inputs)

    out = out2d.reshape(N, Ho, Wo, Cout)
    return jnp.transpose(out, (0, 3, 1, 2))                 # back to NCHW


# ----------------------------------------------------------------------------
# Pure-JAX reference (module semantics) for verification
# ----------------------------------------------------------------------------
def reference_forward(x, params, stride, equal_in_out, conv_dtype=jnp.float32):
    def bn_relu(v, gamma, beta):
        mean = jnp.mean(v, axis=(0, 2, 3), keepdims=True)
        var = jnp.mean(jnp.square(v - mean), axis=(0, 2, 3), keepdims=True)
        y = (v - mean) * lax.rsqrt(var + BN_EPS)
        y = y * gamma.reshape(1, -1, 1, 1) + beta.reshape(1, -1, 1, 1)
        return jnp.maximum(y, 0.0)

    prec = (lax.Precision.HIGHEST if conv_dtype == jnp.float32
            else lax.Precision.DEFAULT)

    def conv(v, w, s, p):
        return lax.conv_general_dilated(
            v.astype(conv_dtype), w.astype(conv_dtype), (s, s),
            [(p, p), (p, p)],
            dimension_numbers=("NCHW", "OIHW", "NCHW"),
            preferred_element_type=jnp.float32,
            precision=prec)

    act = bn_relu(x, params["bn1_gamma"], params["bn1_beta"])
    out = bn_relu(conv(act, params["conv1_w"], stride, 1),
                  params["bn2_gamma"], params["bn2_beta"])
    out = conv(out, params["conv2_w"], 1, 1)
    shortcut = x if equal_in_out else conv(act, params["conv_sc_w"], stride, 0)
    return shortcut + out


def make_params(key, in_planes, out_planes, equal_in_out):
    ks = jax.random.split(key, 7)

    def conv_init(k, cout, cin, kh, kw):
        scale = (2.0 / (cin * kh * kw)) ** 0.5
        return scale * jax.random.normal(k, (cout, cin, kh, kw), jnp.float32)

    params = {
        "bn1_gamma": 1.0 + 0.1 * jax.random.normal(ks[0], (in_planes,), jnp.float32),
        "bn1_beta": 0.1 * jax.random.normal(ks[1], (in_planes,), jnp.float32),
        "conv1_w": conv_init(ks[2], out_planes, in_planes, 3, 3),
        "bn2_gamma": 1.0 + 0.1 * jax.random.normal(ks[3], (out_planes,), jnp.float32),
        "bn2_beta": 0.1 * jax.random.normal(ks[4], (out_planes,), jnp.float32),
        "conv2_w": conv_init(ks[5], out_planes, out_planes, 3, 3),
    }
    if not equal_in_out:
        params["conv_sc_w"] = conv_init(ks[6], out_planes, in_planes, 1, 1)
    return params


if __name__ == "__main__":
    key = jax.random.PRNGKey(0)
    k1, k2, k3, k4 = jax.random.split(key, 4)

    # Config A: WRNBasicBlock(in_planes=4, out_planes=8, stride=2) — projection shortcut
    x_a = jax.random.normal(k1, (2, 4, 16, 16), jnp.float32)
    params_a = make_params(k2, 4, 8, equal_in_out=False)
    out_a = jax.block_until_ready(wrn_basic_block_forward(x_a, params_a, 2, False))
    ref_a32 = reference_forward(x_a, params_a, 2, False)
    ref_a16 = reference_forward(x_a, params_a, 2, False, conv_dtype=jnp.bfloat16)
    assert out_a.shape == ref_a32.shape == (2, 8, 8, 8), out_a.shape
    assert jnp.allclose(out_a, ref_a16, atol=3e-2, rtol=3e-2), \
        float(jnp.max(jnp.abs(out_a - ref_a16)))
    assert jnp.allclose(out_a, ref_a32, atol=2e-1, rtol=1e-1), \
        float(jnp.max(jnp.abs(out_a - ref_a32)))

    # Config B: WRNBasicBlock(in_planes=8, out_planes=8, stride=1) — identity shortcut
    x_b = jax.random.normal(k3, (2, 8, 16, 16), jnp.float32)
    params_b = make_params(k4, 8, 8, equal_in_out=True)
    out_b = jax.block_until_ready(wrn_basic_block_forward(x_b, params_b, 1, True))
    ref_b32 = reference_forward(x_b, params_b, 1, True)
    ref_b16 = reference_forward(x_b, params_b, 1, True, conv_dtype=jnp.bfloat16)
    assert out_b.shape == ref_b32.shape == (2, 8, 16, 16), out_b.shape
    assert jnp.allclose(out_b, ref_b16, atol=3e-2, rtol=3e-2), \
        float(jnp.max(jnp.abs(out_b - ref_b16)))
    assert jnp.allclose(out_b, ref_b32, atol=2e-1, rtol=1e-1), \
        float(jnp.max(jnp.abs(out_b - ref_b32)))

    print("KERNEL_OK")
</pallas_src>

<mosaic_0001>
module attributes {stable_mosaic.version = 11 : i64} {
  func.func @kernel(%arg0: i32, %arg1: memref<2x8x8x4xf32, #tpu.memory_space<vmem>>, %arg2: memref<2x8x8x4xf32, #tpu.memory_space<vmem>>, %arg3: memref<2x8x8x4xf32, #tpu.memory_space<vmem>>, %arg4: memref<2x8x8x4xf32, #tpu.memory_space<vmem>>, %arg5: memref<1x4xf32, #tpu.memory_space<vmem>>, %arg6: memref<1x4xf32, #tpu.memory_space<vmem>>, %arg7: memref<128x256xbf16, #tpu.memory_space<vmem>>, %arg8: memref<1x8xf32, #tpu.memory_space<vmem>>, %arg9: memref<1x8xf32, #tpu.memory_space<vmem>>, %arg10: memref<128x128xbf16, #tpu.memory_space<vmem>>, %arg11: memref<128x8xf32, #tpu.memory_space<vmem>>, %arg12: memref<2x10x10x4xf32, #tpu.memory_space<vmem>>, %arg13: memref<2x10x10x4xf32, #tpu.memory_space<vmem>>, %arg14: memref<2x10x10x4xf32, #tpu.memory_space<vmem>>, %arg15: memref<2x10x10x4xf32, #tpu.memory_space<vmem>>, %arg16: memref<2x10x10x8xf32, #tpu.memory_space<vmem>>) attributes {dimension_semantics = [#tpu.dimension_semantics<arbitrary>], iteration_bounds = array<i64: 1>, scalar_prefetch = 0 : i64, scratch_operands = 5 : i64, tpu.core_type = #tpu.core_type<tc>, window_params = [{pipeline_mode = #tpu.pipeline_mode<synchronous>, transform_indices = @transform_0, window_bounds = array<i64: 2, 8, 8, 4>}, {pipeline_mode = #tpu.pipeline_mode<synchronous>, transform_indices = @transform_1, window_bounds = array<i64: 2, 8, 8, 4>}, {pipeline_mode = #tpu.pipeline_mode<synchronous>, transform_indices = @transform_2, window_bounds = array<i64: 2, 8, 8, 4>}, {pipeline_mode = #tpu.pipeline_mode<synchronous>, transform_indices = @transform_3, window_bounds = array<i64: 2, 8, 8, 4>}, {pipeline_mode = #tpu.pipeline_mode<synchronous>, transform_indices = @transform_4, window_bounds = array<i64: 1, 4>}, {pipeline_mode = #tpu.pipeline_mode<synchronous>, transform_indices = @transform_5, window_bounds = array<i64: 1, 4>}, {pipeline_mode = #tpu.pipeline_mode<synchronous>, transform_indices = @transform_6, window_bounds = array<i64: 128, 256>}, {pipeline_mode = #tpu.pipeline_mode<synchronous>, transform_indices = @transform_7, window_bounds = array<i64: 1, 8>}, {pipeline_mode = #tpu.pipeline_mode<synchronous>, transform_indices = @transform_8, window_bounds = array<i64: 1, 8>}, {pipeline_mode = #tpu.pipeline_mode<synchronous>, transform_indices = @transform_9, window_bounds = array<i64: 128, 128>}, {pipeline_mode = #tpu.pipeline_mode<synchronous>, transform_indices = @transform_10, window_bounds = array<i64: 128, 8>}]} {
    %c0 = arith.constant 0 : index
    %c0_0 = arith.constant 0 : index
    %c0_1 = arith.constant 0 : index
    %c0_2 = arith.constant 0 : index
    %0 = vector.load %arg1[%c0, %c0_0, %c0_1, %c0_2] : memref<2x8x8x4xf32, #tpu.memory_space<vmem>>, vector<2x8x8x4xf32>
    %1 = vector.shape_cast %0 : vector<2x8x8x4xf32> to vector<128x4xf32>
    %c0_3 = arith.constant 0 : index
    %c0_4 = arith.constant 0 : index
    %c0_5 = arith.constant 0 : index
    %c0_6 = arith.constant 0 : index
    %2 = vector.load %arg2[%c0_3, %c0_4, %c0_5, %c0_6] : memref<2x8x8x4xf32, #tpu.memory_space<vmem>>, vector<2x8x8x4xf32>
    %3 = vector.shape_cast %2 : vector<2x8x8x4xf32> to vector<128x4xf32>
    %c0_7 = arith.constant 0 : index
    %c0_8 = arith.constant 0 : index
    %c0_9 = arith.constant 0 : index
    %c0_10 = arith.constant 0 : index
    %4 = vector.load %arg3[%c0_7, %c0_8, %c0_9, %c0_10] : memref<2x8x8x4xf32, #tpu.memory_space<vmem>>, vector<2x8x8x4xf32>
    %5 = vector.shape_cast %4 : vector<2x8x8x4xf32> to vector<128x4xf32>
    %c0_11 = arith.constant 0 : index
    %c0_12 = arith.constant 0 : index
    %c0_13 = arith.constant 0 : index
    %c0_14 = arith.constant 0 : index
    %6 = vector.load %arg4[%c0_11, %c0_12, %c0_13, %c0_14] : memref<2x8x8x4xf32, #tpu.memory_space<vmem>>, vector<2x8x8x4xf32>
    %7 = vector.shape_cast %6 : vector<2x8x8x4xf32> to vector<128x4xf32>
    %cst = arith.constant dense<0.000000e+00> : vector<4xf32>
    %8 = vector.multi_reduction <add>, %1, %cst [0] : vector<128x4xf32> to vector<4xf32>
    %9 = vector.shape_cast %8 : vector<4xf32> to vector<1x4xf32>
    %cst_15 = arith.constant dense<0.000000e+00> : vector<4xf32>
    %10 = vector.multi_reduction <add>, %3, %cst_15 [0] : vector<128x4xf32> to vector<4xf32>
    %11 = vector.shape_cast %10 : vector<4xf32> to vector<1x4xf32>
    %12 = arith.addf %9, %11 : vector<1x4xf32>
    %cst_16 = arith.constant dense<0.000000e+00> : vector<4xf32>
    %13 = vector.multi_reduction <add>, %5, %cst_16 [0] : vector<128x4xf32> to vector<4xf32>
    %14 = vector.shape_cast %13 : vector<4xf32> to vector<1x4xf32>
    %15 = arith.addf %12, %14 : vector<1x4xf32>
    %cst_17 = arith.constant dense<0.000000e+00> : vector<4xf32>
    %16 = vector.multi_reduction <add>, %7, %cst_17 [0] : vector<128x4xf32> to vector<4xf32>
    %17 = vector.shape_cast %16 : vector<4xf32> to vector<1x4xf32>
    %18 = arith.addf %15, %17 : vector<1x4xf32>
    %cst_18 = arith.constant 0.001953125 : f32
    %19 = vector.broadcast %cst_18 : f32 to vector<1x4xf32>
    %20 = arith.mulf %18, %19 : vector<1x4xf32>
    %21 = vector.broadcast %20 : vector<1x4xf32> to vector<128x4xf32>
    %22 = arith.subf %1, %21 : vector<128x4xf32>
    %23 = arith.mulf %22, %22 : vector<128x4xf32>
    %cst_19 = arith.constant dense<0.000000e+00> : vector<4xf32>
    %24 = vector.multi_reduction <add>, %23, %cst_19 [0] : vector<128x4xf32> to vector<4xf32>
    %25 = vector.shape_cast %24 : vector<4xf32> to vector<1x4xf32>
    %26 = vector.broadcast %20 : vector<1x4xf32> to vector<128x4xf32>
    %27 = arith.subf %3, %26 : vector<128x4xf32>
    %28 = arith.mulf %27, %27 : vector<128x4xf32>
    %cst_20 = arith.constant dense<0.000000e+00> : vector<4xf32>
    %29 = vector.multi_reduction <add>, %28, %cst_20 [0] : vector<128x4xf32> to vector<4xf32>
    %30 = vector.shape_cast %29 : vector<4xf32> to vector<1x4xf32>
    %31 = arith.addf %25, %30 : vector<1x4xf32>
    %32 = vector.broadcast %20 : vector<1x4xf32> to vector<128x4xf32>
    %33 = arith.subf %5, %32 : vector<128x4xf32>
    %34 = arith.mulf %33, %33 : vector<128x4xf32>
    %cst_21 = arith.constant dense<0.000000e+00> : vector<4xf32>
    %35 = vector.multi_reduction <add>, %34, %cst_21 [0] : vector<128x4xf32> to vector<4xf32>
    %36 = vector.shape_cast %35 : vector<4xf32> to vector<1x4xf32>
    %37 = arith.addf %31, %36 : vector<1x4xf32>
    %38 = vector.broadcast %20 : vector<1x4xf32> to vector<128x4xf32>
    %39 = arith.subf %7, %38 : vector<128x4xf32>
    %40 = arith.mulf %39, %39 : vector<128x4xf32>
    %cst_22 = arith.constant dense<0.000000e+00> : vector<4xf32>
    %41 = vector.multi_reduction <add>, %40, %cst_22 [0] : vector<128x4xf32> to vector<4xf32>
    %42 = vector.shape_cast %41 : vector<4xf32> to vector<1x4xf32>
    %43 = arith.addf %37, %42 : vector<1x4xf32>
    %cst_23 = arith.constant 0.001953125 : f32
    %44 = vector.broadcast %cst_23 : f32 to vector<1x4xf32>
    %45 = arith.mulf %43, %44 : vector<1x4xf32>
    %cst_24 = arith.constant 0.000000e+00 : f32
    %46 = vector.broadcast %cst_24 : f32 to vector<1x4xf32>
    %47 = arith.maximumf %45, %46 : vector<1x4xf32>
    %c0_25 = arith.constant 0 : index
    %c0_26 = arith.constant 0 : index
    %48 = vector.load %arg5[%c0_25, %c0_26] : memref<1x4xf32, #tpu.memory_space<vmem>>, vector<1x4xf32>
    %cst_27 = arith.constant 9.99999974E-6 : f32
    %49 = vector.broadcast %cst_27 : f32 to vector<1x4xf32>
    %50 = arith.addf %47, %49 : vector<1x4xf32>
    %51 = math.rsqrt %50 : vector<1x4xf32>
    %52 = arith.mulf %48, %51 : vector<1x4xf32>
    %c0_28 = arith.constant 0 : index
    %c0_29 = arith.constant 0 : index
    %53 = vector.load %arg6[%c0_28, %c0_29] : memref<1x4xf32, #tpu.memory_space<vmem>>, vector<1x4xf32>
    %54 = arith.mulf %20, %52 : vector<1x4xf32>
    %55 = arith.subf %53, %54 : vector<1x4xf32>
    %56 = vector.broadcast %52 : vector<1x4xf32> to vector<128x4xf32>
    %57 = arith.mulf %1, %56 : vector<128x4xf32>
    %58 = vector.broadcast %55 : vector<1x4xf32> to vector<128x4xf32>
    %59 = arith.addf %57, %58 : vector<128x4xf32>
    %cst_30 = arith.constant 0.000000e+00 : f32
    %60 = vector.broadcast %cst_30 : f32 to vector<128x4xf32>
    %61 = arith.maximumf %59, %60 : vector<128x4xf32>
    %62 = vector.shape_cast %61 : vector<128x4xf32> to vector<2x8x8x4xf32>
    %cst_31 = arith.constant 0.000000e+00 : f32
    %63 = vector.broadcast %cst_31 : f32 to vector<2x1x10x4xf32>
    %c0_32 = arith.constant 0 : index
    %c0_33 = arith.constant 0 : index
    %c0_34 = arith.constant 0 : index
    %c0_35 = arith.constant 0 : index
    %64 = vector.load %arg12[%c0_32, %c0_33, %c0_34, %c0_35] : memref<2x10x10x4xf32, #tpu.memory_space<vmem>>, vector<2x1x10x4xf32>
    tpu.vector_store %arg12[%c0_32, %c0_33, %c0_34, %c0_35], %63 {strides = array<i32>} : memref<2x10x10x4xf32, #tpu.memory_space<vmem>>, vector<2x1x10x4xf32>,
    %cst_36 = arith.constant 0.000000e+00 : f32
    %65 = vector.broadcast %cst_36 : f32 to vector<2x1x10x4xf32>
    %c0_37 = arith.constant 0 : index
    %c9 = arith.constant 9 : index
    %c0_38 = arith.constant 0 : index
    %c0_39 = arith.constant 0 : index
    %66 = vector.load %arg12[%c0_37, %c9, %c0_38, %c0_39] : memref<2x10x10x4xf32, #tpu.memory_space<vmem>>, vector<2x1x10x4xf32>
    tpu.vector_store %arg12[%c0_37, %c9, %c0_38, %c0_39], %65 {strides = array<i32>} : memref<2x10x10x4xf32, #tpu.memory_space<vmem>>, vector<2x1x10x4xf32>,
    %cst_40 = arith.constant 0.000000e+00 : f32
    %67 = vector.broadcast %cst_40 : f32 to vector<2x8x1x4xf32>
    %c0_41 = arith.constant 0 : index
    %c1 = arith.constant 1 : index
    %c0_42 = arith.constant 0 : index
    %c0_43 = arith.constant 0 : index
    %68 = vector.load %arg12[%c0_41, %c1, %c0_42, %c0_43] : memref<2x10x10x4xf32, #tpu.memory_space<vmem>>, vector<2x8x1x4xf32>
    tpu.vector_store %arg12[%c0_41, %c1, %c0_42, %c0_43], %67 {strides = array<i32>} : memref<2x10x10x4xf32, #tpu.memory_space<vmem>>, vector<2x8x1x4xf32>,
    %cst_44 = arith.constant 0.000000e+00 : f32
    %69 = vector.broadcast %cst_44 : f32 to vector<2x8x1x4xf32>
    %c0_45 = arith.constant 0 : index
    %c1_46 = arith.constant 1 : index
    %c9_47 = arith.constant 9 : index
    %c0_48 = arith.constant 0 : index
    %70 = vector.load %arg12[%c0_45, %c1_46, %c9_47, %c0_48] : memref<2x10x10x4xf32, #tpu.memory_space<vmem>>, vector<2x8x1x4xf32>
    tpu.vector_store %arg12[%c0_45, %c1_46, %c9_47, %c0_48], %69 {strides = array<i32>} : memref<2x10x10x4xf32, #tpu.memory_space<vmem>>, vector<2x8x1x4xf32>,
    %c0_49 = arith.constant 0 : index
    %c1_50 = arith.constant 1 : index
    %c1_51 = arith.constant 1 : index
    %c0_52 = arith.constant 0 : index
    %71 = vector.load %arg12[%c0_49, %c1_50, %c1_51, %c0_52] : memref<2x10x10x4xf32, #tpu.memory_space<vmem>>, vector<2x8x8x4xf32>
    tpu.vector_store %arg12[%c0_49, %c1_50, %c1_51, %c0_52], %62 {strides = array<i32>} : memref<2x10x10x4xf32, #tpu.memory_space<vmem>>, vector<2x8x8x4xf32>,
    %72 = vector.broadcast %52 : vector<1x4xf32> to vector<128x4xf32>
    %73 = arith.mulf %3, %72 : vector<128x4xf32>
    %74 = vector.broadcast %55 : vector<1x4xf32> to vector<128x4xf32>
    %75 = arith.addf %73, %74 : vector<128x4xf32>
    %cst_53 = arith.constant 0.000000e+00 : f32
    %76 = vector.broadcast %cst_53 : f32 to vector<128x4xf32>
    %77 = arith.maximumf %75, %76 : vector<128x4xf32>
    %78 = vector.shape_cast %77 : vector<128x4xf32> to vector<2x8x8x4xf32>
    %cst_54 = arith.constant 0.000000e+00 : f32
    %79 = vector.broadcast %cst_54 : f32 to vector<2x1x10x4xf32>
    %c0_55 = arith.constant 0 : index
    %c0_56 = arith.constant 0 : index
    %c0_57 = arith.constant 0 : index
    %c0_58 = arith.constant 0 : index
    %80 = vector.load %arg13[%c0_55, %c0_56, %c0_57, %c0_58] : memref<2x10x10x4xf32, #tpu.memory_space<vmem>>, vector<2x1x10x4xf32>
    tpu.vector_store %arg13[%c0_55, %c0_56, %c0_57, %c0_58], %79 {strides = array<i32>} : memref<2x10x10x4xf32, #tpu.memory_space<vmem>>, vector<2x1x10x4xf32>,
    %cst_59 = arith.constant 0.000000e+00 : f32
    %81 = vector.broadcast %cst_59 : f32 to vector<2x1x10x4xf32>
    %c0_60 = arith.constant 0 : index
    %c9_61 = arith.constant 9 : index
    %c0_62 = arith.constant 0 : index
    %c0_63 = arith.constant 0 : index
    %82 = vector.load %arg13[%c0_60, %c9_61, %c0_62, %c0_63] : memref<2x10x10x4xf32, #tpu.memory_space<vmem>>, vector<2x1x10x4xf32>
    tpu.vector_store %arg13[%c0_60, %c9_61, %c0_62, %c0_63], %81 {strides = array<i32>} : memref<2x10x10x4xf32, #tpu.memory_space<vmem>>, vector<2x1x10x4xf32>,
    %cst_64 = arith.constant 0.000000e+00 : f32
    %83 = vector.broadcast %cst_64 : f32 to vector<2x8x1x4xf32>
    %c0_65 = arith.constant 0 : index
    %c1_66 = arith.constant 1 : index
    %c0_67 = arith.constant 0 : index
    %c0_68 = arith.constant 0 : index
    %84 = vector.load %arg13[%c0_65, %c1_66, %c0_67, %c0_68] : memref<2x10x10x4xf32, #tpu.memory_space<vmem>>, vector<2x8x1x4xf32>
    tpu.vector_store %arg13[%c0_65, %c1_66, %c0_67, %c0_68], %83 {strides = array<i32>} : memref<2x10x10x4xf32, #tpu.memory_space<vmem>>, vector<2x8x1x4xf32>,
    %cst_69 = arith.constant 0.000000e+00 : f32
    %85 = vector.broadcast %cst_69 : f32 to vector<2x8x1x4xf32>
    %c0_70 = arith.constant 0 : index
    %c1_71 = arith.constant 1 : index
    %c9_72 = arith.constant 9 : index
    %c0_73 = arith.constant 0 : index
    %86 = vector.load %arg13[%c0_70, %c1_71, %c9_72, %c0_73] : memref<2x10x10x4xf32, #tpu.memory_space<vmem>>, vector<2x8x1x4xf32>
    tpu.vector_store %arg13[%c0_70, %c1_71, %c9_72, %c0_73], %85 {strides = array<i32>} : memref<2x10x10x4xf32, #tpu.memory_space<vmem>>, vector<2x8x1x4xf32>,
    %c0_74 = arith.constant 0 : index
    %c1_75 = arith.constant 1 : index
    %c1_76 = arith.constant 1 : index
    %c0_77 = arith.constant 0 : index
    %87 = vector.load %arg13[%c0_74, %c1_75, %c1_76, %c0_77] : memref<2x10x10x4xf32, #tpu.memory_space<vmem>>, vector<2x8x8x4xf32>
    tpu.vector_store %arg13[%c0_74, %c1_75, %c1_76, %c0_77], %78 {strides = array<i32>} : memref<2x10x10x4xf32, #tpu.memory_space<vmem>>, vector<2x8x8x4xf32>,
    %88 = vector.broadcast %52 : vector<1x4xf32> to vector<128x4xf32>
    %89 = arith.mulf %5, %88 : vector<128x4xf32>
    %90 = vector.broadcast %55 : vector<1x4xf32> to vector<128x4xf32>
    %91 = arith.addf %89, %90 : vector<128x4xf32>
    %cst_78 = arith.constant 0.000000e+00 : f32
    %92 = vector.broadcast %cst_78 : f32 to vector<128x4xf32>
    %93 = arith.maximumf %91, %92 : vector<128x4xf32>
    %94 = vector.shape_cast %93 : vector<128x4xf32> to vector<2x8x8x4xf32>
    %cst_79 = arith.constant 0.000000e+00 : f32
    %95 = vector.broadcast %cst_79 : f32 to vector<2x1x10x4xf32>
    %c0_80 = arith.constant 0 : index
    %c0_81 = arith.constant 0 : index
    %c0_82 = arith.constant 0 : index
    %c0_83 = arith.constant 0 : index
    %96 = vector.load %arg14[%c0_80, %c0_81, %c0_82, %c0_83] : memref<2x10x10x4xf32, #tpu.memory_space<vmem>>, vector<2x1x10x4xf32>
    tpu.vector_store %arg14[%c0_80, %c0_81, %c0_82, %c0_83], %95 {strides = array<i32>} : memref<2x10x10x4xf32, #tpu.memory_space<vmem>>, vector<2x1x10x4xf32>,
    %cst_84 = arith.constant 0.000000e+00 : f32
    %97 = vector.broadcast %cst_84 : f32 to vector<2x1x10x4xf32>
    %c0_85 = arith.constant 0 : index
    %c9_86 = arith.constant 9 : index
    %c0_87 = arith.constant 0 : index
    %c0_88 = arith.constant 0 : index
    %98 = vector.load %arg14[%c0_85, %c9_86, %c0_87, %c0_88] : memref<2x10x10x4xf32, #tpu.memory_space<vmem>>, vector<2x1x10x4xf32>
    tpu.vector_store %arg14[%c0_85, %c9_86, %c0_87, %c0_88], %97 {strides = array<i32>} : memref<2x10x10x4xf32, #tpu.memory_space<vmem>>, vector<2x1x10x4xf32>,
    %cst_89 = arith.constant 0.000000e+00 : f32
    %99 = vector.broadcast %cst_89 : f32 to vector<2x8x1x4xf32>
    %c0_90 = arith.constant 0 : index
    %c1_91 = arith.constant 1 : index
    %c0_92 = arith.constant 0 : index
    %c0_93 = arith.constant 0 : index
    %100 = vector.load %arg14[%c0_90, %c1_91, %c0_92, %c0_93] : memref<2x10x10x4xf32, #tpu.memory_space<vmem>>, vector<2x8x1x4xf32>
    tpu.vector_store %arg14[%c0_90, %c1_91, %c0_92, %c0_93], %99 {strides = array<i32>} : memref<2x10x10x4xf32, #tpu.memory_space<vmem>>, vector<2x8x1x4xf32>,
    %cst_94 = arith.constant 0.000000e+00 : f32
    %101 = vector.broadcast %cst_94 : f32 to vector<2x8x1x4xf32>
    %c0_95 = arith.constant 0 : index
    %c1_96 = arith.constant 1 : index
    %c9_97 = arith.constant 9 : index
    %c0_98 = arith.constant 0 : index
    %102 = vector.load %arg14[%c0_95, %c1_96, %c9_97, %c0_98] : memref<2x10x10x4xf32, #tpu.memory_space<vmem>>, vector<2x8x1x4xf32>
    tpu.vector_store %arg14[%c0_95, %c1_96, %c9_97, %c0_98], %101 {strides = array<i32>} : memref<2x10x10x4xf32, #tpu.memory_space<vmem>>, vector<2x8x1x4xf32>,
    %c0_99 = arith.constant 0 : index
    %c1_100 = arith.constant 1 : index
    %c1_101 = arith.constant 1 : index
    %c0_102 = arith.constant 0 : index
    %103 = vector.load %arg14[%c0_99, %c1_100, %c1_101, %c0_102] : memref<2x10x10x4xf32, #tpu.memory_space<vmem>>, vector<2x8x8x4xf32>
    tpu.vector_store %arg14[%c0_99, %c1_100, %c1_101, %c0_102], %94 {strides = array<i32>} : memref<2x10x10x4xf32, #tpu.memory_space<vmem>>, vector<2x8x8x4xf32>,
    %104 = vector.broadcast %52 : vector<1x4xf32> to vector<128x4xf32>
    %105 = arith.mulf %7, %104 : vector<128x4xf32>
    %106 = vector.broadcast %55 : vector<1x4xf32> to vector<128x4xf32>
    %107 = arith.addf %105, %106 : vector<128x4xf32>
    %cst_103 = arith.constant 0.000000e+00 : f32
    %108 = vector.broadcast %cst_103 : f32 to vector<128x4xf32>
    %109 = arith.maximumf %107, %108 : vector<128x4xf32>
    %110 = vector.shape_cast %109 : vector<128x4xf32> to vector<2x8x8x4xf32>
    %cst_104 = arith.constant 0.000000e+00 : f32
    %111 = vector.broadcast %cst_104 : f32 to vector<2x1x10x4xf32>
    %c0_105 = arith.constant 0 : index
    %c0_106 = arith.constant 0 : index
    %c0_107 = arith.constant 0 : index
    %c0_108 = arith.constant 0 : index
    %112 = vector.load %arg15[%c0_105, %c0_106, %c0_107, %c0_108] : memref<2x10x10x4xf32, #tpu.memory_space<vmem>>, vector<2x1x10x4xf32>
    tpu.vector_store %arg15[%c0_105, %c0_106, %c0_107, %c0_108], %111 {strides = array<i32>} : memref<2x10x10x4xf32, #tpu.memory_space<vmem>>, vector<2x1x10x4xf32>,
    %cst_109 = arith.constant 0.000000e+00 : f32
    %113 = vector.broadcast %cst_109 : f32 to vector<2x1x10x4xf32>
    %c0_110 = arith.constant 0 : index
    %c9_111 = arith.constant 9 : index
    %c0_112 = arith.constant 0 : index
    %c0_113 = arith.constant 0 : index
    %114 = vector.load %arg15[%c0_110, %c9_111, %c0_112, %c0_113] : memref<2x10x10x4xf32, #tpu.memory_space<vmem>>, vector<2x1x10x4xf32>
    tpu.vector_store %arg15[%c0_110, %c9_111, %c0_112, %c0_113], %113 {strides = array<i32>} : memref<2x10x10x4xf32, #tpu.memory_space<vmem>>, vector<2x1x10x4xf32>,
    %cst_114 = arith.constant 0.000000e+00 : f32
    %115 = vector.broadcast %cst_114 : f32 to vector<2x8x1x4xf32>
    %c0_115 = arith.constant 0 : index
    %c1_116 = arith.constant 1 : index
    %c0_117 = arith.constant 0 : index
    %c0_118 = arith.constant 0 : index
    %116 = vector.load %arg15[%c0_115, %c1_116, %c0_117, %c0_118] : memref<2x10x10x4xf32, #tpu.memory_space<vmem>>, vector<2x8x1x4xf32>
    tpu.vector_store %arg15[%c0_115, %c1_116, %c0_117, %c0_118], %115 {strides = array<i32>} : memref<2x10x10x4xf32, #tpu.memory_space<vmem>>, vector<2x8x1x4xf32>,
    %cst_119 = arith.constant 0.000000e+00 : f32
    %117 = vector.broadcast %cst_119 : f32 to vector<2x8x1x4xf32>
    %c0_120 = arith.constant 0 : index
    %c1_121 = arith.constant 1 : index
    %c9_122 = arith.constant 9 : index
    %c0_123 = arith.constant 0 : index
    %118 = vector.load %arg15[%c0_120, %c1_121, %c9_122, %c0_123] : memref<2x10x10x4xf32, #tpu.memory_space<vmem>>, vector<2x8x1x4xf32>
    tpu.vector_store %arg15[%c0_120, %c1_121, %c9_122, %c0_123], %117 {strides = array<i32>} : memref<2x10x10x4xf32, #tpu.memory_space<vmem>>, vector<2x8x1x4xf32>,
    %c0_124 = arith.constant 0 : index
    %c1_125 = arith.constant 1 : index
    %c1_126 = arith.constant 1 : index
    %c0_127 = arith.constant 0 : index
    %119 = vector.load %arg15[%c0_124, %c1_125, %c1_126, %c0_127] : memref<2x10x10x4xf32, #tpu.memory_space<vmem>>, vector<2x8x8x4xf32>
    tpu.vector_store %arg15[%c0_124, %c1_125, %c1_126, %c0_127], %110 {strides = array<i32>} : memref<2x10x10x4xf32, #tpu.memory_space<vmem>>, vector<2x8x8x4xf32>,
    %c0_128 = arith.constant 0 : index
    %c0_129 = arith.constant 0 : index
    %c0_130 = arith.constant 0 : index
    %c0_131 = arith.constant 0 : index
    %120 = vector.load %arg15[%c0_128, %c0_129, %c0_130, %c0_131] : memref<2x10x10x4xf32, #tpu.memory_space<vmem>>, vector<2x8x8x4xf32>
    %121 = vector.shape_cast %120 : vector<2x8x8x4xf32> to vector<128x4xf32>
    %c0_132 = arith.constant 0 : index
    %c0_133 = arith.constant 0 : index
    %c1_134 = arith.constant 1 : index
    %c0_135 = arith.constant 0 : index
    %122 = vector.load %arg14[%c0_132, %c0_133, %c1_134, %c0_135] : memref<2x10x10x4xf32, #tpu.memory_space<vmem>>, vector<2x8x8x4xf32>
    %123 = vector.shape_cast %122 : vector<2x8x8x4xf32> to vector<128x4xf32>
    %c0_136 = arith.constant 0 : index
    %c0_137 = arith.constant 0 : index
    %c1_138 = arith.constant 1 : index
    %c0_139 = arith.constant 0 : index
    %124 = vector.load %arg15[%c0_136, %c0_137, %c1_138, %c0_139] : memref<2x10x10x4xf32, #tpu.memory_space<vmem>>, vector<2x8x8x4xf32>
    %125 = vector.shape_cast %124 : vector<2x8x8x4xf32> to vector<128x4xf32>
    %c0_140 = arith.constant 0 : index
    %c1_141 = arith.constant 1 : index
    %c0_142 = arith.constant 0 : index
    %c0_143 = arith.constant 0 : index
    %126 = vector.load %arg13[%c0_140, %c1_141, %c0_142, %c0_143] : memref<2x10x10x4xf32, #tpu.memory_space<vmem>>, vector<2x8x8x4xf32>
    %127 = vector.shape_cast %126 : vector<2x8x8x4xf32> to vector<128x4xf32>
    %c0_144 = arith.constant 0 : index
    %c1_145 = arith.constant 1 : index
    %c1_146 = arith.constant 1 : index
    %c0_147 = arith.constant 0 : index
    %128 = vector.load %arg12[%c0_144, %c1_145, %c1_146, %c0_147] : memref<2x10x10x4xf32, #tpu.memory_space<vmem>>, vector<2x8x8x4xf32>
    %129 = vector.shape_cast %128 : vector<2x8x8x4xf32> to vector<128x4xf32>
    %c0_148 = arith.constant 0 : index
    %c1_149 = arith.constant 1 : index
    %c1_150 = arith.constant 1 : index
    %c0_151 = arith.constant 0 : index
    %130 = vector.load %arg13[%c0_148, %c1_149, %c1_150, %c0_151] : memref<2x10x10x4xf32, #tpu.memory_space<vmem>>, vector<2x8x8x4xf32>
    %131 = vector.shape_cast %130 : vector<2x8x8x4xf32> to vector<128x4xf32>
    %c0_152 = arith.constant 0 : index
    %c1_153 = arith.constant 1 : index
    %c0_154 = arith.constant 0 : index
    %c0_155 = arith.constant 0 : index
    %132 = vector.load %arg15[%c0_152, %c1_153, %c0_154, %c0_155] : memref<2x10x10x4xf32, #tpu.memory_space<vmem>>, vector<2x8x8x4xf32>
    %133 = vector.shape_cast %132 : vector<2x8x8x4xf32> to vector<128x4xf32>
    %c0_156 = arith.constant 0 : index
    %c1_157 = arith.constant 1 : index
    %c1_158 = arith.constant 1 : index
    %c0_159 = arith.constant 0 : index
    %134 = vector.load %arg14[%c0_156, %c1_157, %c1_158, %c0_159] : memref<2x10x10x4xf32, #tpu.memory_space<vmem>>, vector<2x8x8x4xf32>
    %135 = vector.shape_cast %134 : vector<2x8x8x4xf32> to vector<128x4xf32>
    %c0_160 = arith.constant 0 : index
    %c1_161 = arith.constant 1 : index
    %c1_162 = arith.constant 1 : index
    %c0_163 = arith.constant 0 : index
    %136 = vector.load %arg15[%c0_160, %c1_161, %c1_162, %c0_163] : memref<2x10x10x4xf32, #tpu.memory_space<vmem>>, vector<2x8x8x4xf32>
    %137 = vector.shape_cast %136 : vector<2x8x8x4xf32> to vector<128x4xf32>
    %cst_164 = arith.constant 0.000000e+00 : f32
    %138 = vector.broadcast %cst_164 : f32 to vector<128x92xf32>
    %139 = tpu.concatenate %121, %123, %125, %127, %129, %131, %133, %135, %137, %138 in 1 : vector<128x4xf32>, vector<128x4xf32>, vector<128x4xf32>, vector<128x4xf32>, vector<128x4xf32>, vector<128x4xf32>, vector<128x4xf32>, vector<128x4xf32>, vector<128x4xf32>, vector<128x92xf32> -> vector<128x128xf32>
    %140 = arith.truncf %139 : vector<128x128xf32> to vector<128x128xbf16>
    %c0_165 = arith.constant 0 : index
    %c0_166 = arith.constant 0 : index
    %141 = vector.load %arg7[%c0_165, %c0_166] : memref<128x256xbf16, #tpu.memory_space<vmem>>, vector<128x256xbf16>
    %cst_167 = arith.constant dense<0.000000e+00> : vector<128x256xf32>
    %142 = tpu.matmul %140, %141, %cst_167 {dimension_numbers = #tpu.dot_dimension_numbers<[1], [0], [0], [1], [0, 0, 1, 1], [], []>} : vector<128x128xbf16>, vector<128x256xbf16>, vector<128x256xf32> -> vector<128x256xf32>
    %143 = vector.extract_strided_slice %142 {offsets = [0, 0], sizes = [128, 8], strides = [1, 1]} : vector<128x256xf32> to vector<128x8xf32>
    %144 = vector.extract_strided_slice %142 {offsets = [0, 128], sizes = [128, 8], strides = [1, 1]} : vector<128x256xf32> to vector<128x8xf32>
    %c0_168 = arith.constant 0 : index
    %c0_169 = arith.constant 0 : index
    %145 = vector.load %arg11[%c0_168, %c0_169] : memref<128x8xf32, #tpu.memory_space<vmem>>, vector<128x8xf32>
    tpu.vector_store %arg11[%c0_168, %c0_169], %144 {strides = array<i32>} : memref<128x8xf32, #tpu.memory_space<vmem>>, vector<128x8xf32>,
    %cst_170 = arith.constant dense<0.000000e+00> : vector<8xf32>
    %146 = vector.multi_reduction <add>, %143, %cst_170 [0] : vector<128x8xf32> to vector<8xf32>
    %147 = vector.shape_cast %146 : vector<8xf32> to vector<1x8xf32>
    %cst_171 = arith.constant 7.812500e-03 : f32
    %148 = vector.broadcast %cst_171 : f32 to vector<1x8xf32>
    %149 = arith.mulf %147, %148 : vector<1x8xf32>
    %150 = vector.broadcast %149 : vector<1x8xf32> to vector<128x8xf32>
    %151 = arith.subf %143, %150 : vector<128x8xf32>
    %152 = arith.mulf %151, %151 : vector<128x8xf32>
    %cst_172 = arith.constant dense<0.000000e+00> : vector<8xf32>
    %153 = vector.multi_reduction <add>, %152, %cst_172 [0] : vector<128x8xf32> to vector<8xf32>
    %154 = vector.shape_cast %153 : vector<8xf32> to vector<1x8xf32>
    %cst_173 = arith.constant 7.812500e-03 : f32
    %155 = vector.broadcast %cst_173 : f32 to vector<1x8xf32>
    %156 = arith.mulf %154, %155 : vector<1x8xf32>
    %cst_174 = arith.constant 0.000000e+00 : f32
    %157 = vector.broadcast %cst_174 : f32 to vector<1x8xf32>
    %158 = arith.maximumf %156, %157 : vector<1x8xf32>
    %c0_175 = arith.constant 0 : index
    %c0_176 = arith.constant 0 : index
    %159 = vector.load %arg8[%c0_175, %c0_176] : memref<1x8xf32, #tpu.memory_space<vmem>>, vector<1x8xf32>
    %cst_177 = arith.constant 9.99999974E-6 : f32
    %160 = vector.broadcast %cst_177 : f32 to vector<1x8xf32>
    %161 = arith.addf %158, %160 : vector<1x8xf32>
    %162 = math.rsqrt %161 : vector<1x8xf32>
    %163 = arith.mulf %159, %162 : vector<1x8xf32>
    %c0_178 = arith.constant 0 : index
    %c0_179 = arith.constant 0 : index
    %164 = vector.load %arg9[%c0_178, %c0_179] : memref<1x8xf32, #tpu.memory_space<vmem>>, vector<1x8xf32>
    %165 = arith.mulf %149, %163 : vector<1x8xf32>
    %166 = arith.subf %164, %165 : vector<1x8xf32>
    %167 = vector.broadcast %163 : vector<1x8xf32> to vector<128x8xf32>
    %168 = arith.mulf %143, %167 : vector<128x8xf32>
    %169 = vector.broadcast %166 : vector<1x8xf32> to vector<128x8xf32>
    %170 = arith.addf %168, %169 : vector<128x8xf32>
    %cst_180 = arith.constant 0.000000e+00 : f32
    %171 = vector.broadcast %cst_180 : f32 to vector<128x8xf32>
    %172 = arith.maximumf %170, %171 : vector<128x8xf32>
    %173 = vector.shape_cast %172 : vector<128x8xf32> to vector<2x8x8x8xf32>
    %cst_181 = arith.constant 0.000000e+00 : f32
    %174 = vector.broadcast %cst_181 : f32 to vector<2x1x10x8xf32>
    %c0_182 = arith.constant 0 : index
    %c0_183 = arith.constant 0 : index
    %c0_184 = arith.constant 0 : index
    %c0_185 = arith.constant 0 : index
    %175 = vector.load %arg16[%c0_182, %c0_183, %c0_184, %c0_185] : memref<2x10x10x8xf32, #tpu.memory_space<vmem>>, vector<2x1x10x8xf32>
    tpu.vector_store %arg16[%c0_182, %c0_183, %c0_184, %c0_185], %174 {strides = array<i32>} : memref<2x10x10x8xf32, #tpu.memory_space<vmem>>, vector<2x1x10x8xf32>,
    %cst_186 = arith.constant 0.000000e+00 : f32
    %176 = vector.broadcast %cst_186 : f32 to vector<2x1x10x8xf32>
    %c0_187 = arith.constant 0 : index
    %c9_188 = arith.constant 9 : index
    %c0_189 = arith.constant 0 : index
    %c0_190 = arith.constant 0 : index
    %177 = vector.load %arg16[%c0_187, %c9_188, %c0_189, %c0_190] : memref<2x10x10x8xf32, #tpu.memory_space<vmem>>, vector<2x1x10x8xf32>
    tpu.vector_store %arg16[%c0_187, %c9_188, %c0_189, %c0_190], %176 {strides = array<i32>} : memref<2x10x10x8xf32, #tpu.memory_space<vmem>>, vector<2x1x10x8xf32>,
    %cst_191 = arith.constant 0.000000e+00 : f32
    %178 = vector.broadcast %cst_191 : f32 to vector<2x8x1x8xf32>
    %c0_192 = arith.constant 0 : index
    %c1_193 = arith.constant 1 : index
    %c0_194 = arith.constant 0 : index
    %c0_195 = arith.constant 0 : index
    %179 = vector.load %arg16[%c0_192, %c1_193, %c0_194, %c0_195] : memref<2x10x10x8xf32, #tpu.memory_space<vmem>>, vector<2x8x1x8xf32>
    tpu.vector_store %arg16[%c0_192, %c1_193, %c0_194, %c0_195], %178 {strides = array<i32>} : memref<2x10x10x8xf32, #tpu.memory_space<vmem>>, vector<2x8x1x8xf32>,
    %cst_196 = arith.constant 0.000000e+00 : f32
    %180 = vector.broadcast %cst_196 : f32 to vector<2x8x1x8xf32>
    %c0_197 = arith.constant 0 : index
    %c1_198 = arith.constant 1 : index
    %c9_199 = arith.constant 9 : index
    %c0_200 = arith.constant 0 : index
    %181 = vector.load %arg16[%c0_197, %c1_198, %c9_199, %c0_200] : memref<2x10x10x8xf32, #tpu.memory_space<vmem>>, vector<2x8x1x8xf32>
    tpu.vector_store %arg16[%c0_197, %c1_198, %c9_199, %c0_200], %180 {strides = array<i32>} : memref<2x10x10x8xf32, #tpu.memory_space<vmem>>, vector<2x8x1x8xf32>,
    %c0_201 = arith.constant 0 : index
    %c1_202 = arith.constant 1 : index
    %c1_203 = arith.constant 1 : index
    %c0_204 = arith.constant 0 : index
    %182 = vector.load %arg16[%c0_201, %c1_202, %c1_203, %c0_204] : memref<2x10x10x8xf32, #tpu.memory_space<vmem>>, vector<2x8x8x8xf32>
    tpu.vector_store %arg16[%c0_201, %c1_202, %c1_203, %c0_204], %173 {strides = array<i32>} : memref<2x10x10x8xf32, #tpu.memory_space<vmem>>, vector<2x8x8x8xf32>,
    %c0_205 = arith.constant 0 : index
    %c0_206 = arith.constant 0 : index
    %c0_207 = arith.constant 0 : index
    %c0_208 = arith.constant 0 : index
    %183 = vector.load %arg16[%c0_205, %c0_206, %c0_207, %c0_208] : memref<2x10x10x8xf32, #tpu.memory_space<vmem>>, vector<2x8x8x8xf32>
    %184 = vector.shape_cast %183 : vector<2x8x8x8xf32> to vector<128x8xf32>
    %c0_209 = arith.constant 0 : index
    %c0_210 = arith.constant 0 : index
    %c1_211 = arith.constant 1 : index
    %c0_212 = arith.constant 0 : index
    %185 = vector.load %arg16[%c0_209, %c0_210, %c1_211, %c0_212] : memref<2x10x10x8xf32, #tpu.memory_space<vmem>>, vector<2x8x8x8xf32>
    %186 = vector.shape_cast %185 : vector<2x8x8x8xf32> to vector<128x8xf32>
    %c0_213 = arith.constant 0 : index
    %c0_214 = arith.constant 0 : index
    %c2 = arith.constant 2 : index
    %c0_215 = arith.constant 0 : index
    %187 = vector.load %arg16[%c0_213, %c0_214, %c2, %c0_215] : memref<2x10x10x8xf32, #tpu.memory_space<vmem>>, vector<2x8x8x8xf32>
    %188 = vector.shape_cast %187 : vector<2x8x8x8xf32> to vector<128x8xf32>
    %c0_216 = arith.constant 0 : index
    %c1_217 = arith.constant 1 : index
    %c0_218 = arith.constant 0 : index
    %c0_219 = arith.constant 0 : index
    %189 = vector.load %arg16[%c0_216, %c1_217, %c0_218, %c0_219] : memref<2x10x10x8xf32, #tpu.memory_space<vmem>>, vector<2x8x8x8xf32>
    %190 = vector.shape_cast %189 : vector<2x8x8x8xf32> to vector<128x8xf32>
    %c0_220 = arith.constant 0 : index
    %c1_221 = arith.constant 1 : index
    %c1_222 = arith.constant 1 : index
    %c0_223 = arith.constant 0 : index
    %191 = vector.load %arg16[%c0_220, %c1_221, %c1_222, %c0_223] : memref<2x10x10x8xf32, #tpu.memory_space<vmem>>, vector<2x8x8x8xf32>
    %192 = vector.shape_cast %191 : vector<2x8x8x8xf32> to vector<128x8xf32>
    %c0_224 = arith.constant 0 : index
    %c1_225 = arith.constant 1 : index
    %c2_226 = arith.constant 2 : index
    %c0_227 = arith.constant 0 : index
    %193 = vector.load %arg16[%c0_224, %c1_225, %c2_226, %c0_227] : memref<2x10x10x8xf32, #tpu.memory_space<vmem>>, vector<2x8x8x8xf32>
    %194 = vector.shape_cast %193 : vector<2x8x8x8xf32> to vector<128x8xf32>
    %c0_228 = arith.constant 0 : index
    %c2_229 = arith.constant 2 : index
    %c0_230 = arith.constant 0 : index
    %c0_231 = arith.constant 0 : index
    %195 = vector.load %arg16[%c0_228, %c2_229, %c0_230, %c0_231] : memref<2x10x10x8xf32, #tpu.memory_space<vmem>>, vector<2x8x8x8xf32>
    %196 = vector.shape_cast %195 : vector<2x8x8x8xf32> to vector<128x8xf32>
    %c0_232 = arith.constant 0 : index
    %c2_233 = arith.constant 2 : index
    %c1_234 = arith.constant 1 : index
    %c0_235 = arith.constant 0 : index
    %197 = vector.load %arg16[%c0_232, %c2_233, %c1_234, %c0_235] : memref<2x10x10x8xf32, #tpu.memory_space<vmem>>, vector<2x8x8x8xf32>
    %198 = vector.shape_cast %197 : vector<2x8x8x8xf32> to vector<128x8xf32>
    %c0_236 = arith.constant 0 : index
    %c2_237 = arith.constant 2 : index
    %c2_238 = arith.constant 2 : index
    %c0_239 = arith.constant 0 : index
    %199 = vector.load %arg16[%c0_236, %c2_237, %c2_238, %c0_239] : memref<2x10x10x8xf32, #tpu.memory_space<vmem>>, vector<2x8x8x8xf32>
    %200 = vector.shape_cast %199 : vector<2x8x8x8xf32> to vector<128x8xf32>
    %cst_240 = arith.constant 0.000000e+00 : f32
    %201 = vector.broadcast %cst_240 : f32 to vector<128x56xf32>
    %202 = tpu.concatenate %184, %186, %188, %190, %192, %194, %196, %198, %200, %201 in 1 : vector<128x8xf32>, vector<128x8xf32>, vector<128x8xf32>, vector<128x8xf32>, vector<128x8xf32>, vector<128x8xf32>, vector<128x8xf32>, vector<128x8xf32>, vector<128x8xf32>, vector<128x56xf32> -> vector<128x128xf32>
    %203 = arith.truncf %202 : vector<128x128xf32> to vector<128x128xbf16>
    %c0_241 = arith.constant 0 : index
    %c0_242 = arith.constant 0 : index
    %204 = vector.load %arg10[%c0_241, %c0_242] : memref<128x128xbf16, #tpu.memory_space<vmem>>, vector<128x128xbf16>
    %cst_243 = arith.constant dense<0.000000e+00> : vector<128x128xf32>
    %205 = tpu.matmul %203, %204, %cst_243 {dimension_numbers = #tpu.dot_dimension_numbers<[1], [0], [0], [1], [0, 0, 1, 1], [], []>} : vector<128x128xbf16>, vector<128x128xbf16>, vector<128x128xf32> -> vector<128x128xf32>
    %206 = vector.extract_strided_slice %205 {offsets = [0, 0], sizes = [128, 8], strides = [1, 1]} : vector<128x128xf32> to vector<128x8xf32>
    %c0_244 = arith.constant 0 : index
    %c0_245 = arith.constant 0 : index
    %207 = vector.load %arg11[%c0_244, %c0_245] : memref<128x8xf32, #tpu.memory_space<vmem>>, vector<128x8xf32>
    %208 = arith.addf %207, %206 : vector<128x8xf32>
    %c0_246 = arith.constant 0 : index
    %c0_247 = arith.constant 0 : index
    %209 = vector.load %arg11[%c0_246, %c0_247] : memref<128x8xf32, #tpu.memory_space<vmem>>, vector<128x8xf32>
    tpu.vector_store %arg11[%c0_246, %c0_247], %208 {strides = array<i32>} : memref<128x8xf32, #tpu.memory_space<vmem>>, vector<128x8xf32>,
    return
  }
  func.func @transform_0(%arg0: i32) -> (i32, i32, i32, i32) {
    %c0_i32 = arith.constant 0 : i32
    %c0_i32_0 = arith.constant 0 : i32
    %c0_i32_1 = arith.constant 0 : i32
    %c0_i32_2 = arith.constant 0 : i32
    %c0_i32_3 = arith.constant 0 : i32
    return %c0_i32, %c0_i32_0, %c0_i32_1, %c0_i32_2 : i32, i32, i32, i32
  }
  func.func @transform_1(%arg0: i32) -> (i32, i32, i32, i32) {
    %c0_i32 = arith.constant 0 : i32
    %c0_i32_0 = arith.constant 0 : i32
    %c0_i32_1 = arith.constant 0 : i32
    %c0_i32_2 = arith.constant 0 : i32
    %c0_i32_3 = arith.constant 0 : i32
    return %c0_i32, %c0_i32_0, %c0_i32_1, %c0_i32_2 : i32, i32, i32, i32
  }
  func.func @transform_2(%arg0: i32) -> (i32, i32, i32, i32) {
    %c0_i32 = arith.constant 0 : i32
    %c0_i32_0 = arith.constant 0 : i32
    %c0_i32_1 = arith.constant 0 : i32
    %c0_i32_2 = arith.constant 0 : i32
    %c0_i32_3 = arith.constant 0 : i32
    return %c0_i32, %c0_i32_0, %c0_i32_1, %c0_i32_2 : i32, i32, i32, i32
  }
  func.func @transform_3(%arg0: i32) -> (i32, i32, i32, i32) {
    %c0_i32 = arith.constant 0 : i32
    %c0_i32_0 = arith.constant 0 : i32
    %c0_i32_1 = arith.constant 0 : i32
    %c0_i32_2 = arith.constant 0 : i32
    %c0_i32_3 = arith.constant 0 : i32
    return %c0_i32, %c0_i32_0, %c0_i32_1, %c0_i32_2 : i32, i32, i32, i32
  }
  func.func @transform_4(%arg0: i32) -> (i32, i32) {
    %c0_i32 = arith.constant 0 : i32
    %c0_i32_0 = arith.constant 0 : i32
    %c0_i32_1 = arith.constant 0 : i32
    return %c0_i32, %c0_i32_0 : i32, i32
  }
  func.func @transform_5(%arg0: i32) -> (i32, i32) {
    %c0_i32 = arith.constant 0 : i32
    %c0_i32_0 = arith.constant 0 : i32
    %c0_i32_1 = arith.constant 0 : i32
    return %c0_i32, %c0_i32_0 : i32, i32
  }
  func.func @transform_6(%arg0: i32) -> (i32, i32) {
    %c0_i32 = arith.constant 0 : i32
    %c0_i32_0 = arith.constant 0 : i32
    %c0_i32_1 = arith.constant 0 : i32
    return %c0_i32, %c0_i32_0 : i32, i32
  }
  func.func @transform_7(%arg0: i32) -> (i32, i32) {
    %c0_i32 = arith.constant 0 : i32
    %c0_i32_0 = arith.constant 0 : i32
    %c0_i32_1 = arith.constant 0 : i32
    return %c0_i32, %c0_i32_0 : i32, i32
  }
  func.func @transform_8(%arg0: i32) -> (i32, i32) {
    %c0_i32 = arith.constant 0 : i32
    %c0_i32_0 = arith.constant 0 : i32
    %c0_i32_1 = arith.constant 0 : i32
    return %c0_i32, %c0_i32_0 : i32, i32
  }
  func.func @transform_9(%arg0: i32) -> (i32, i32) {
    %c0_i32 = arith.constant 0 : i32
    %c0_i32_0 = arith.constant 0 : i32
    %c0_i32_1 = arith.constant 0 : i32
    return %c0_i32, %c0_i32_0 : i32, i32
  }
  func.func @transform_10(%arg0: i32) -> (i32, i32) {
    %c0_i32 = arith.constant 0 : i32
    %c0_i32_0 = arith.constant 0 : i32
    %c0_i32_1 = arith.constant 0 : i32
    return %c0_i32, %c0_i32_0 : i32, i32
  }
}

</mosaic_0001>

<llo_original>
// kernel: wrn_basic_block_forward.1
$region0: #{wrn_basic_block_forward.1}
  #allocation0 [shape = 'u32[]', space=smem, size = 0x4, offset = 0x4, fixed_abs, tag = 'smem constant byte address 0x4 - core index']
  #allocation1 [shape = 'u32[72,128]{1,0:T(1,128)}', space=vmem, size = 0x9000, scoped, tag = 'internal scratch']
  #allocation2 [shape = 'f32[2,10,10,4]{3,2,1,0:T(8,128)}', space=vmem, size = 0x28000, scoped, tag = 'scratch operand']
  #allocation3 [shape = 'f32[2,10,10,4]{3,2,1,0:T(8,128)}', space=vmem, size = 0x28000, scoped, tag = 'scratch operand']
  #allocation4 [shape = 'f32[2,10,10,4]{3,2,1,0:T(8,128)}', space=vmem, size = 0x28000, scoped, tag = 'scratch operand']
  #allocation5 [shape = 'f32[2,10,10,4]{3,2,1,0:T(8,128)}', space=vmem, size = 0x28000, scoped, tag = 'scratch operand']
  #allocation6 [shape = 'f32[2,10,10,8]{3,2,1,0:T(8,128)}', space=vmem, size = 0x28000, scoped, tag = 'scratch operand']
  %s0 = inlined_call_operand.vmem [shape: f32[2,8,8,4], index: 0, kind: input, shape index: {}]
  %s1 = inlined_call_operand.vmem [shape: f32[2,8,8,4], index: 1, kind: input, shape index: {}]
  %s2 = inlined_call_operand.vmem [shape: f32[2,8,8,4], index: 2, kind: input, shape index: {}]
  %s3 = inlined_call_operand.vmem [shape: f32[2,8,8,4], index: 3, kind: input, shape index: {}]
  %s4 = inlined_call_operand.vmem [shape: f32[1,4], index: 4, kind: input, shape index: {}]
  %s5 = inlined_call_operand.vmem [shape: f32[1,4], index: 5, kind: input, shape index: {}]
  %s6 = inlined_call_operand.vmem [shape: bf16[128,256], index: 6, kind: input, shape index: {}]
  %s7 = inlined_call_operand.vmem [shape: f32[1,8], index: 7, kind: input, shape index: {}]
  %s8 = inlined_call_operand.vmem [shape: f32[1,8], index: 8, kind: input, shape index: {}]
  %s9 = inlined_call_operand.vmem [shape: bf16[128,128], index: 9, kind: input, shape index: {}]
  %s10 = inlined_call_operand.vmem [shape: f32[128,8], index: 10, kind: output, shape index: {}]
  %s11 = sld [smem:[#allocation0]]
  $region50: #{wrn_basic_block_forward.1} parent=0
    _
  %s13 = ssub.s32 1, %s11
  %s14 = scalar_select 0, %s13, %s11
  // Predicated region
  $region2: #{wrn_basic_block_forward.1} parent=0 // pred_check
    _
  $region3: #{wrn_basic_block_forward.1} parent=0 // pred_check_branch
    %16 = sbr.rel (0) target = $region5
  $region4: #{wrn_basic_block_forward.1} parent=0 // pred_region
    _
  $region5: #{wrn_basic_block_forward.1} parent=0 // pred_fallthru
    _
  // Predicated region
  $region6: #{wrn_basic_block_forward.1} parent=0 // pred_check
    _
  $region7: #{wrn_basic_block_forward.1} parent=0 // pred_check_branch
    %18 = sbr.rel (0) target = $region9
  $region8: #{wrn_basic_block_forward.1} parent=0 // pred_region
    _
  $region9: #{wrn_basic_block_forward.1} parent=0 // pred_fallthru
    _
  // Predicated region
  $region10: #{wrn_basic_block_forward.1} parent=0 // pred_check
    _
  $region11: #{wrn_basic_block_forward.1} parent=0 // pred_check_branch
    %20 = sbr.rel (0) target = $region13
  $region12: #{wrn_basic_block_forward.1} parent=0 // pred_region
    _
  $region13: #{wrn_basic_block_forward.1} parent=0 // pred_fallthru
    _
  // Predicated region
  $region14: #{wrn_basic_block_forward.1} parent=0 // pred_check
    _
  $region15: #{wrn_basic_block_forward.1} parent=0 // pred_check_branch
    %22 = sbr.rel (0) target = $region17
  $region16: #{wrn_basic_block_forward.1} parent=0 // pred_region
    _
  $region17: #{wrn_basic_block_forward.1} parent=0 // pred_fallthru
    _
  // Predicated region
  $region18: #{wrn_basic_block_forward.1} parent=0 // pred_check
    _
  $region19: #{wrn_basic_block_forward.1} parent=0 // pred_check_branch
    %24 = sbr.rel (0) target = $region21
  $region20: #{wrn_basic_block_forward.1} parent=0 // pred_region
    _
  $region21: #{wrn_basic_block_forward.1} parent=0 // pred_fallthru
    _
  // Predicated region
  $region22: #{wrn_basic_block_forward.1} parent=0 // pred_check
    _
  $region23: #{wrn_basic_block_forward.1} parent=0 // pred_check_branch
    %26 = sbr.rel (0) target = $region25
  $region24: #{wrn_basic_block_forward.1} parent=0 // pred_region
    _
  $region25: #{wrn_basic_block_forward.1} parent=0 // pred_fallthru
    _
  // Predicated region
  $region26: #{wrn_basic_block_forward.1} parent=0 // pred_check
    _
  $region27: #{wrn_basic_block_forward.1} parent=0 // pred_check_branch
    %28 = sbr.rel (0) target = $region29
  $region28: #{wrn_basic_block_forward.1} parent=0 // pred_region
    _
  $region29: #{wrn_basic_block_forward.1} parent=0 // pred_fallthru
    _
  // Predicated region
  $region30: #{wrn_basic_block_forward.1} parent=0 // pred_check
    _
  $region31: #{wrn_basic_block_forward.1} parent=0 // pred_check_branch
    %30 = sbr.rel (0) target = $region33
  $region32: #{wrn_basic_block_forward.1} parent=0 // pred_region
    _
  $region33: #{wrn_basic_block_forward.1} parent=0 // pred_fallthru
    _
  // Predicated region
  $region34: #{wrn_basic_block_forward.1} parent=0 // pred_check
    _
  $region35: #{wrn_basic_block_forward.1} parent=0 // pred_check_branch
    %32 = sbr.rel (0) target = $region37
  $region36: #{wrn_basic_block_forward.1} parent=0 // pred_region
    _
  $region37: #{wrn_basic_block_forward.1} parent=0 // pred_fallthru
    _
  // Predicated region
  $region38: #{wrn_basic_block_forward.1} parent=0 // pred_check
    _
  $region39: #{wrn_basic_block_forward.1} parent=0 // pred_check_branch
    %34 = sbr.rel (0) target = $region41
  $region40: #{wrn_basic_block_forward.1} parent=0 // pred_region
    _
  $region41: #{wrn_basic_block_forward.1} parent=0 // pred_fallthru
    _
  %v35 = vld [vmem:[%s0] sm:$0xff]
  %v36 = vld [vmem:[%s0 + $0x8] sm:$0xff]
  %v37 = vld [vmem:[%s0 + $0x10] sm:$0xff]
  %v38 = vld [vmem:[%s0 + $0x18] sm:$0xff]
  %v39 = vld [vmem:[%s0 + $0x20] sm:$0xff]
  %v40 = vld [vmem:[%s0 + $0x28] sm:$0xff]
  %v41 = vld [vmem:[%s0 + $0x30] sm:$0xff]
  %v42 = vld [vmem:[%s0 + $0x38] sm:$0xff]
  %v43 = vld [vmem:[%s0 + $0x40] sm:$0xff]
  %v44 = vld [vmem:[%s0 + $0x48] sm:$0xff]
  %v45 = vld [vmem:[%s0 + $0x50] sm:$0xff]
  %v46 = vld [vmem:[%s0 + $0x58] sm:$0xff]
  %v47 = vld [vmem:[%s0 + $0x60] sm:$0xff]
  %v48 = vld [vmem:[%s0 + $0x68] sm:$0xff]
  %v49 = vld [vmem:[%s0 + $0x70] sm:$0xff]
  %v50 = vld [vmem:[%s0 + $0x78] sm:$0xff]
  %v51 = vld [vmem:[%s1] sm:$0xff]
  %v52 = vld [vmem:[%s1 + $0x8] sm:$0xff]
  %v53 = vld [vmem:[%s1 + $0x10] sm:$0xff]
  %v54 = vld [vmem:[%s1 + $0x18] sm:$0xff]
  %v55 = vld [vmem:[%s1 + $0x20] sm:$0xff]
  %v56 = vld [vmem:[%s1 + $0x28] sm:$0xff]
  %v57 = vld [vmem:[%s1 + $0x30] sm:$0xff]
  %v58 = vld [vmem:[%s1 + $0x38] sm:$0xff]
  %v59 = vld [vmem:[%s1 + $0x40] sm:$0xff]
  %v60 = vld [vmem:[%s1 + $0x48] sm:$0xff]
  %v61 = vld [vmem:[%s1 + $0x50] sm:$0xff]
  %v62 = vld [vmem:[%s1 + $0x58] sm:$0xff]
  %v63 = vld [vmem:[%s1 + $0x60] sm:$0xff]
  %v64 = vld [vmem:[%s1 + $0x68] sm:$0xff]
  %v65 = vld [vmem:[%s1 + $0x70] sm:$0xff]
  %v66 = vld [vmem:[%s1 + $0x78] sm:$0xff]
  %v67 = vld [vmem:[%s2] sm:$0xff]
  %v68 = vld [vmem:[%s2 + $0x8] sm:$0xff]
  %v69 = vld [vmem:[%s2 + $0x10] sm:$0xff]
  %v70 = vld [vmem:[%s2 + $0x18] sm:$0xff]
  %v71 = vld [vmem:[%s2 + $0x20] sm:$0xff]
  %v72 = vld [vmem:[%s2 + $0x28] sm:$0xff]
  %v73 = vld [vmem:[%s2 + $0x30] sm:$0xff]
  %v74 = vld [vmem:[%s2 + $0x38] sm:$0xff]
  %v75 = vld [vmem:[%s2 + $0x40] sm:$0xff]
  %v76 = vld [vmem:[%s2 + $0x48] sm:$0xff]
  %v77 = vld [vmem:[%s2 + $0x50] sm:$0xff]
  %v78 = vld [vmem:[%s2 + $0x58] sm:$0xff]
  %v79 = vld [vmem:[%s2 + $0x60] sm:$0xff]
  %v80 = vld [vmem:[%s2 + $0x68] sm:$0xff]
  %v81 = vld [vmem:[%s2 + $0x70] sm:$0xff]
  %v82 = vld [vmem:[%s2 + $0x78] sm:$0xff]
  %v83 = vld [vmem:[%s3] sm:$0xff]
  %v84 = vld [vmem:[%s3 + $0x8] sm:$0xff]
  %v85 = vld [vmem:[%s3 + $0x10] sm:$0xff]
  %v86 = vld [vmem:[%s3 + $0x18] sm:$0xff]
  %v87 = vld [vmem:[%s3 + $0x20] sm:$0xff]
  %v88 = vld [vmem:[%s3 + $0x28] sm:$0xff]
  %v89 = vld [vmem:[%s3 + $0x30] sm:$0xff]
  %v90 = vld [vmem:[%s3 + $0x38] sm:$0xff]
  %v91 = vld [vmem:[%s3 + $0x40] sm:$0xff]
  %v92 = vld [vmem:[%s3 + $0x48] sm:$0xff]
  %v93 = vld [vmem:[%s3 + $0x50] sm:$0xff]
  %v94 = vld [vmem:[%s3 + $0x58] sm:$0xff]
  %v95 = vld [vmem:[%s3 + $0x60] sm:$0xff]
  %v96 = vld [vmem:[%s3 + $0x68] sm:$0xff]
  %v97 = vld [vmem:[%s3 + $0x70] sm:$0xff]
  %v98 = vld [vmem:[%s3 + $0x78] sm:$0xff]
  %vm99 = vcmask 31744
  %v100 = vsel %vm99, %v35, 0.0
  %v101 = vsel %vm99, %v36, 0.0
  %v102 = vadd.f32 %v100, %v101
  %v103 = vsel %vm99, %v37, 0.0
  %v104 = vadd.f32 %v102, %v103
  %v105 = vsel %vm99, %v38, 0.0
  %v106 = vadd.f32 %v104, %v105
  %v107 = vsel %vm99, %v39, 0.0
  %v108 = vadd.f32 %v106, %v107
  %v109 = vsel %vm99, %v40, 0.0
  %v110 = vadd.f32 %v108, %v109
  %v111 = vsel %vm99, %v41, 0.0
  %v112 = vadd.f32 %v110, %v111
  %v113 = vsel %vm99, %v42, 0.0
  %v114 = vadd.f32 %v112, %v113
  %v115 = vsel %vm99, %v43, 0.0
  %v116 = vadd.f32 %v114, %v115
  %v117 = vsel %vm99, %v44, 0.0
  %v118 = vadd.f32 %v116, %v117
  %v119 = vsel %vm99, %v45, 0.0
  %v120 = vadd.f32 %v118, %v119
  %v121 = vsel %vm99, %v46, 0.0
  %v122 = vadd.f32 %v120, %v121
  %v123 = vsel %vm99, %v47, 0.0
  %v124 = vadd.f32 %v122, %v123
  %v125 = vsel %vm99, %v48, 0.0
  %v126 = vadd.f32 %v124, %v125
  %v127 = vsel %vm99, %v49, 0.0
  %v128 = vadd.f32 %v126, %v127
  %v129 = vsel %vm99, %v50, 0.0
  %v130 = vadd.f32 %v128, %v129
  %v131 = vrot.slane %v130, 4
  %v132 = vadd.f32 %v130, %v131
  %v133 = vrot.slane %v132, 2
  %v134 = vadd.f32 %v132, %v133
  %v135 = vrot.slane %v134, 1
  %v136 = vadd.f32 %v134, %v135
  %v137 = vsel %vm99, %v51, 0.0
  %v138 = vsel %vm99, %v52, 0.0
  %v139 = vadd.f32 %v137, %v138
  %v140 = vsel %vm99, %v53, 0.0
  %v141 = vadd.f32 %v139, %v140
  %v142 = vsel %vm99, %v54, 0.0
  %v143 = vadd.f32 %v141, %v142
  %v144 = vsel %vm99, %v55, 0.0
  %v145 = vadd.f32 %v143, %v144
  %v146 = vsel %vm99, %v56, 0.0
  %v147 = vadd.f32 %v145, %v146
  %v148 = vsel %vm99, %v57, 0.0
  %v149 = vadd.f32 %v147, %v148
  %v150 = vsel %vm99, %v58, 0.0
  %v151 = vadd.f32 %v149, %v150
  %v152 = vsel %vm99, %v59, 0.0
  %v153 = vadd.f32 %v151, %v152
  %v154 = vsel %vm99, %v60, 0.0
  %v155 = vadd.f32 %v153, %v154
  %v156 = vsel %vm99, %v61, 0.0
  %v157 = vadd.f32 %v155, %v156
  %v158 = vsel %vm99, %v62, 0.0
  %v159 = vadd.f32 %v157, %v158
  %v160 = vsel %vm99, %v63, 0.0
  %v161 = vadd.f32 %v159, %v160
  %v162 = vsel %vm99, %v64, 0.0
  %v163 = vadd.f32 %v161, %v162
  %v164 = vsel %vm99, %v65, 0.0
  %v165 = vadd.f32 %v163, %v164
  %v166 = vsel %vm99, %v66, 0.0
  %v167 = vadd.f32 %v165, %v166
  %v168 = vrot.slane %v167, 4
  %v169 = vadd.f32 %v167, %v168
  %v170 = vrot.slane %v169, 2
  %v171 = vadd.f32 %v169, %v170
  %v172 = vrot.slane %v171, 1
  %v173 = vadd.f32 %v171, %v172
  %v174 = vadd.f32 %v136, %v173
  %v175 = vsel %vm99, %v67, 0.0
  %v176 = vsel %vm99, %v68, 0.0
  %v177 = vadd.f32 %v175, %v176
  %v178 = vsel %vm99, %v69, 0.0
  %v179 = vadd.f32 %v177, %v178
  %v180 = vsel %vm99, %v70, 0.0
  %v181 = vadd.f32 %v179, %v180
  %v182 = vsel %vm99, %v71, 0.0
  %v183 = vadd.f32 %v181, %v182
  %v184 = vsel %vm99, %v72, 0.0
  %v185 = vadd.f32 %v183, %v184
  %v186 = vsel %vm99, %v73, 0.0
  %v187 = vadd.f32 %v185, %v186
  %v188 = vsel %vm99, %v74, 0.0
  %v189 = vadd.f32 %v187, %v188
  %v190 = vsel %vm99, %v75, 0.0
  %v191 = vadd.f32 %v189, %v190
  %v192 = vsel %vm99, %v76, 0.0
  %v193 = vadd.f32 %v191, %v192
  %v194 = vsel %vm99, %v77, 0.0
  %v195 = vadd.f32 %v193, %v194
  %v196 = vsel %vm99, %v78, 0.0
  %v197 = vadd.f32 %v195, %v196
  %v198 = vsel %vm99, %v79, 0.0
  %v199 = vadd.f32 %v197, %v198
  %v200 = vsel %vm99, %v80, 0.0
  %v201 = vadd.f32 %v199, %v200
  %v202 = vsel %vm99, %v81, 0.0
  %v203 = vadd.f32 %v201, %v202
  %v204 = vsel %vm99, %v82, 0.0
  %v205 = vadd.f32 %v203, %v204
  %v206 = vrot.slane %v205, 4
  %v207 = vadd.f32 %v205, %v206
  %v208 = vrot.slane %v207, 2
  %v209 = vadd.f32 %v207, %v208
  %v210 = vrot.slane %v209, 1
  %v211 = vadd.f32 %v209, %v210
  %v212 = vadd.f32 %v174, %v211
  %v213 = vsel %vm99, %v83, 0.0
  %v214 = vsel %vm99, %v84, 0.0
  %v215 = vadd.f32 %v213, %v214
  %v216 = vsel %vm99, %v85, 0.0
  %v217 = vadd.f32 %v215, %v216
  %v218 = vsel %vm99, %v86, 0.0
  %v219 = vadd.f32 %v217, %v218
  %v220 = vsel %vm99, %v87, 0.0
  %v221 = vadd.f32 %v219, %v220
  %v222 = vsel %vm99, %v88, 0.0
  %v223 = vadd.f32 %v221, %v222
  %v224 = vsel %vm99, %v89, 0.0
  %v225 = vadd.f32 %v223, %v224
  %v226 = vsel %vm99, %v90, 0.0
  %v227 = vadd.f32 %v225, %v226
  %v228 = vsel %vm99, %v91, 0.0
  %v229 = vadd.f32 %v227, %v228
  %v230 = vsel %vm99, %v92, 0.0
  %v231 = vadd.f32 %v229, %v230
  %v232 = vsel %vm99, %v93, 0.0
  %v233 = vadd.f32 %v231, %v232
  %v234 = vsel %vm99, %v94, 0.0
  %v235 = vadd.f32 %v233, %v234
  %v236 = vsel %vm99, %v95, 0.0
  %v237 = vadd.f32 %v235, %v236
  %v238 = vsel %vm99, %v96, 0.0
  %v239 = vadd.f32 %v237, %v238
  %v240 = vsel %vm99, %v97, 0.0
  %v241 = vadd.f32 %v239, %v240
  %v242 = vsel %vm99, %v98, 0.0
  %v243 = vadd.f32 %v241, %v242
  %v244 = vrot.slane %v243, 4
  %v245 = vadd.f32 %v243, %v244
  %v246 = vrot.slane %v245, 2
  %v247 = vadd.f32 %v245, %v246
  %v248 = vrot.slane %v247, 1
  %v249 = vadd.f32 %v247, %v248
  %v250 = vadd.f32 %v212, %v249
  %v251 = vmul.f32 %v250, 0.001953125
  %v252 = vsub.f32 %v35, %v251
  %v253 = vsub.f32 %v36, %v251
  %v254 = vsub.f32 %v37, %v251
  %v255 = vsub.f32 %v38, %v251
  %v256 = vsub.f32 %v39, %v251
  %v257 = vsub.f32 %v40, %v251
  %v258 = vsub.f32 %v41, %v251
  %v259 = vsub.f32 %v42, %v251
  %v260 = vsub.f32 %v43, %v251
  %v261 = vsub.f32 %v44, %v251
  %v262 = vsub.f32 %v45, %v251
  %v263 = vsub.f32 %v46, %v251
  %v264 = vsub.f32 %v47, %v251
  %v265 = vsub.f32 %v48, %v251
  %v266 = vsub.f32 %v49, %v251
  %v267 = vsub.f32 %v50, %v251
  %v268 = vmul.f32 %v252, %v252
  %v269 = vmul.f32 %v253, %v253
  %v270 = vmul.f32 %v254, %v254
  %v271 = vmul.f32 %v255, %v255
  %v272 = vmul.f32 %v256, %v256
  %v273 = vmul.f32 %v257, %v257
  %v274 = vmul.f32 %v258, %v258
  %v275 = vmul.f32 %v259, %v259
  %v276 = vmul.f32 %v260, %v260
  %v277 = vmul.f32 %v261, %v261
  %v278 = vmul.f32 %v262, %v262
  %v279 = vmul.f32 %v263, %v263
  %v280 = vmul.f32 %v264, %v264
  %v281 = vmul.f32 %v265, %v265
  %v282 = vmul.f32 %v266, %v266
  %v283 = vmul.f32 %v267, %v267
  %v284 = vsel %vm99, %v268, 0.0
  %v285 = vsel %vm99, %v269, 0.0
  %v286 = vadd.f32 %v284, %v285
  %v287 = vsel %vm99, %v270, 0.0
  %v288 = vadd.f32 %v286, %v287
  %v289 = vsel %vm99, %v271, 0.0
  %v290 = vadd.f32 %v288, %v289
  %v291 = vsel %vm99, %v272, 0.0
  %v292 = vadd.f32 %v290, %v291
  %v293 = vsel %vm99, %v273, 0.0
  %v294 = vadd.f32 %v292, %v293
  %v295 = vsel %vm99, %v274, 0.0
  %v296 = vadd.f32 %v294, %v295
  %v297 = vsel %vm99, %v275, 0.0
  %v298 = vadd.f32 %v296, %v297
  %v299 = vsel %vm99, %v276, 0.0
  %v300 = vadd.f32 %v298, %v299
  %v301 = vsel %vm99, %v277, 0.0
  %v302 = vadd.f32 %v300, %v301
  %v303 = vsel %vm99, %v278, 0.0
  %v304 = vadd.f32 %v302, %v303
  %v305 = vsel %vm99, %v279, 0.0
  %v306 = vadd.f32 %v304, %v305
  %v307 = vsel %vm99, %v280, 0.0
  %v308 = vadd.f32 %v306, %v307
  %v309 = vsel %vm99, %v281, 0.0
  %v310 = vadd.f32 %v308, %v309
  %v311 = vsel %vm99, %v282, 0.0
  %v312 = vadd.f32 %v310, %v311
  %v313 = vsel %vm99, %v283, 0.0
  %v314 = vadd.f32 %v312, %v313
  %v315 = vrot.slane %v314, 4
  %v316 = vadd.f32 %v314, %v315
  %v317 = vrot.slane %v316, 2
  %v318 = vadd.f32 %v316, %v317
  %v319 = vrot.slane %v318, 1
  %v320 = vadd.f32 %v318, %v319
  %v321 = vsub.f32 %v51, %v251
  %v322 = vsub.f32 %v52, %v251
  %v323 = vsub.f32 %v53, %v251
  %v324 = vsub.f32 %v54, %v251
  %v325 = vsub.f32 %v55, %v251
  %v326 = vsub.f32 %v56, %v251
  %v327 = vsub.f32 %v57, %v251
  %v328 = vsub.f32 %v58, %v251
  %v329 = vsub.f32 %v59, %v251
  %v330 = vsub.f32 %v60, %v251
  %v331 = vsub.f32 %v61, %v251
  %v332 = vsub.f32 %v62, %v251
  %v333 = vsub.f32 %v63, %v251
  %v334 = vsub.f32 %v64, %v251
  %v335 = vsub.f32 %v65, %v251
  %v336 = vsub.f32 %v66, %v251
  %v337 = vmul.f32 %v321, %v321
  %v338 = vmul.f32 %v322, %v322
  %v339 = vmul.f32 %v323, %v323
  %v340 = vmul.f32 %v324, %v324
  %v341 = vmul.f32 %v325, %v325
  %v342 = vmul.f32 %v326, %v326
  %v343 = vmul.f32 %v327, %v327
  %v344 = vmul.f32 %v328, %v328
  %v345 = vmul.f32 %v329, %v329
  %v346 = vmul.f32 %v330, %v330
  %v347 = vmul.f32 %v331, %v331
  %v348 = vmul.f32 %v332, %v332
  %v349 = vmul.f32 %v333, %v333
  %v350 = vmul.f32 %v334, %v334
  %v351 = vmul.f32 %v335, %v335
  %v352 = vmul.f32 %v336, %v336
  %v353 = vsel %vm99, %v337, 0.0
  %v354 = vsel %vm99, %v338, 0.0
  %v355 = vadd.f32 %v353, %v354
  %v356 = vsel %vm99, %v339, 0.0
  %v357 = vadd.f32 %v355, %v356
  %v358 = vsel %vm99, %v340, 0.0
  %v359 = vadd.f32 %v357, %v358
  %v360 = vsel %vm99, %v341, 0.0
  %v361 = vadd.f32 %v359, %v360
  %v362 = vsel %vm99, %v342, 0.0
  %v363 = vadd.f32 %v361, %v362
  %v364 = vsel %vm99, %v343, 0.0
  %v365 = vadd.f32 %v363, %v364
  %v366 = vsel %vm99, %v344, 0.0
  %v367 = vadd.f32 %v365, %v366
  %v368 = vsel %vm99, %v345, 0.0
  %v369 = vadd.f32 %v367, %v368
  %v370 = vsel %vm99, %v346, 0.0
  %v371 = vadd.f32 %v369, %v370
  %v372 = vsel %vm99, %v347, 0.0
  %v373 = vadd.f32 %v371, %v372
  %v374 = vsel %vm99, %v348, 0.0
  %v375 = vadd.f32 %v373, %v374
  %v376 = vsel %vm99, %v349, 0.0
  %v377 = vadd.f32 %v375, %v376
  %v378 = vsel %vm99, %v350, 0.0
  %v379 = vadd.f32 %v377, %v378
  %v380 = vsel %vm99, %v351, 0.0
  %v381 = vadd.f32 %v379, %v380
  %v382 = vsel %vm99, %v352, 0.0
  %v383 = vadd.f32 %v381, %v382
  %v384 = vrot.slane %v383, 4
  %v385 = vadd.f32 %v383, %v384
  %v386 = vrot.slane %v385, 2
  %v387 = vadd.f32 %v385, %v386
  %v388 = vrot.slane %v387, 1
  %v389 = vadd.f32 %v387, %v388
  %v390 = vadd.f32 %v320, %v389
  %v391 = vsub.f32 %v67, %v251
  %v392 = vsub.f32 %v68, %v251
  %v393 = vsub.f32 %v69, %v251
  %v394 = vsub.f32 %v70, %v251
  %v395 = vsub.f32 %v71, %v251
  %v396 = vsub.f32 %v72, %v251
  %v397 = vsub.f32 %v73, %v251
  %v398 = vsub.f32 %v74, %v251
  %v399 = vsub.f32 %v75, %v251
  %v400 = vsub.f32 %v76, %v251
  %v401 = vsub.f32 %v77, %v251
  %v402 = vsub.f32 %v78, %v251
  %v403 = vsub.f32 %v79, %v251
  %v404 = vsub.f32 %v80, %v251
  %v405 = vsub.f32 %v81, %v251
  %v406 = vsub.f32 %v82, %v251
  %v407 = vmul.f32 %v391, %v391
  %v408 = vmul.f32 %v392, %v392
  %v409 = vmul.f32 %v393, %v393
  %v410 = vmul.f32 %v394, %v394
  %v411 = vmul.f32 %v395, %v395
  %v412 = vmul.f32 %v396, %v396
  %v413 = vmul.f32 %v397, %v397
  %v414 = vmul.f32 %v398, %v398
  %v415 = vmul.f32 %v399, %v399
  %v416 = vmul.f32 %v400, %v400
  %v417 = vmul.f32 %v401, %v401
  %v418 = vmul.f32 %v402, %v402
  %v419 = vmul.f32 %v403, %v403
  %v420 = vmul.f32 %v404, %v404
  %v421 = vmul.f32 %v405, %v405
  %v422 = vmul.f32 %v406, %v406
  %v423 = vsel %vm99, %v407, 0.0
  %v424 = vsel %vm99, %v408, 0.0
  %v425 = vadd.f32 %v423, %v424
  %v426 = vsel %vm99, %v409, 0.0
  %v427 = vadd.f32 %v425, %v426
  %v428 = vsel %vm99, %v410, 0.0
  %v429 = vadd.f32 %v427, %v428
  %v430 = vsel %vm99, %v411, 0.0
  %v431 = vadd.f32 %v429, %v430
  %v432 = vsel %vm99, %v412, 0.0
  %v433 = vadd.f32 %v431, %v432
  %v434 = vsel %vm99, %v413, 0.0
  %v435 = vadd.f32 %v433, %v434
  %v436 = vsel %vm99, %v414, 0.0
  %v437 = vadd.f32 %v435, %v436
  %v438 = vsel %vm99, %v415, 0.0
  %v439 = vadd.f32 %v437, %v438
  %v440 = vsel %vm99, %v416, 0.0
  %v441 = vadd.f32 %v439, %v440
  %v442 = vsel %vm99, %v417, 0.0
  %v443 = vadd.f32 %v441, %v442
  %v444 = vsel %vm99, %v418, 0.0
  %v445 = vadd.f32 %v443, %v444
  %v446 = vsel %vm99, %v419, 0.0
  %v447 = vadd.f32 %v445, %v446
  %v448 = vsel %vm99, %v420, 0.0
  %v449 = vadd.f32 %v447, %v448
  %v450 = vsel %vm99, %v421, 0.0
  %v451 = vadd.f32 %v449, %v450
  %v452 = vsel %vm99, %v422, 0.0
  %v453 = vadd.f32 %v451, %v452
  %v454 = vrot.slane %v453, 4
  %v455 = vadd.f32 %v453, %v454
  %v456 = vrot.slane %v455, 2
  %v457 = vadd.f32 %v455, %v456
  %v458 = vrot.slane %v457, 1
  %v459 = vadd.f32 %v457, %v458
  %v460 = vadd.f32 %v390, %v459
  %v461 = vsub.f32 %v83, %v251
  %v462 = vsub.f32 %v84, %v251
  %v463 = vsub.f32 %v85, %v251
  %v464 = vsub.f32 %v86, %v251
  %v465 = vsub.f32 %v87, %v251
  %v466 = vsub.f32 %v88, %v251
  %v467 = vsub.f32 %v89, %v251
  %v468 = vsub.f32 %v90, %v251
  %v469 = vsub.f32 %v91, %v251
  %v470 = vsub.f32 %v92, %v251
  %v471 = vsub.f32 %v93, %v251
  %v472 = vsub.f32 %v94, %v251
  %v473 = vsub.f32 %v95, %v251
  %v474 = vsub.f32 %v96, %v251
  %v475 = vsub.f32 %v97, %v251
  %v476 = vsub.f32 %v98, %v251
  %v477 = vmul.f32 %v461, %v461
  %v478 = vmul.f32 %v462, %v462
  %v479 = vmul.f32 %v463, %v463
  %v480 = vmul.f32 %v464, %v464
  %v481 = vmul.f32 %v465, %v465
  %v482 = vmul.f32 %v466, %v466
  %v483 = vmul.f32 %v467, %v467
  %v484 = vmul.f32 %v468, %v468
  %v485 = vmul.f32 %v469, %v469
  %v486 = vmul.f32 %v470, %v470
  %v487 = vmul.f32 %v471, %v471
  %v488 = vmul.f32 %v472, %v472
  %v489 = vmul.f32 %v473, %v473
  %v490 = vmul.f32 %v474, %v474
  %v491 = vmul.f32 %v475, %v475
  %v492 = vmul.f32 %v476, %v476
  %v493 = vsel %vm99, %v477, 0.0
  %v494 = vsel %vm99, %v478, 0.0
  %v495 = vadd.f32 %v493, %v494
  %v496 = vsel %vm99, %v479, 0.0
  %v497 = vadd.f32 %v495, %v496
  %v498 = vsel %vm99, %v480, 0.0
  %v499 = vadd.f32 %v497, %v498
  %v500 = vsel %vm99, %v481, 0.0
  %v501 = vadd.f32 %v499, %v500
  %v502 = vsel %vm99, %v482, 0.0
  %v503 = vadd.f32 %v501, %v502
  %v504 = vsel %vm99, %v483, 0.0
  %v505 = vadd.f32 %v503, %v504
  %v506 = vsel %vm99, %v484, 0.0
  %v507 = vadd.f32 %v505, %v506
  %v508 = vsel %vm99, %v485, 0.0
  %v509 = vadd.f32 %v507, %v508
  %v510 = vsel %vm99, %v486, 0.0
  %v511 = vadd.f32 %v509, %v510
  %v512 = vsel %vm99, %v487, 0.0
  %v513 = vadd.f32 %v511, %v512
  %v514 = vsel %vm99, %v488, 0.0
  %v515 = vadd.f32 %v513, %v514
  %v516 = vsel %vm99, %v489, 0.0
  %v517 = vadd.f32 %v515, %v516
  %v518 = vsel %vm99, %v490, 0.0
  %v519 = vadd.f32 %v517, %v518
  %v520 = vsel %vm99, %v491, 0.0
  %v521 = vadd.f32 %v519, %v520
  %v522 = vsel %vm99, %v492, 0.0
  %v523 = vadd.f32 %v521, %v522
  %v524 = vrot.slane %v523, 4
  %v525 = vadd.f32 %v523, %v524
  %v526 = vrot.slane %v525, 2
  %v527 = vadd.f32 %v525, %v526
  %v528 = vrot.slane %v527, 1
  %v529 = vadd.f32 %v527, %v528
  %v530 = vadd.f32 %v460, %v529
  %v531 = vmul.f32 %v530, 0.001953125
  %v532 = vmax.f32 %v531, 0.0
  %v533 = vld [vmem:[%s4] sm:$0x1]
  %v534 = vadd.f32 %v532, 1e-05
  %v535 = vrsqrt.pop %v534
  %v536 = vmul.f32 %v535, %v534
  %v537 = vmul.f32 %v536, %v535
  %v538 = vmul.f32 0.5, %v537
  %v539 = vsub.f32 1.5, %v538
  %v540 = vmul.f32 %v535, %v539
  %vm541 = vweird.f32 %v534
  %vm542 = vweird.f32 %v535
  %vm543 = vmor %vm541, %vm542
  %v544 = vsel %vm543, %v535, %v540
  %v545 = vmul.f32 %v533, %v544
  %v546 = vld [vmem:[%s5] sm:$0x1]
  %v547 = vmul.f32 %v251, %v545
  %v548 = vsub.f32 %v546, %v547
  %v550 = vperm.slane %v545, 0
  %v552 = vmul.f32 %v35, %v550
  %v553 = vmul.f32 %v36, %v550
  %v554 = vmul.f32 %v37, %v550
  %v555 = vmul.f32 %v38, %v550
  %v556 = vmul.f32 %v39, %v550
  %v557 = vmul.f32 %v40, %v550
  %v558 = vmul.f32 %v41, %v550
  %v559 = vmul.f32 %v42, %v550
  %v560 = vmul.f32 %v43, %v550
  %v561 = vmul.f32 %v44, %v550
  %v562 = vmul.f32 %v45, %v550
  %v563 = vmul.f32 %v46, %v550
  %v564 = vmul.f32 %v47, %v550
  %v565 = vmul.f32 %v48, %v550
  %v566 = vmul.f32 %v49, %v550
  %v567 = vmul.f32 %v50, %v550
  %v569 = vperm.slane %v548, 0
  %v571 = vadd.f32 %v552, %v569
  %v572 = vadd.f32 %v553, %v569
  %v573 = vadd.f32 %v554, %v569
  %v574 = vadd.f32 %v555, %v569
  %v575 = vadd.f32 %v556, %v569
  %v576 = vadd.f32 %v557, %v569
  %v577 = vadd.f32 %v558, %v569
  %v578 = vadd.f32 %v559, %v569
  %v579 = vadd.f32 %v560, %v569
  %v580 = vadd.f32 %v561, %v569
  %v581 = vadd.f32 %v562, %v569
  %v582 = vadd.f32 %v563, %v569
  %v583 = vadd.f32 %v564, %v569
  %v584 = vadd.f32 %v565, %v569
  %v585 = vadd.f32 %v566, %v569
  %v586 = vadd.f32 %v567, %v569
  %v587 = vmax.f32 %v571, 0.0
  %v588 = vmax.f32 %v572, 0.0
  %v589 = vmax.f32 %v573, 0.0
  %v590 = vmax.f32 %v574, 0.0
  %v591 = vmax.f32 %v575, 0.0
  %v592 = vmax.f32 %v576, 0.0
  %v593 = vmax.f32 %v577, 0.0
  %v594 = vmax.f32 %v578, 0.0
  %v595 = vmax.f32 %v579, 0.0
  %v596 = vmax.f32 %v580, 0.0
  %v597 = vmax.f32 %v581, 0.0
  %v598 = vmax.f32 %v582, 0.0
  %v599 = vmax.f32 %v583, 0.0
  %v600 = vmax.f32 %v584, 0.0
  %v601 = vmax.f32 %v585, 0.0
  %v602 = vmax.f32 %v586, 0.0
  %603 = vst.msk [vmem:[#allocation2] sm:$0xff] %vm99, 0.0
  %vm604 = vcmask 25600
  %605 = vst.msk [vmem:[#allocation2 + $0x8] sm:$0x3] %vm604, 0.0
  %606 = vst.msk [vmem:[#allocation2 + $0xa0] sm:$0xff] %vm99, 0.0
  %607 = vst.msk [vmem:[#allocation2 + $0xa8] sm:$0x3] %vm604, 0.0
  %s608 = scalar_lea.vmem [#allocation2], 144
  %609 = vst.msk [vmem:[%s608] sm:$0xff] %vm99, 0.0
  %610 = vst.msk [vmem:[%s608 + $0x8] sm:$0x3] %vm604, 0.0
  %611 = vst.msk [vmem:[%s608 + $0xa0] sm:$0xff] %vm99, 0.0
  %612 = vst.msk [vmem:[%s608 + $0xa8] sm:$0x3] %vm604, 0.0
  %s613 = scalar_lea.vmem [#allocation2], 16
  %vm614 = vcmask 24576
  %615 = vst.msk [vmem:[%s613] sm:$0x1] %vm614, 0.0
  %616 = vst.msk [vmem:[%s613 + $0x10] sm:$0x1] %vm614, 0.0
  %617 = vst.msk [vmem:[%s613 + $0x20] sm:$0x1] %vm614, 0.0
  %618 = vst.msk [vmem:[%s613 + $0x30] sm:$0x1] %vm614, 0.0
  %619 = vst.msk [vmem:[%s613 + $0x40] sm:$0x1] %vm614, 0.0
  %620 = vst.msk [vmem:[%s613 + $0x50] sm:$0x1] %vm614, 0.0
  %621 = vst.msk [vmem:[%s613 + $0x60] sm:$0x1] %vm614, 0.0
  %622 = vst.msk [vmem:[%s613 + $0x70] sm:$0x1] %vm614, 0.0
  %623 = vst.msk [vmem:[%s613 + $0xa0] sm:$0x1] %vm614, 0.0
  %624 = vst.msk [vmem:[%s613 + $0xb0] sm:$0x1] %vm614, 0.0
  %625 = vst.msk [vmem:[%s613 + $0xc0] sm:$0x1] %vm614, 0.0
  %626 = vst.msk [vmem:[%s613 + $0xd0] sm:$0x1] %vm614, 0.0
  %627 = vst.msk [vmem:[%s613 + $0xe0] sm:$0x1] %vm614, 0.0
  %628 = vst.msk [vmem:[%s613 + $0xf0] sm:$0x1] %vm614, 0.0
  %629 = vst.msk [vmem:[%s613 + $0x100] sm:$0x1] %vm614, 0.0
  %630 = vst.msk [vmem:[%s613 + $0x110] sm:$0x1] %vm614, 0.0
  %631 = vst.msk [vmem:[%s613 + $0x9] sm:$0x1] %vm614, 0.0
  %632 = vst.msk [vmem:[%s613 + $0x19] sm:$0x1] %vm614, 0.0
  %633 = vst.msk [vmem:[%s613 + $0x29] sm:$0x1] %vm614, 0.0
  %634 = vst.msk [vmem:[%s613 + $0x39] sm:$0x1] %vm614, 0.0
  %635 = vst.msk [vmem:[%s613 + $0x49] sm:$0x1] %vm614, 0.0
  %636 = vst.msk [vmem:[%s613 + $0x59] sm:$0x1] %vm614, 0.0
  %637 = vst.msk [vmem:[%s613 + $0x69] sm:$0x1] %vm614, 0.0
  %638 = vst.msk [vmem:[%s613 + $0x79] sm:$0x1] %vm614, 0.0
  %639 = vst.msk [vmem:[%s613 + $0xa9] sm:$0x1] %vm614, 0.0
  %640 = vst.msk [vmem:[%s613 + $0xb9] sm:$0x1] %vm614, 0.0
  %641 = vst.msk [vmem:[%s613 + $0xc9] sm:$0x1] %vm614, 0.0
  %642 = vst.msk [vmem:[%s613 + $0xd9] sm:$0x1] %vm614, 0.0
  %643 = vst.msk [vmem:[%s613 + $0xe9] sm:$0x1] %vm614, 0.0
  %644 = vst.msk [vmem:[%s613 + $0xf9] sm:$0x1] %vm614, 0.0
  %645 = vst.msk [vmem:[%s613 + $0x109] sm:$0x1] %vm614, 0.0
  %646 = vst.msk [vmem:[%s613 + $0x119] sm:$0x1] %vm614, 0.0
  %647 = vst.msk [vmem:[%s613 + $0x1] sm:$0xff] %vm99, %v587
  %648 = vst.msk [vmem:[%s613 + $0x11] sm:$0xff] %vm99, %v588
  %649 = vst.msk [vmem:[%s613 + $0x21] sm:$0xff] %vm99, %v589
  %650 = vst.msk [vmem:[%s613 + $0x31] sm:$0xff] %vm99, %v590
  %651 = vst.msk [vmem:[%s613 + $0x41] sm:$0xff] %vm99, %v591
  %652 = vst.msk [vmem:[%s613 + $0x51] sm:$0xff] %vm99, %v592
  %653 = vst.msk [vmem:[%s613 + $0x61] sm:$0xff] %vm99, %v593
  %654 = vst.msk [vmem:[%s613 + $0x71] sm:$0xff] %vm99, %v594
  %655 = vst.msk [vmem:[%s613 + $0xa1] sm:$0xff] %vm99, %v595
  %656 = vst.msk [vmem:[%s613 + $0xb1] sm:$0xff] %vm99, %v596
  %657 = vst.msk [vmem:[%s613 + $0xc1] sm:$0xff] %vm99, %v597
  %658 = vst.msk [vmem:[%s613 + $0xd1] sm:$0xff] %vm99, %v598
  %659 = vst.msk [vmem:[%s613 + $0xe1] sm:$0xff] %vm99, %v599
  %660 = vst.msk [vmem:[%s613 + $0xf1] sm:$0xff] %vm99, %v600
  %661 = vst.msk [vmem:[%s613 + $0x101] sm:$0xff] %vm99, %v601
  %662 = vst.msk [vmem:[%s613 + $0x111] sm:$0xff] %vm99, %v602
  %v663 = vmul.f32 %v51, %v550
  %v664 = vmul.f32 %v52, %v550
  %v665 = vmul.f32 %v53, %v550
  %v666 = vmul.f32 %v54, %v550
  %v667 = vmul.f32 %v55, %v550
  %v668 = vmul.f32 %v56, %v550
  %v669 = vmul.f32 %v57, %v550
  %v670 = vmul.f32 %v58, %v550
  %v671 = vmul.f32 %v59, %v550
  %v672 = vmul.f32 %v60, %v550
  %v673 = vmul.f32 %v61, %v550
  %v674 = vmul.f32 %v62, %v550
  %v675 = vmul.f32 %v63, %v550
  %v676 = vmul.f32 %v64, %v550
  %v677 = vmul.f32 %v65, %v550
  %v678 = vmul.f32 %v66, %v550
  %v679 = vadd.f32 %v663, %v569
  %v680 = vadd.f32 %v664, %v569
  %v681 = vadd.f32 %v665, %v569
  %v682 = vadd.f32 %v666, %v569
  %v683 = vadd.f32 %v667, %v569
  %v684 = vadd.f32 %v668, %v569
  %v685 = vadd.f32 %v669, %v569
  %v686 = vadd.f32 %v670, %v569
  %v687 = vadd.f32 %v671, %v569
  %v688 = vadd.f32 %v672, %v569
  %v689 = vadd.f32 %v673, %v569
  %v690 = vadd.f32 %v674, %v569
  %v691 = vadd.f32 %v675, %v569
  %v692 = vadd.f32 %v676, %v569
  %v693 = vadd.f32 %v677, %v569
  %v694 = vadd.f32 %v678, %v569
  %v695 = vmax.f32 %v679, 0.0
  %v696 = vmax.f32 %v680, 0.0
  %v697 = vmax.f32 %v681, 0.0
  %v698 = vmax.f32 %v682, 0.0
  %v699 = vmax.f32 %v683, 0.0
  %v700 = vmax.f32 %v684, 0.0
  %v701 = vmax.f32 %v685, 0.0
  %v702 = vmax.f32 %v686, 0.0
  %v703 = vmax.f32 %v687, 0.0
  %v704 = vmax.f32 %v688, 0.0
  %v705 = vmax.f32 %v689, 0.0
  %v706 = vmax.f32 %v690, 0.0
  %v707 = vmax.f32 %v691, 0.0
  %v708 = vmax.f32 %v692, 0.0
  %v709 = vmax.f32 %v693, 0.0
  %v710 = vmax.f32 %v694, 0.0
  %711 = vst.msk [vmem:[#allocation3] sm:$0xff] %vm99, 0.0
  %712 = vst.msk [vmem:[#allocation3 + $0x8] sm:$0x3] %vm604, 0.0
  %713 = vst.msk [vmem:[#allocation3 + $0xa0] sm:$0xff] %vm99, 0.0
  %714 = vst.msk [vmem:[#allocation3 + $0xa8] sm:$0x3] %vm604, 0.0
  %s715 = scalar_lea.vmem [#allocation3], 144
  %716 = vst.msk [vmem:[%s715] sm:$0xff] %vm99, 0.0
  %717 = vst.msk [vmem:[%s715 + $0x8] sm:$0x3] %vm604, 0.0
  %718 = vst.msk [vmem:[%s715 + $0xa0] sm:$0xff] %vm99, 0.0
  %719 = vst.msk [vmem:[%s715 + $0xa8] sm:$0x3] %vm604, 0.0
  %s720 = scalar_lea.vmem [#allocation3], 16
  %721 = vst.msk [vmem:[%s720] sm:$0x1] %vm614, 0.0
  %722 = vst.msk [vmem:[%s720 + $0x10] sm:$0x1] %vm614, 0.0
  %723 = vst.msk [vmem:[%s720 + $0x20] sm:$0x1] %vm614, 0.0
  %724 = vst.msk [vmem:[%s720 + $0x30] sm:$0x1] %vm614, 0.0
  %725 = vst.msk [vmem:[%s720 + $0x40] sm:$0x1] %vm614, 0.0
  %726 = vst.msk [vmem:[%s720 + $0x50] sm:$0x1] %vm614, 0.0
  %727 = vst.msk [vmem:[%s720 + $0x60] sm:$0x1] %vm614, 0.0
  %728 = vst.msk [vmem:[%s720 + $0x70] sm:$0x1] %vm614, 0.0
  %729 = vst.msk [vmem:[%s720 + $0xa0] sm:$0x1] %vm614, 0.0
  %730 = vst.msk [vmem:[%s720 + $0xb0] sm:$0x1] %vm614, 0.0
  %731 = vst.msk [vmem:[%s720 + $0xc0] sm:$0x1] %vm614, 0.0
  %732 = vst.msk [vmem:[%s720 + $0xd0] sm:$0x1] %vm614, 0.0
  %733 = vst.msk [vmem:[%s720 + $0xe0] sm:$0x1] %vm614, 0.0
  %734 = vst.msk [vmem:[%s720 + $0xf0] sm:$0x1] %vm614, 0.0
  %735 = vst.msk [vmem:[%s720 + $0x100] sm:$0x1] %vm614, 0.0
  %736 = vst.msk [vmem:[%s720 + $0x110] sm:$0x1] %vm614, 0.0
  %737 = vst.msk [vmem:[%s720 + $0x9] sm:$0x1] %vm614, 0.0
  %738 = vst.msk [vmem:[%s720 + $0x19] sm:$0x1] %vm614, 0.0
  %739 = vst.msk [vmem:[%s720 + $0x29] sm:$0x1] %vm614, 0.0
  %740 = vst.msk [vmem:[%s720 + $0x39] sm:$0x1] %vm614, 0.0
  %741 = vst.msk [vmem:[%s720 + $0x49] sm:$0x1] %vm614, 0.0
  %742 = vst.msk [vmem:[%s720 + $0x59] sm:$0x1] %vm614, 0.0
  %743 = vst.msk [vmem:[%s720 + $0x69] sm:$0x1] %vm614, 0.0
  %744 = vst.msk [vmem:[%s720 + $0x79] sm:$0x1] %vm614, 0.0
  %745 = vst.msk [vmem:[%s720 + $0xa9] sm:$0x1] %vm614, 0.0
  %746 = vst.msk [vmem:[%s720 + $0xb9] sm:$0x1] %vm614, 0.0
  %747 = vst.msk [vmem:[%s720 + $0xc9] sm:$0x1] %vm614, 0.0
  %748 = vst.msk [vmem:[%s720 + $0xd9] sm:$0x1] %vm614, 0.0
  %749 = vst.msk [vmem:[%s720 + $0xe9] sm:$0x1] %vm614, 0.0
  %750 = vst.msk [vmem:[%s720 + $0xf9] sm:$0x1] %vm614, 0.0
  %751 = vst.msk [vmem:[%s720 + $0x109] sm:$0x1] %vm614, 0.0
  %752 = vst.msk [vmem:[%s720 + $0x119] sm:$0x1] %vm614, 0.0
  %753 = vst.msk [vmem:[%s720 + $0x1] sm:$0xff] %vm99, %v695
  %754 = vst.msk [vmem:[%s720 + $0x11] sm:$0xff] %vm99, %v696
  %755 = vst.msk [vmem:[%s720 + $0x21] sm:$0xff] %vm99, %v697
  %756 = vst.msk [vmem:[%s720 + $0x31] sm:$0xff] %vm99, %v698
  %757 = vst.msk [vmem:[%s720 + $0x41] sm:$0xff] %vm99, %v699
  %758 = vst.msk [vmem:[%s720 + $0x51] sm:$0xff] %vm99, %v700
  %759 = vst.msk [vmem:[%s720 + $0x61] sm:$0xff] %vm99, %v701
  %760 = vst.msk [vmem:[%s720 + $0x71] sm:$0xff] %vm99, %v702
  %761 = vst.msk [vmem:[%s720 + $0xa1] sm:$0xff] %vm99, %v703
  %762 = vst.msk [vmem:[%s720 + $0xb1] sm:$0xff] %vm99, %v704
  %763 = vst.msk [vmem:[%s720 + $0xc1] sm:$0xff] %vm99, %v705
  %764 = vst.msk [vmem:[%s720 + $0xd1] sm:$0xff] %vm99, %v706
  %765 = vst.msk [vmem:[%s720 + $0xe1] sm:$0xff] %vm99, %v707
  %766 = vst.msk [vmem:[%s720 + $0xf1] sm:$0xff] %vm99, %v708
  %767 = vst.msk [vmem:[%s720 + $0x101] sm:$0xff] %vm99, %v709
  %768 = vst.msk [vmem:[%s720 + $0x111] sm:$0xff] %vm99, %v710
  %v769 = vmul.f32 %v67, %v550
  %v770 = vmul.f32 %v68, %v550
  %v771 = vmul.f32 %v69, %v550
  %v772 = vmul.f32 %v70, %v550
  %v773 = vmul.f32 %v71, %v550
  %v774 = vmul.f32 %v72, %v550
  %v775 = vmul.f32 %v73, %v550
  %v776 = vmul.f32 %v74, %v550
  %v777 = vmul.f32 %v75, %v550
  %v778 = vmul.f32 %v76, %v550
  %v779 = vmul.f32 %v77, %v550
  %v780 = vmul.f32 %v78, %v550
  %v781 = vmul.f32 %v79, %v550
  %v782 = vmul.f32 %v80, %v550
  %v783 = vmul.f32 %v81, %v550
  %v784 = vmul.f32 %v82, %v550
  %v785 = vadd.f32 %v769, %v569
  %v786 = vadd.f32 %v770, %v569
  %v787 = vadd.f32 %v771, %v569
  %v788 = vadd.f32 %v772, %v569
  %v789 = vadd.f32 %v773, %v569
  %v790 = vadd.f32 %v774, %v569
  %v791 = vadd.f32 %v775, %v569
  %v792 = vadd.f32 %v776, %v569
  %v793 = vadd.f32 %v777, %v569
  %v794 = vadd.f32 %v778, %v569
  %v795 = vadd.f32 %v779, %v569
  %v796 = vadd.f32 %v780, %v569
  %v797 = vadd.f32 %v781, %v569
  %v798 = vadd.f32 %v782, %v569
  %v799 = vadd.f32 %v783, %v569
  %v800 = vadd.f32 %v784, %v569
  %v801 = vmax.f32 %v785, 0.0
  %v802 = vmax.f32 %v786, 0.0
  %v803 = vmax.f32 %v787, 0.0
  %v804 = vmax.f32 %v788, 0.0
  %v805 = vmax.f32 %v789, 0.0
  %v806 = vmax.f32 %v790, 0.0
  %v807 = vmax.f32 %v791, 0.0
  %v808 = vmax.f32 %v792, 0.0
  %v809 = vmax.f32 %v793, 0.0
  %v810 = vmax.f32 %v794, 0.0
  %v811 = vmax.f32 %v795, 0.0
  %v812 = vmax.f32 %v796, 0.0
  %v813 = vmax.f32 %v797, 0.0
  %v814 = vmax.f32 %v798, 0.0
  %v815 = vmax.f32 %v799, 0.0
  %v816 = vmax.f32 %v800, 0.0
  %817 = vst.msk [vmem:[#allocation4] sm:$0xff] %vm99, 0.0
  %818 = vst.msk [vmem:[#allocation4 + $0x8] sm:$0x3] %vm604, 0.0
  %819 = vst.msk [vmem:[#allocation4 + $0xa0] sm:$0xff] %vm99, 0.0
  %820 = vst.msk [vmem:[#allocation4 + $0xa8] sm:$0x3] %vm604, 0.0
  %s821 = scalar_lea.vmem [#allocation4], 144
  %822 = vst.msk [vmem:[%s821] sm:$0xff] %vm99, 0.0
  %823 = vst.msk [vmem:[%s821 + $0x8] sm:$0x3] %vm604, 0.0
  %824 = vst.msk [vmem:[%s821 + $0xa0] sm:$0xff] %vm99, 0.0
  %825 = vst.msk [vmem:[%s821 + $0xa8] sm:$0x3] %vm604, 0.0
  %s826 = scalar_lea.vmem [#allocation4], 16
  %827 = vst.msk [vmem:[%s826] sm:$0x1] %vm614, 0.0
  %828 = vst.msk [vmem:[%s826 + $0x10] sm:$0x1] %vm614, 0.0
  %829 = vst.msk [vmem:[%s826 + $0x20] sm:$0x1] %vm614, 0.0
  %830 = vst.msk [vmem:[%s826 + $0x30] sm:$0x1] %vm614, 0.0
  %831 = vst.msk [vmem:[%s826 + $0x40] sm:$0x1] %vm614, 0.0
  %832 = vst.msk [vmem:[%s826 + $0x50] sm:$0x1] %vm614, 0.0
  %833 = vst.msk [vmem:[%s826 + $0x60] sm:$0x1] %vm614, 0.0
  %834 = vst.msk [vmem:[%s826 + $0x70] sm:$0x1] %vm614, 0.0
  %835 = vst.msk [vmem:[%s826 + $0xa0] sm:$0x1] %vm614, 0.0
  %836 = vst.msk [vmem:[%s826 + $0xb0] sm:$0x1] %vm614, 0.0
  %837 = vst.msk [vmem:[%s826 + $0xc0] sm:$0x1] %vm614, 0.0
  %838 = vst.msk [vmem:[%s826 + $0xd0] sm:$0x1] %vm614, 0.0
  %839 = vst.msk [vmem:[%s826 + $0xe0] sm:$0x1] %vm614, 0.0
  %840 = vst.msk [vmem:[%s826 + $0xf0] sm:$0x1] %vm614, 0.0
  %841 = vst.msk [vmem:[%s826 + $0x100] sm:$0x1] %vm614, 0.0
  %842 = vst.msk [vmem:[%s826 + $0x110] sm:$0x1] %vm614, 0.0
  %843 = vst.msk [vmem:[%s826 + $0x9] sm:$0x1] %vm614, 0.0
  %844 = vst.msk [vmem:[%s826 + $0x19] sm:$0x1] %vm614, 0.0
  %845 = vst.msk [vmem:[%s826 + $0x29] sm:$0x1] %vm614, 0.0
  %846 = vst.msk [vmem:[%s826 + $0x39] sm:$0x1] %vm614, 0.0
  %847 = vst.msk [vmem:[%s826 + $0x49] sm:$0x1] %vm614, 0.0
  %848 = vst.msk [vmem:[%s826 + $0x59] sm:$0x1] %vm614, 0.0
  %849 = vst.msk [vmem:[%s826 + $0x69] sm:$0x1] %vm614, 0.0
  %850 = vst.msk [vmem:[%s826 + $0x79] sm:$0x1] %vm614, 0.0
  %851 = vst.msk [vmem:[%s826 + $0xa9] sm:$0x1] %vm614, 0.0
  %852 = vst.msk [vmem:[%s826 + $0xb9] sm:$0x1] %vm614, 0.0
  %853 = vst.msk [vmem:[%s826 + $0xc9] sm:$0x1] %vm614, 0.0
  %854 = vst.msk [vmem:[%s826 + $0xd9] sm:$0x1] %vm614, 0.0
  %855 = vst.msk [vmem:[%s826 + $0xe9] sm:$0x1] %vm614, 0.0
  %856 = vst.msk [vmem:[%s826 + $0xf9] sm:$0x1] %vm614, 0.0
  %857 = vst.msk [vmem:[%s826 + $0x109] sm:$0x1] %vm614, 0.0
  %858 = vst.msk [vmem:[%s826 + $0x119] sm:$0x1] %vm614, 0.0
  %859 = vst.msk [vmem:[%s826 + $0x1] sm:$0xff] %vm99, %v801
  %860 = vst.msk [vmem:[%s826 + $0x11] sm:$0xff] %vm99, %v802
  %861 = vst.msk [vmem:[%s826 + $0x21] sm:$0xff] %vm99, %v803
  %862 = vst.msk [vmem:[%s826 + $0x31] sm:$0xff] %vm99, %v804
  %863 = vst.msk [vmem:[%s826 + $0x41] sm:$0xff] %vm99, %v805
  %864 = vst.msk [vmem:[%s826 + $0x51] sm:$0xff] %vm99, %v806
  %865 = vst.msk [vmem:[%s826 + $0x61] sm:$0xff] %vm99, %v807
  %866 = vst.msk [vmem:[%s826 + $0x71] sm:$0xff] %vm99, %v808
  %867 = vst.msk [vmem:[%s826 + $0xa1] sm:$0xff] %vm99, %v809
  %868 = vst.msk [vmem:[%s826 + $0xb1] sm:$0xff] %vm99, %v810
  %869 = vst.msk [vmem:[%s826 + $0xc1] sm:$0xff] %vm99, %v811
  %870 = vst.msk [vmem:[%s826 + $0xd1] sm:$0xff] %vm99, %v812
  %871 = vst.msk [vmem:[%s826 + $0xe1] sm:$0xff] %vm99, %v813
  %872 = vst.msk [vmem:[%s826 + $0xf1] sm:$0xff] %vm99, %v814
  %873 = vst.msk [vmem:[%s826 + $0x101] sm:$0xff] %vm99, %v815
  %874 = vst.msk [vmem:[%s826 + $0x111] sm:$0xff] %vm99, %v816
  %v875 = vmul.f32 %v83, %v550
  %v876 = vmul.f32 %v84, %v550
  %v877 = vmul.f32 %v85, %v550
  %v878 = vmul.f32 %v86, %v550
  %v879 = vmul.f32 %v87, %v550
  %v880 = vmul.f32 %v88, %v550
  %v881 = vmul.f32 %v89, %v550
  %v882 = vmul.f32 %v90, %v550
  %v883 = vmul.f32 %v91, %v550
  %v884 = vmul.f32 %v92, %v550
  %v885 = vmul.f32 %v93, %v550
  %v886 = vmul.f32 %v94, %v550
  %v887 = vmul.f32 %v95, %v550
  %v888 = vmul.f32 %v96, %v550
  %v889 = vmul.f32 %v97, %v550
  %v890 = vmul.f32 %v98, %v550
  %v891 = vadd.f32 %v875, %v569
  %v892 = vadd.f32 %v876, %v569
  %v893 = vadd.f32 %v877, %v569
  %v894 = vadd.f32 %v878, %v569
  %v895 = vadd.f32 %v879, %v569
  %v896 = vadd.f32 %v880, %v569
  %v897 = vadd.f32 %v881, %v569
  %v898 = vadd.f32 %v882, %v569
  %v899 = vadd.f32 %v883, %v569
  %v900 = vadd.f32 %v884, %v569
  %v901 = vadd.f32 %v885, %v569
  %v902 = vadd.f32 %v886, %v569
  %v903 = vadd.f32 %v887, %v569
  %v904 = vadd.f32 %v888, %v569
  %v905 = vadd.f32 %v889, %v569
  %v906 = vadd.f32 %v890, %v569
  %v907 = vmax.f32 %v891, 0.0
  %v908 = vmax.f32 %v892, 0.0
  %v909 = vmax.f32 %v893, 0.0
  %v910 = vmax.f32 %v894, 0.0
  %v911 = vmax.f32 %v895, 0.0
  %v912 = vmax.f32 %v896, 0.0
  %v913 = vmax.f32 %v897, 0.0
  %v914 = vmax.f32 %v898, 0.0
  %v915 = vmax.f32 %v899, 0.0
  %v916 = vmax.f32 %v900, 0.0
  %v917 = vmax.f32 %v901, 0.0
  %v918 = vmax.f32 %v902, 0.0
  %v919 = vmax.f32 %v903, 0.0
  %v920 = vmax.f32 %v904, 0.0
  %v921 = vmax.f32 %v905, 0.0
  %v922 = vmax.f32 %v906, 0.0
  %923 = vst.msk [vmem:[#allocation5] sm:$0xff] %vm99, 0.0
  %924 = vst.msk [vmem:[#allocation5 + $0x8] sm:$0x3] %vm604, 0.0
  %925 = vst.msk [vmem:[#allocation5 + $0xa0] sm:$0xff] %vm99, 0.0
  %926 = vst.msk [vmem:[#allocation5 + $0xa8] sm:$0x3] %vm604, 0.0
  %s927 = scalar_lea.vmem [#allocation5], 144
  %928 = vst.msk [vmem:[%s927] sm:$0xff] %vm99, 0.0
  %929 = vst.msk [vmem:[%s927 + $0x8] sm:$0x3] %vm604, 0.0
  %930 = vst.msk [vmem:[%s927 + $0xa0] sm:$0xff] %vm99, 0.0
  %931 = vst.msk [vmem:[%s927 + $0xa8] sm:$0x3] %vm604, 0.0
  %s932 = scalar_lea.vmem [#allocation5], 16
  %933 = vst.msk [vmem:[%s932] sm:$0x1] %vm614, 0.0
  %934 = vst.msk [vmem:[%s932 + $0x10] sm:$0x1] %vm614, 0.0
  %935 = vst.msk [vmem:[%s932 + $0x20] sm:$0x1] %vm614, 0.0
  %936 = vst.msk [vmem:[%s932 + $0x30] sm:$0x1] %vm614, 0.0
  %937 = vst.msk [vmem:[%s932 + $0x40] sm:$0x1] %vm614, 0.0
  %938 = vst.msk [vmem:[%s932 + $0x50] sm:$0x1] %vm614, 0.0
  %939 = vst.msk [vmem:[%s932 + $0x60] sm:$0x1] %vm614, 0.0
  %940 = vst.msk [vmem:[%s932 + $0x70] sm:$0x1] %vm614, 0.0
  %941 = vst.msk [vmem:[%s932 + $0xa0] sm:$0x1] %vm614, 0.0
  %942 = vst.msk [vmem:[%s932 + $0xb0] sm:$0x1] %vm614, 0.0
  %943 = vst.msk [vmem:[%s932 + $0xc0] sm:$0x1] %vm614, 0.0
  %944 = vst.msk [vmem:[%s932 + $0xd0] sm:$0x1] %vm614, 0.0
  %945 = vst.msk [vmem:[%s932 + $0xe0] sm:$0x1] %vm614, 0.0
  %946 = vst.msk [vmem:[%s932 + $0xf0] sm:$0x1] %vm614, 0.0
  %947 = vst.msk [vmem:[%s932 + $0x100] sm:$0x1] %vm614, 0.0
  %948 = vst.msk [vmem:[%s932 + $0x110] sm:$0x1] %vm614, 0.0
  %949 = vst.msk [vmem:[%s932 + $0x9] sm:$0x1] %vm614, 0.0
  %950 = vst.msk [vmem:[%s932 + $0x19] sm:$0x1] %vm614, 0.0
  %951 = vst.msk [vmem:[%s932 + $0x29] sm:$0x1] %vm614, 0.0
  %952 = vst.msk [vmem:[%s932 + $0x39] sm:$0x1] %vm614, 0.0
  %953 = vst.msk [vmem:[%s932 + $0x49] sm:$0x1] %vm614, 0.0
  %954 = vst.msk [vmem:[%s932 + $0x59] sm:$0x1] %vm614, 0.0
  %955 = vst.msk [vmem:[%s932 + $0x69] sm:$0x1] %vm614, 0.0
  %956 = vst.msk [vmem:[%s932 + $0x79] sm:$0x1] %vm614, 0.0
  %957 = vst.msk [vmem:[%s932 + $0xa9] sm:$0x1] %vm614, 0.0
  %958 = vst.msk [vmem:[%s932 + $0xb9] sm:$0x1] %vm614, 0.0
  %959 = vst.msk [vmem:[%s932 + $0xc9] sm:$0x1] %vm614, 0.0
  %960 = vst.msk [vmem:[%s932 + $0xd9] sm:$0x1] %vm614, 0.0
  %961 = vst.msk [vmem:[%s932 + $0xe9] sm:$0x1] %vm614, 0.0
  %962 = vst.msk [vmem:[%s932 + $0xf9] sm:$0x1] %vm614, 0.0
  %963 = vst.msk [vmem:[%s932 + $0x109] sm:$0x1] %vm614, 0.0
  %964 = vst.msk [vmem:[%s932 + $0x119] sm:$0x1] %vm614, 0.0
  %965 = vst.msk [vmem:[%s932 + $0x1] sm:$0xff] %vm99, %v907
  %966 = vst.msk [vmem:[%s932 + $0x11] sm:$0xff] %vm99, %v908
  %967 = vst.msk [vmem:[%s932 + $0x21] sm:$0xff] %vm99, %v909
  %968 = vst.msk [vmem:[%s932 + $0x31] sm:$0xff] %vm99, %v910
  %969 = vst.msk [vmem:[%s932 + $0x41] sm:$0xff] %vm99, %v911
  %970 = vst.msk [vmem:[%s932 + $0x51] sm:$0xff] %vm99, %v912
  %971 = vst.msk [vmem:[%s932 + $0x61] sm:$0xff] %vm99, %v913
  %972 = vst.msk [vmem:[%s932 + $0x71] sm:$0xff] %vm99, %v914
  %973 = vst.msk [vmem:[%s932 + $0xa1] sm:$0xff] %vm99, %v915
  %974 = vst.msk [vmem:[%s932 + $0xb1] sm:$0xff] %vm99, %v916
  %975 = vst.msk [vmem:[%s932 + $0xc1] sm:$0xff] %vm99, %v917
  %976 = vst.msk [vmem:[%s932 + $0xd1] sm:$0xff] %vm99, %v918
  %977 = vst.msk [vmem:[%s932 + $0xe1] sm:$0xff] %vm99, %v919
  %978 = vst.msk [vmem:[%s932 + $0xf1] sm:$0xff] %vm99, %v920
  %979 = vst.msk [vmem:[%s932 + $0x101] sm:$0xff] %vm99, %v921
  %980 = vst.msk [vmem:[%s932 + $0x111] sm:$0xff] %vm99, %v922
  %v981 = vld [vmem:[#allocation5] sm:$0xff]
  %v982 = vld [vmem:[#allocation5 + $0x10] sm:$0xff]
  %v983 = vld [vmem:[#allocation5 + $0x20] sm:$0xff]
  %v984 = vld [vmem:[#allocation5 + $0x30] sm:$0xff]
  %v985 = vld [vmem:[#allocation5 + $0x40] sm:$0xff]
  %v986 = vld [vmem:[#allocation5 + $0x50] sm:$0xff]
  %v987 = vld [vmem:[#allocation5 + $0x60] sm:$0xff]
  %v988 = vld [vmem:[#allocation5 + $0x70] sm:$0xff]
  %v989 = vld [vmem:[#allocation5 + $0xa0] sm:$0xff]
  %v990 = vld [vmem:[#allocation5 + $0xb0] sm:$0xff]
  %v991 = vld [vmem:[#allocation5 + $0xc0] sm:$0xff]
  %v992 = vld [vmem:[#allocation5 + $0xd0] sm:$0xff]
  %v993 = vld [vmem:[#allocation5 + $0xe0] sm:$0xff]
  %v994 = vld [vmem:[#allocation5 + $0xf0] sm:$0xff]
  %v995 = vld [vmem:[#allocation5 + $0x100] sm:$0xff]
  %v996 = vld [vmem:[#allocation5 + $0x110] sm:$0xff]
  %v997 = vld [vmem:[#allocation4 + $0x1] sm:$0xff]
  %v998 = vld [vmem:[#allocation4 + $0x11] sm:$0xff]
  %v999 = vld [vmem:[#allocation4 + $0x21] sm:$0xff]
  %v1000 = vld [vmem:[#allocation4 + $0x31] sm:$0xff]
  %v1001 = vld [vmem:[#allocation4 + $0x41] sm:$0xff]
  %v1002 = vld [vmem:[#allocation4 + $0x51] sm:$0xff]
  %v1003 = vld [vmem:[#allocation4 + $0x61] sm:$0xff]
  %v1004 = vld [vmem:[#allocation4 + $0x71] sm:$0xff]
  %v1005 = vld [vmem:[#allocation4 + $0xa1] sm:$0xff]
  %v1006 = vld [vmem:[#allocation4 + $0xb1] sm:$0xff]
  %v1007 = vld [vmem:[#allocation4 + $0xc1] sm:$0xff]
  %v1008 = vld [vmem:[#allocation4 + $0xd1] sm:$0xff]
  %v1009 = vld [vmem:[#allocation4 + $0xe1] sm:$0xff]
  %v1010 = vld [vmem:[#allocation4 + $0xf1] sm:$0xff]
  %v1011 = vld [vmem:[#allocation4 + $0x101] sm:$0xff]
  %v1012 = vld [vmem:[#allocation4 + $0x111] sm:$0xff]
  %v1013 = vld [vmem:[#allocation5 + $0x1] sm:$0xff]
  %v1014 = vld [vmem:[#allocation5 + $0x11] sm:$0xff]
  %v1015 = vld [vmem:[#allocation5 + $0x21] sm:$0xff]
  %v1016 = vld [vmem:[#allocation5 + $0x31] sm:$0xff]
  %v1017 = vld [vmem:[#allocation5 + $0x41] sm:$0xff]
  %v1018 = vld [vmem:[#allocation5 + $0x51] sm:$0xff]
  %v1019 = vld [vmem:[#allocation5 + $0x61] sm:$0xff]
  %v1020 = vld [vmem:[#allocation5 + $0x71] sm:$0xff]
  %v1021 = vld [vmem:[#allocation5 + $0xa1] sm:$0xff]
  %v1022 = vld [vmem:[#allocation5 + $0xb1] sm:$0xff]
  %v1023 = vld [vmem:[#allocation5 + $0xc1] sm:$0xff]
  %v1024 = vld [vmem:[#allocation5 + $0xd1] sm:$0xff]
  %v1025 = vld [vmem:[#allocation5 + $0xe1] sm:$0xff]
  %v1026 = vld [vmem:[#allocation5 + $0xf1] sm:$0xff]
  %v1027 = vld [vmem:[#allocation5 + $0x101] sm:$0xff]
  %v1028 = vld [vmem:[#allocation5 + $0x111] sm:$0xff]
  %v1029 = vld [vmem:[%s720] sm:$0xff]
  %v1030 = vld [vmem:[%s720 + $0x10] sm:$0xff]
  %v1031 = vld [vmem:[%s720 + $0x20] sm:$0xff]
  %v1032 = vld [vmem:[%s720 + $0x30] sm:$0xff]
  %v1033 = vld [vmem:[%s720 + $0x40] sm:$0xff]
  %v1034 = vld [vmem:[%s720 + $0x50] sm:$0xff]
  %v1035 = vld [vmem:[%s720 + $0x60] sm:$0xff]
  %v1036 = vld [vmem:[%s720 + $0x70] sm:$0xff]
  %v1037 = vld [vmem:[%s720 + $0xa0] sm:$0xff]
  %v1038 = vld [vmem:[%s720 + $0xb0] sm:$0xff]
  %v1039 = vld [vmem:[%s720 + $0xc0] sm:$0xff]
  %v1040 = vld [vmem:[%s720 + $0xd0] sm:$0xff]
  %v1041 = vld [vmem:[%s720 + $0xe0] sm:$0xff]
  %v1042 = vld [vmem:[%s720 + $0xf0] sm:$0xff]
  %v1043 = vld [vmem:[%s720 + $0x100] sm:$0xff]
  %v1044 = vld [vmem:[%s720 + $0x110] sm:$0xff]
  %v1045 = vld [vmem:[%s613 + $0x1] sm:$0xff]
  %v1046 = vld [vmem:[%s613 + $0x11] sm:$0xff]
  %v1047 = vld [vmem:[%s613 + $0x21] sm:$0xff]
  %v1048 = vld [vmem:[%s613 + $0x31] sm:$0xff]
  %v1049 = vld [vmem:[%s613 + $0x41] sm:$0xff]
  %v1050 = vld [vmem:[%s613 + $0x51] sm:$0xff]
  %v1051 = vld [vmem:[%s613 + $0x61] sm:$0xff]
  %v1052 = vld [vmem:[%s613 + $0x71] sm:$0xff]
  %v1053 = vld [vmem:[%s613 + $0xa1] sm:$0xff]
  %v1054 = vld [vmem:[%s613 + $0xb1] sm:$0xff]
  %v1055 = vld [vmem:[%s613 + $0xc1] sm:$0xff]
  %v1056 = vld [vmem:[%s613 + $0xd1] sm:$0xff]
  %v1057 = vld [vmem:[%s613 + $0xe1] sm:$0xff]
  %v1058 = vld [vmem:[%s613 + $0xf1] sm:$0xff]
  %v1059 = vld [vmem:[%s613 + $0x101] sm:$0xff]
  %v1060 = vld [vmem:[%s613 + $0x111] sm:$0xff]
  %v1061 = vld [vmem:[%s720 + $0x1] sm:$0xff]
  %v1062 = vld [vmem:[%s720 + $0x11] sm:$0xff]
  %v1063 = vld [vmem:[%s720 + $0x21] sm:$0xff]
  %v1064 = vld [vmem:[%s720 + $0x31] sm:$0xff]
  %v1065 = vld [vmem:[%s720 + $0x41] sm:$0xff]
  %v1066 = vld [vmem:[%s720 + $0x51] sm:$0xff]
  %v1067 = vld [vmem:[%s720 + $0x61] sm:$0xff]
  %v1068 = vld [vmem:[%s720 + $0x71] sm:$0xff]
  %v1069 = vld [vmem:[%s720 + $0xa1] sm:$0xff]
  %v1070 = vld [vmem:[%s720 + $0xb1] sm:$0xff]
  %v1071 = vld [vmem:[%s720 + $0xc1] sm:$0xff]
  %v1072 = vld [vmem:[%s720 + $0xd1] sm:$0xff]
  %v1073 = vld [vmem:[%s720 + $0xe1] sm:$0xff]
  %v1074 = vld [vmem:[%s720 + $0xf1] sm:$0xff]
  %v1075 = vld [vmem:[%s720 + $0x101] sm:$0xff]
  %v1076 = vld [vmem:[%s720 + $0x111] sm:$0xff]
  %v1077 = vld [vmem:[%s932] sm:$0xff]
  %v1078 = vld [vmem:[%s932 + $0x10] sm:$0xff]
  %v1079 = vld [vmem:[%s932 + $0x20] sm:$0xff]
  %v1080 = vld [vmem:[%s932 + $0x30] sm:$0xff]
  %v1081 = vld [vmem:[%s932 + $0x40] sm:$0xff]
  %v1082 = vld [vmem:[%s932 + $0x50] sm:$0xff]
  %v1083 = vld [vmem:[%s932 + $0x60] sm:$0xff]
  %v1084 = vld [vmem:[%s932 + $0x70] sm:$0xff]
  %v1085 = vld [vmem:[%s932 + $0xa0] sm:$0xff]
  %v1086 = vld [vmem:[%s932 + $0xb0] sm:$0xff]
  %v1087 = vld [vmem:[%s932 + $0xc0] sm:$0xff]
  %v1088 = vld [vmem:[%s932 + $0xd0] sm:$0xff]
  %v1089 = vld [vmem:[%s932 + $0xe0] sm:$0xff]
  %v1090 = vld [vmem:[%s932 + $0xf0] sm:$0xff]
  %v1091 = vld [vmem:[%s932 + $0x100] sm:$0xff]
  %v1092 = vld [vmem:[%s932 + $0x110] sm:$0xff]
  %v1093 = vld [vmem:[%s826 + $0x1] sm:$0xff]
  %v1094 = vld [vmem:[%s826 + $0x11] sm:$0xff]
  %v1095 = vld [vmem:[%s826 + $0x21] sm:$0xff]
  %v1096 = vld [vmem:[%s826 + $0x31] sm:$0xff]
  %v1097 = vld [vmem:[%s826 + $0x41] sm:$0xff]
  %v1098 = vld [vmem:[%s826 + $0x51] sm:$0xff]
  %v1099 = vld [vmem:[%s826 + $0x61] sm:$0xff]
  %v1100 = vld [vmem:[%s826 + $0x71] sm:$0xff]
  %v1101 = vld [vmem:[%s826 + $0xa1] sm:$0xff]
  %v1102 = vld [vmem:[%s826 + $0xb1] sm:$0xff]
  %v1103 = vld [vmem:[%s826 + $0xc1] sm:$0xff]
  %v1104 = vld [vmem:[%s826 + $0xd1] sm:$0xff]
  %v1105 = vld [vmem:[%s826 + $0xe1] sm:$0xff]
  %v1106 = vld [vmem:[%s826 + $0xf1] sm:$0xff]
  %v1107 = vld [vmem:[%s826 + $0x101] sm:$0xff]
  %v1108 = vld [vmem:[%s826 + $0x111] sm:$0xff]
  %v1109 = vld [vmem:[%s932 + $0x1] sm:$0xff]
  %v1110 = vld [vmem:[%s932 + $0x11] sm:$0xff]
  %v1111 = vld [vmem:[%s932 + $0x21] sm:$0xff]
  %v1112 = vld [vmem:[%s932 + $0x31] sm:$0xff]
  %v1113 = vld [vmem:[%s932 + $0x41] sm:$0xff]
  %v1114 = vld [vmem:[%s932 + $0x51] sm:$0xff]
  %v1115 = vld [vmem:[%s932 + $0x61] sm:$0xff]
  %v1116 = vld [vmem:[%s932 + $0x71] sm:$0xff]
  %v1117 = vld [vmem:[%s932 + $0xa1] sm:$0xff]
  %v1118 = vld [vmem:[%s932 + $0xb1] sm:$0xff]
  %v1119 = vld [vmem:[%s932 + $0xc1] sm:$0xff]
  %v1120 = vld [vmem:[%s932 + $0xd1] sm:$0xff]
  %v1121 = vld [vmem:[%s932 + $0xe1] sm:$0xff]
  %v1122 = vld [vmem:[%s932 + $0xf1] sm:$0xff]
  %v1123 = vld [vmem:[%s932 + $0x101] sm:$0xff]
  %v1124 = vld [vmem:[%s932 + $0x111] sm:$0xff]
  %1141 = vrot.lane.b32.xlu0 %v997, 4
  %v1142 = vpop.permute.xlu0 %1141
  %1143 = vrot.lane.b32.xlu0 %v998, 4
  %v1144 = vpop.permute.xlu0 %1143
  %1145 = vrot.lane.b32.xlu0 %v999, 4
  %v1146 = vpop.permute.xlu0 %1145
  %1147 = vrot.lane.b32.xlu0 %v1000, 4
  %v1148 = vpop.permute.xlu0 %1147
  %1149 = vrot.lane.b32.xlu0 %v1001, 4
  %v1150 = vpop.permute.xlu0 %1149
  %1151 = vrot.lane.b32.xlu0 %v1002, 4
  %v1152 = vpop.permute.xlu0 %1151
  %1153 = vrot.lane.b32.xlu0 %v1003, 4
  %v1154 = vpop.permute.xlu0 %1153
  %1155 = vrot.lane.b32.xlu0 %v1004, 4
  %v1156 = vpop.permute.xlu0 %1155
  %1157 = vrot.lane.b32.xlu0 %v1005, 4
  %v1158 = vpop.permute.xlu0 %1157
  %1159 = vrot.lane.b32.xlu0 %v1006, 4
  %v1160 = vpop.permute.xlu0 %1159
  %1161 = vrot.lane.b32.xlu0 %v1007, 4
  %v1162 = vpop.permute.xlu0 %1161
  %1163 = vrot.lane.b32.xlu0 %v1008, 4
  %v1164 = vpop.permute.xlu0 %1163
  %1165 = vrot.lane.b32.xlu0 %v1009, 4
  %v1166 = vpop.permute.xlu0 %1165
  %1167 = vrot.lane.b32.xlu0 %v1010, 4
  %v1168 = vpop.permute.xlu0 %1167
  %1169 = vrot.lane.b32.xlu0 %v1011, 4
  %v1170 = vpop.permute.xlu0 %1169
  %1171 = vrot.lane.b32.xlu0 %v1012, 4
  %v1172 = vpop.permute.xlu0 %1171
  %1205 = vrot.lane.b32.xlu0 %v1013, 8
  %v1206 = vpop.permute.xlu0 %1205
  %1207 = vrot.lane.b32.xlu0 %v1014, 8
  %v1208 = vpop.permute.xlu0 %1207
  %1209 = vrot.lane.b32.xlu0 %v1015, 8
  %v1210 = vpop.permute.xlu0 %1209
  %1211 = vrot.lane.b32.xlu0 %v1016, 8
  %v1212 = vpop.permute.xlu0 %1211
  %1213 = vrot.lane.b32.xlu0 %v1017, 8
  %v1214 = vpop.permute.xlu0 %1213
  %1215 = vrot.lane.b32.xlu0 %v1018, 8
  %v1216 = vpop.permute.xlu0 %1215
  %1217 = vrot.lane.b32.xlu0 %v1019, 8
  %v1218 = vpop.permute.xlu0 %1217
  %1219 = vrot.lane.b32.xlu0 %v1020, 8
  %v1220 = vpop.permute.xlu0 %1219
  %1221 = vrot.lane.b32.xlu0 %v1021, 8
  %v1222 = vpop.permute.xlu0 %1221
  %1223 = vrot.lane.b32.xlu0 %v1022, 8
  %v1224 = vpop.permute.xlu0 %1223
  %1225 = vrot.lane.b32.xlu0 %v1023, 8
  %v1226 = vpop.permute.xlu0 %1225
  %1227 = vrot.lane.b32.xlu0 %v1024, 8
  %v1228 = vpop.permute.xlu0 %1227
  %1229 = vrot.lane.b32.xlu0 %v1025, 8
  %v1230 = vpop.permute.xlu0 %1229
  %1231 = vrot.lane.b32.xlu0 %v1026, 8
  %v1232 = vpop.permute.xlu0 %1231
  %1233 = vrot.lane.b32.xlu0 %v1027, 8
  %v1234 = vpop.permute.xlu0 %1233
  %1235 = vrot.lane.b32.xlu0 %v1028, 8
  %v1236 = vpop.permute.xlu0 %1235
  %1269 = vrot.lane.b32.xlu0 %v1029, 12
  %v1270 = vpop.permute.xlu0 %1269
  %1271 = vrot.lane.b32.xlu0 %v1030, 12
  %v1272 = vpop.permute.xlu0 %1271
  %1273 = vrot.lane.b32.xlu0 %v1031, 12
  %v1274 = vpop.permute.xlu0 %1273
  %1275 = vrot.lane.b32.xlu0 %v1032, 12
  %v1276 = vpop.permute.xlu0 %1275
  %1277 = vrot.lane.b32.xlu0 %v1033, 12
  %v1278 = vpop.permute.xlu0 %1277
  %1279 = vrot.lane.b32.xlu0 %v1034, 12
  %v1280 = vpop.permute.xlu0 %1279
  %1281 = vrot.lane.b32.xlu0 %v1035, 12
  %v1282 = vpop.permute.xlu0 %1281
  %1283 = vrot.lane.b32.xlu0 %v1036, 12
  %v1284 = vpop.permute.xlu0 %1283
  %1285 = vrot.lane.b32.xlu0 %v1037, 12
  %v1286 = vpop.permute.xlu0 %1285
  %1287 = vrot.lane.b32.xlu0 %v1038, 12
  %v1288 = vpop.permute.xlu0 %1287
  %1289 = vrot.lane.b32.xlu0 %v1039, 12
  %v1290 = vpop.permute.xlu0 %1289
  %1291 = vrot.lane.b32.xlu0 %v1040, 12
  %v1292 = vpop.permute.xlu0 %1291
  %1293 = vrot.lane.b32.xlu0 %v1041, 12
  %v1294 = vpop.permute.xlu0 %1293
  %1295 = vrot.lane.b32.xlu0 %v1042, 12
  %v1296 = vpop.permute.xlu0 %1295
  %1297 = vrot.lane.b32.xlu0 %v1043, 12
  %v1298 = vpop.permute.xlu0 %1297
  %1299 = vrot.lane.b32.xlu0 %v1044, 12
  %v1300 = vpop.permute.xlu0 %1299
  %1333 = vrot.lane.b32.xlu0 %v1045, 16
  %v1334 = vpop.permute.xlu0 %1333
  %1335 = vrot.lane.b32.xlu0 %v1046, 16
  %v1336 = vpop.permute.xlu0 %1335
  %1337 = vrot.lane.b32.xlu0 %v1047, 16
  %v1338 = vpop.permute.xlu0 %1337
  %1339 = vrot.lane.b32.xlu0 %v1048, 16
  %v1340 = vpop.permute.xlu0 %1339
  %1341 = vrot.lane.b32.xlu0 %v1049, 16
  %v1342 = vpop.permute.xlu0 %1341
  %1343 = vrot.lane.b32.xlu0 %v1050, 16
  %v1344 = vpop.permute.xlu0 %1343
  %1345 = vrot.lane.b32.xlu0 %v1051, 16
  %v1346 = vpop.permute.xlu0 %1345
  %1347 = vrot.lane.b32.xlu0 %v1052, 16
  %v1348 = vpop.permute.xlu0 %1347
  %1349 = vrot.lane.b32.xlu0 %v1053, 16
  %v1350 = vpop.permute.xlu0 %1349
  %1351 = vrot.lane.b32.xlu0 %v1054, 16
  %v1352 = vpop.permute.xlu0 %1351
  %1353 = vrot.lane.b32.xlu0 %v1055, 16
  %v1354 = vpop.permute.xlu0 %1353
  %1355 = vrot.lane.b32.xlu0 %v1056, 16
  %v1356 = vpop.permute.xlu0 %1355
  %1357 = vrot.lane.b32.xlu0 %v1057, 16
  %v1358 = vpop.permute.xlu0 %1357
  %1359 = vrot.lane.b32.xlu0 %v1058, 16
  %v1360 = vpop.permute.xlu0 %1359
  %1361 = vrot.lane.b32.xlu0 %v1059, 16
  %v1362 = vpop.permute.xlu0 %1361
  %1363 = vrot.lane.b32.xlu0 %v1060, 16
  %v1364 = vpop.permute.xlu0 %1363
  %1397 = vrot.lane.b32.xlu0 %v1061, 20
  %v1398 = vpop.permute.xlu0 %1397
  %1399 = vrot.lane.b32.xlu0 %v1062, 20
  %v1400 = vpop.permute.xlu0 %1399
  %1401 = vrot.lane.b32.xlu0 %v1063, 20
  %v1402 = vpop.permute.xlu0 %1401
  %1403 = vrot.lane.b32.xlu0 %v1064, 20
  %v1404 = vpop.permute.xlu0 %1403
  %1405 = vrot.lane.b32.xlu0 %v1065, 20
  %v1406 = vpop.permute.xlu0 %1405
  %1407 = vrot.lane.b32.xlu0 %v1066, 20
  %v1408 = vpop.permute.xlu0 %1407
  %1409 = vrot.lane.b32.xlu0 %v1067, 20
  %v1410 = vpop.permute.xlu0 %1409
  %1411 = vrot.lane.b32.xlu0 %v1068, 20
  %v1412 = vpop.permute.xlu0 %1411
  %1413 = vrot.lane.b32.xlu0 %v1069, 20
  %v1414 = vpop.permute.xlu0 %1413
  %1415 = vrot.lane.b32.xlu0 %v1070, 20
  %v1416 = vpop.permute.xlu0 %1415
  %1417 = vrot.lane.b32.xlu0 %v1071, 20
  %v1418 = vpop.permute.xlu0 %1417
  %1419 = vrot.lane.b32.xlu0 %v1072, 20
  %v1420 = vpop.permute.xlu0 %1419
  %1421 = vrot.lane.b32.xlu0 %v1073, 20
  %v1422 = vpop.permute.xlu0 %1421
  %1423 = vrot.lane.b32.xlu0 %v1074, 20
  %v1424 = vpop.permute.xlu0 %1423
  %1425 = vrot.lane.b32.xlu0 %v1075, 20
  %v1426 = vpop.permute.xlu0 %1425
  %1427 = vrot.lane.b32.xlu0 %v1076, 20
  %v1428 = vpop.permute.xlu0 %1427
  %1461 = vrot.lane.b32.xlu0 %v1077, 24
  %v1462 = vpop.permute.xlu0 %1461
  %1463 = vrot.lane.b32.xlu0 %v1078, 24
  %v1464 = vpop.permute.xlu0 %1463
  %1465 = vrot.lane.b32.xlu0 %v1079, 24
  %v1466 = vpop.permute.xlu0 %1465
  %1467 = vrot.lane.b32.xlu0 %v1080, 24
  %v1468 = vpop.permute.xlu0 %1467
  %1469 = vrot.lane.b32.xlu0 %v1081, 24
  %v1470 = vpop.permute.xlu0 %1469
  %1471 = vrot.lane.b32.xlu0 %v1082, 24
  %v1472 = vpop.permute.xlu0 %1471
  %1473 = vrot.lane.b32.xlu0 %v1083, 24
  %v1474 = vpop.permute.xlu0 %1473
  %1475 = vrot.lane.b32.xlu0 %v1084, 24
  %v1476 = vpop.permute.xlu0 %1475
  %1477 = vrot.lane.b32.xlu0 %v1085, 24
  %v1478 = vpop.permute.xlu0 %1477
  %1479 = vrot.lane.b32.xlu0 %v1086, 24
  %v1480 = vpop.permute.xlu0 %1479
  %1481 = vrot.lane.b32.xlu0 %v1087, 24
  %v1482 = vpop.permute.xlu0 %1481
  %1483 = vrot.lane.b32.xlu0 %v1088, 24
  %v1484 = vpop.permute.xlu0 %1483
  %1485 = vrot.lane.b32.xlu0 %v1089, 24
  %v1486 = vpop.permute.xlu0 %1485
  %1487 = vrot.lane.b32.xlu0 %v1090, 24
  %v1488 = vpop.permute.xlu0 %1487
  %1489 = vrot.lane.b32.xlu0 %v1091, 24
  %v1490 = vpop.permute.xlu0 %1489
  %1491 = vrot.lane.b32.xlu0 %v1092, 24
  %v1492 = vpop.permute.xlu0 %1491
  %1525 = vrot.lane.b32.xlu0 %v1093, 28
  %v1526 = vpop.permute.xlu0 %1525
  %1527 = vrot.lane.b32.xlu0 %v1094, 28
  %v1528 = vpop.permute.xlu0 %1527
  %1529 = vrot.lane.b32.xlu0 %v1095, 28
  %v1530 = vpop.permute.xlu0 %1529
  %1531 = vrot.lane.b32.xlu0 %v1096, 28
  %v1532 = vpop.permute.xlu0 %1531
  %1533 = vrot.lane.b32.xlu0 %v1097, 28
  %v1534 = vpop.permute.xlu0 %1533
  %1535 = vrot.lane.b32.xlu0 %v1098, 28
  %v1536 = vpop.permute.xlu0 %1535
  %1537 = vrot.lane.b32.xlu0 %v1099, 28
  %v1538 = vpop.permute.xlu0 %1537
  %1539 = vrot.lane.b32.xlu0 %v1100, 28
  %v1540 = vpop.permute.xlu0 %1539
  %1541 = vrot.lane.b32.xlu0 %v1101, 28
  %v1542 = vpop.permute.xlu0 %1541
  %1543 = vrot.lane.b32.xlu0 %v1102, 28
  %v1544 = vpop.permute.xlu0 %1543
  %1545 = vrot.lane.b32.xlu0 %v1103, 28
  %v1546 = vpop.permute.xlu0 %1545
  %1547 = vrot.lane.b32.xlu0 %v1104, 28
  %v1548 = vpop.permute.xlu0 %1547
  %1549 = vrot.lane.b32.xlu0 %v1105, 28
  %v1550 = vpop.permute.xlu0 %1549
  %1551 = vrot.lane.b32.xlu0 %v1106, 28
  %v1552 = vpop.permute.xlu0 %1551
  %1553 = vrot.lane.b32.xlu0 %v1107, 28
  %v1554 = vpop.permute.xlu0 %1553
  %1555 = vrot.lane.b32.xlu0 %v1108, 28
  %v1556 = vpop.permute.xlu0 %1555
  %1589 = vrot.lane.b32.xlu0 %v1109, 32
  %v1590 = vpop.permute.xlu0 %1589
  %1591 = vrot.lane.b32.xlu0 %v1110, 32
  %v1592 = vpop.permute.xlu0 %1591
  %1593 = vrot.lane.b32.xlu0 %v1111, 32
  %v1594 = vpop.permute.xlu0 %1593
  %1595 = vrot.lane.b32.xlu0 %v1112, 32
  %v1596 = vpop.permute.xlu0 %1595
  %1597 = vrot.lane.b32.xlu0 %v1113, 32
  %v1598 = vpop.permute.xlu0 %1597
  %1599 = vrot.lane.b32.xlu0 %v1114, 32
  %v1600 = vpop.permute.xlu0 %1599
  %1601 = vrot.lane.b32.xlu0 %v1115, 32
  %v1602 = vpop.permute.xlu0 %1601
  %1603 = vrot.lane.b32.xlu0 %v1116, 32
  %v1604 = vpop.permute.xlu0 %1603
  %1605 = vrot.lane.b32.xlu0 %v1117, 32
  %v1606 = vpop.permute.xlu0 %1605
  %1607 = vrot.lane.b32.xlu0 %v1118, 32
  %v1608 = vpop.permute.xlu0 %1607
  %1609 = vrot.lane.b32.xlu0 %v1119, 32
  %v1610 = vpop.permute.xlu0 %1609
  %1611 = vrot.lane.b32.xlu0 %v1120, 32
  %v1612 = vpop.permute.xlu0 %1611
  %1613 = vrot.lane.b32.xlu0 %v1121, 32
  %v1614 = vpop.permute.xlu0 %1613
  %1615 = vrot.lane.b32.xlu0 %v1122, 32
  %v1616 = vpop.permute.xlu0 %1615
  %1617 = vrot.lane.b32.xlu0 %v1123, 32
  %v1618 = vpop.permute.xlu0 %1617
  %1619 = vrot.lane.b32.xlu0 %v1124, 32
  %v1620 = vpop.permute.xlu0 %1619
  %v1637 = vsel %vm99, %v981, %v1142
  %v1638 = vsel %vm99, %v982, %v1144
  %v1639 = vsel %vm99, %v983, %v1146
  %v1640 = vsel %vm99, %v984, %v1148
  %v1641 = vsel %vm99, %v985, %v1150
  %v1642 = vsel %vm99, %v986, %v1152
  %v1643 = vsel %vm99, %v987, %v1154
  %v1644 = vsel %vm99, %v988, %v1156
  %v1645 = vsel %vm99, %v989, %v1158
  %v1646 = vsel %vm99, %v990, %v1160
  %v1647 = vsel %vm99, %v991, %v1162
  %v1648 = vsel %vm99, %v992, %v1164
  %v1649 = vsel %vm99, %v993, %v1166
  %v1650 = vsel %vm99, %v994, %v1168
  %v1651 = vsel %vm99, %v995, %v1170
  %v1652 = vsel %vm99, %v996, %v1172
  %vm1653 = vcmask 64512
  %v1654 = vsel %vm1653, %v1637, %v1206
  %v1655 = vsel %vm1653, %v1638, %v1208
  %v1656 = vsel %vm1653, %v1639, %v1210
  %v1657 = vsel %vm1653, %v1640, %v1212
  %v1658 = vsel %vm1653, %v1641, %v1214
  %v1659 = vsel %vm1653, %v1642, %v1216
  %v1660 = vsel %vm1653, %v1643, %v1218
  %v1661 = vsel %vm1653, %v1644, %v1220
  %v1662 = vsel %vm1653, %v1645, %v1222
  %v1663 = vsel %vm1653, %v1646, %v1224
  %v1664 = vsel %vm1653, %v1647, %v1226
  %v1665 = vsel %vm1653, %v1648, %v1228
  %v1666 = vsel %vm1653, %v1649, %v1230
  %v1667 = vsel %vm1653, %v1650, %v1232
  %v1668 = vsel %vm1653, %v1651, %v1234
  %v1669 = vsel %vm1653, %v1652, %v1236
  %vm1670 = vcmask 97280
  %v1671 = vsel %vm1670, %v1654, %v1270
  %v1672 = vsel %vm1670, %v1655, %v1272
  %v1673 = vsel %vm1670, %v1656, %v1274
  %v1674 = vsel %vm1670, %v1657, %v1276
  %v1675 = vsel %vm1670, %v1658, %v1278
  %v1676 = vsel %vm1670, %v1659, %v1280
  %v1677 = vsel %vm1670, %v1660, %v1282
  %v1678 = vsel %vm1670, %v1661, %v1284
  %v1679 = vsel %vm1670, %v1662, %v1286
  %v1680 = vsel %vm1670, %v1663, %v1288
  %v1681 = vsel %vm1670, %v1664, %v1290
  %v1682 = vsel %vm1670, %v1665, %v1292
  %v1683 = vsel %vm1670, %v1666, %v1294
  %v1684 = vsel %vm1670, %v1667, %v1296
  %v1685 = vsel %vm1670, %v1668, %v1298
  %v1686 = vsel %vm1670, %v1669, %v1300
  %vm1687 = vcmask 130048
  %v1688 = vsel %vm1687, %v1671, %v1334
  %v1689 = vsel %vm1687, %v1672, %v1336
  %v1690 = vsel %vm1687, %v1673, %v1338
  %v1691 = vsel %vm1687, %v1674, %v1340
  %v1692 = vsel %vm1687, %v1675, %v1342
  %v1693 = vsel %vm1687, %v1676, %v1344
  %v1694 = vsel %vm1687, %v1677, %v1346
  %v1695 = vsel %vm1687, %v1678, %v1348
  %v1696 = vsel %vm1687, %v1679, %v1350
  %v1697 = vsel %vm1687, %v1680, %v1352
  %v1698 = vsel %vm1687, %v1681, %v1354
  %v1699 = vsel %vm1687, %v1682, %v1356
  %v1700 = vsel %vm1687, %v1683, %v1358
  %v1701 = vsel %vm1687, %v1684, %v1360
  %v1702 = vsel %vm1687, %v1685, %v1362
  %v1703 = vsel %vm1687, %v1686, %v1364
  %vm1704 = vcmask 162816
  %v1705 = vsel %vm1704, %v1688, %v1398
  %v1706 = vsel %vm1704, %v1689, %v1400
  %v1707 = vsel %vm1704, %v1690, %v1402
  %v1708 = vsel %vm1704, %v1691, %v1404
  %v1709 = vsel %vm1704, %v1692, %v1406
  %v1710 = vsel %vm1704, %v1693, %v1408
  %v1711 = vsel %vm1704, %v1694, %v1410
  %v1712 = vsel %vm1704, %v1695, %v1412
  %v1713 = vsel %vm1704, %v1696, %v1414
  %v1714 = vsel %vm1704, %v1697, %v1416
  %v1715 = vsel %vm1704, %v1698, %v1418
  %v1716 = vsel %vm1704, %v1699, %v1420
  %v1717 = vsel %vm1704, %v1700, %v1422
  %v1718 = vsel %vm1704, %v1701, %v1424
  %v1719 = vsel %vm1704, %v1702, %v1426
  %v1720 = vsel %vm1704, %v1703, %v1428
  %vm1721 = vcmask 195584
  %v1722 = vsel %vm1721, %v1705, %v1462
  %v1723 = vsel %vm1721, %v1706, %v1464
  %v1724 = vsel %vm1721, %v1707, %v1466
  %v1725 = vsel %vm1721, %v1708, %v1468
  %v1726 = vsel %vm1721, %v1709, %v1470
  %v1727 = vsel %vm1721, %v1710, %v1472
  %v1728 = vsel %vm1721, %v1711, %v1474
  %v1729 = vsel %vm1721, %v1712, %v1476
  %v1730 = vsel %vm1721, %v1713, %v1478
  %v1731 = vsel %vm1721, %v1714, %v1480
  %v1732 = vsel %vm1721, %v1715, %v1482
  %v1733 = vsel %vm1721, %v1716, %v1484
  %v1734 = vsel %vm1721, %v1717, %v1486
  %v1735 = vsel %vm1721, %v1718, %v1488
  %v1736 = vsel %vm1721, %v1719, %v1490
  %v1737 = vsel %vm1721, %v1720, %v1492
  %vm1738 = vcmask 228352
  %v1739 = vsel %vm1738, %v1722, %v1526
  %v1740 = vsel %vm1738, %v1723, %v1528
  %v1741 = vsel %vm1738, %v1724, %v1530
  %v1742 = vsel %vm1738, %v1725, %v1532
  %v1743 = vsel %vm1738, %v1726, %v1534
  %v1744 = vsel %vm1738, %v1727, %v1536
  %v1745 = vsel %vm1738, %v1728, %v1538
  %v1746 = vsel %vm1738, %v1729, %v1540
  %v1747 = vsel %vm1738, %v1730, %v1542
  %v1748 = vsel %vm1738, %v1731, %v1544
  %v1749 = vsel %vm1738, %v1732, %v1546
  %v1750 = vsel %vm1738, %v1733, %v1548
  %v1751 = vsel %vm1738, %v1734, %v1550
  %v1752 = vsel %vm1738, %v1735, %v1552
  %v1753 = vsel %vm1738, %v1736, %v1554
  %v1754 = vsel %vm1738, %v1737, %v1556
  %vm1755 = vcmask 261120
  %v1756 = vsel %vm1755, %v1739, %v1590
  %v1757 = vsel %vm1755, %v1740, %v1592
  %v1758 = vsel %vm1755, %v1741, %v1594
  %v1759 = vsel %vm1755, %v1742, %v1596
  %v1760 = vsel %vm1755, %v1743, %v1598
  %v1761 = vsel %vm1755, %v1744, %v1600
  %v1762 = vsel %vm1755, %v1745, %v1602
  %v1763 = vsel %vm1755, %v1746, %v1604
  %v1764 = vsel %vm1755, %v1747, %v1606
  %v1765 = vsel %vm1755, %v1748, %v1608
  %v1766 = vsel %vm1755, %v1749, %v1610
  %v1767 = vsel %vm1755, %v1750, %v1612
  %v1768 = vsel %vm1755, %v1751, %v1614
  %v1769 = vsel %vm1755, %v1752, %v1616
  %v1770 = vsel %vm1755, %v1753, %v1618
  %v1771 = vsel %vm1755, %v1754, %v1620
  %vm1772 = vcmask 293888
  %v1773 = vsel %vm1772, %v1756, 0.0
  %v1774 = vsel %vm1772, %v1757, 0.0
  %v1775 = vsel %vm1772, %v1758, 0.0
  %v1776 = vsel %vm1772, %v1759, 0.0
  %v1777 = vsel %vm1772, %v1760, 0.0
  %v1778 = vsel %vm1772, %v1761, 0.0
  %v1779 = vsel %vm1772, %v1762, 0.0
  %v1780 = vsel %vm1772, %v1763, 0.0
  %v1781 = vsel %vm1772, %v1764, 0.0
  %v1782 = vsel %vm1772, %v1765, 0.0
  %v1783 = vsel %vm1772, %v1766, 0.0
  %v1784 = vsel %vm1772, %v1767, 0.0
  %v1785 = vsel %vm1772, %v1768, 0.0
  %v1786 = vsel %vm1772, %v1769, 0.0
  %v1787 = vsel %vm1772, %v1770, 0.0
  %v1788 = vsel %vm1772, %v1771, 0.0
  %v1789 = vpack.c.bf16 %v1774, %v1773
  %v1790 = vpack.c.bf16 %v1776, %v1775
  %v1791 = vpack.c.bf16 %v1778, %v1777
  %v1792 = vpack.c.bf16 %v1780, %v1779
  %v1793 = vpack.c.bf16 %v1782, %v1781
  %v1794 = vpack.c.bf16 %v1784, %v1783
  %v1795 = vpack.c.bf16 %v1786, %v1785
  %v1796 = vpack.c.bf16 %v1788, %v1787
  %v1797 = vld [vmem:[%s6] sm:$0xff]
  %v1798 = vld [vmem:[%s6 + $0x8] sm:$0xff]
  %v1799 = vld [vmem:[%s6 + $0x10] sm:$0xff]
  %v1800 = vld [vmem:[%s6 + $0x18] sm:$0xff]
  %v1801 = vld [vmem:[%s6 + $0x20] sm:$0xff]
  %v1802 = vld [vmem:[%s6 + $0x28] sm:$0xff]
  %v1803 = vld [vmem:[%s6 + $0x30] sm:$0xff]
  %v1804 = vld [vmem:[%s6 + $0x38] sm:$0xff]
  %v1805 = vld [vmem:[%s6 + $0x40] sm:$0xff]
  %v1806 = vld [vmem:[%s6 + $0x48] sm:$0xff]
  %v1807 = vld [vmem:[%s6 + $0x50] sm:$0xff]
  %v1808 = vld [vmem:[%s6 + $0x58] sm:$0xff]
  %v1809 = vld [vmem:[%s6 + $0x60] sm:$0xff]
  %v1810 = vld [vmem:[%s6 + $0x68] sm:$0xff]
  %v1811 = vld [vmem:[%s6 + $0x70] sm:$0xff]
  %v1812 = vld [vmem:[%s6 + $0x78] sm:$0xff]
  %v1829 = vunpack.c.l.b16 %v1797
  %v1830 = vunpack.c.h.b16 %v1797
  %v1831 = vunpack.c.l.b16 %v1798
  %v1832 = vunpack.c.h.b16 %v1798
  %v1833 = vunpack.c.l.b16 %v1799
  %v1834 = vunpack.c.h.b16 %v1799
  %v1835 = vunpack.c.l.b16 %v1800
  %v1836 = vunpack.c.h.b16 %v1800
  %v1837 = vunpack.c.l.b16 %v1801
  %v1838 = vunpack.c.h.b16 %v1801
  %v1839 = vunpack.c.l.b16 %v1802
  %v1840 = vunpack.c.h.b16 %v1802
  %v1841 = vunpack.c.l.b16 %v1803
  %v1842 = vunpack.c.h.b16 %v1803
  %v1843 = vunpack.c.l.b16 %v1804
  %v1844 = vunpack.c.h.b16 %v1804
  %v1845 = vunpack.c.l.b16 %v1805
  %v1846 = vunpack.c.h.b16 %v1805
  %v1847 = vunpack.c.l.b16 %v1806
  %v1848 = vunpack.c.h.b16 %v1806
  %v1849 = vunpack.c.l.b16 %v1807
  %v1850 = vunpack.c.h.b16 %v1807
  %v1851 = vunpack.c.l.b16 %v1808
  %v1852 = vunpack.c.h.b16 %v1808
  %v1853 = vunpack.c.l.b16 %v1809
  %v1854 = vunpack.c.h.b16 %v1809
  %v1855 = vunpack.c.l.b16 %v1810
  %v1856 = vunpack.c.h.b16 %v1810
  %v1857 = vunpack.c.l.b16 %v1811
  %v1858 = vunpack.c.h.b16 %v1811
  %v1859 = vunpack.c.l.b16 %v1812
  %v1860 = vunpack.c.h.b16 %v1812
  %v1861 = vpack.c.b16 %v1831, %v1829
  %v1862 = vpack.c.b16 %v1832, %v1830
  %v1863 = vpack.c.b16 %v1835, %v1833
  %v1864 = vpack.c.b16 %v1836, %v1834
  %v1865 = vpack.c.b16 %v1839, %v1837
  %v1866 = vpack.c.b16 %v1840, %v1838
  %v1867 = vpack.c.b16 %v1843, %v1841
  %v1868 = vpack.c.b16 %v1844, %v1842
  %v1869 = vpack.c.b16 %v1847, %v1845
  %v1870 = vpack.c.b16 %v1848, %v1846
  %v1871 = vpack.c.b16 %v1851, %v1849
  %v1872 = vpack.c.b16 %v1852, %v1850
  %v1873 = vpack.c.b16 %v1855, %v1853
  %v1874 = vpack.c.b16 %v1856, %v1854
  %v1875 = vpack.c.b16 %v1859, %v1857
  %v1876 = vpack.c.b16 %v1860, %v1858
  %1893 = vmatpush.bf16.msra.mxu0 %v1875
  %1894 = vmatpush.bf16.msra.mxu0 %v1873
  %1895 = vmatpush.bf16.msra.mxu0 %v1871
  %1896 = vmatpush.bf16.msra.mxu0 %v1869
  %1897 = vmatpush.bf16.msra.mxu0 %v1867
  %1898 = vmatpush.bf16.msra.mxu0 %v1865
  %1899 = vmatpush.bf16.msra.mxu0 %v1863
  %1900 = vmatpush.bf16.msra.mxu0 %v1861
  %1901 = vmatmul.bf16.gmra.mxu0 %v1789
  %v1902 = vpop.f32.mrf.mxu0
  %v1903 = vadd.f32 0.0, %v1902
  %v1904 = vpop.f32.mrf.mxu0
  %v1905 = vadd.f32 0.0, %v1904
  %1906 = vmatmul.bf16.gmra.mxu0 %v1790
  %v1907 = vpop.f32.mrf.mxu0
  %v1908 = vadd.f32 0.0, %v1907
  %v1909 = vpop.f32.mrf.mxu0
  %v1910 = vadd.f32 0.0, %v1909
  %1911 = vmatmul.bf16.gmra.mxu0 %v1791
  %v1912 = vpop.f32.mrf.mxu0
  %v1913 = vadd.f32 0.0, %v1912
  %v1914 = vpop.f32.mrf.mxu0
  %v1915 = vadd.f32 0.0, %v1914
  %1916 = vmatmul.bf16.gmra.mxu0 %v1792
  %v1917 = vpop.f32.mrf.mxu0
  %v1918 = vadd.f32 0.0, %v1917
  %v1919 = vpop.f32.mrf.mxu0
  %v1920 = vadd.f32 0.0, %v1919
  %1921 = vmatmul.bf16.gmra.mxu0 %v1793
  %v1922 = vpop.f32.mrf.mxu0
  %v1923 = vadd.f32 0.0, %v1922
  %v1924 = vpop.f32.mrf.mxu0
  %v1925 = vadd.f32 0.0, %v1924
  %1926 = vmatmul.bf16.gmra.mxu0 %v1794
  %v1927 = vpop.f32.mrf.mxu0
  %v1928 = vadd.f32 0.0, %v1927
  %v1929 = vpop.f32.mrf.mxu0
  %v1930 = vadd.f32 0.0, %v1929
  %1931 = vmatmul.bf16.gmra.mxu0 %v1795
  %v1932 = vpop.f32.mrf.mxu0
  %v1933 = vadd.f32 0.0, %v1932
  %v1934 = vpop.f32.mrf.mxu0
  %v1935 = vadd.f32 0.0, %v1934
  %1936 = vmatmul.bf16.gmra.mxu0 %v1796
  %v1937 = vpop.f32.mrf.mxu0
  %v1938 = vadd.f32 0.0, %v1937
  %v1939 = vpop.f32.mrf.mxu0
  %v1940 = vadd.f32 0.0, %v1939
  %1941 = vdwg.mxu0
  %1942 = vmatpush.bf16.msra.mxu0 %v1876
  %1943 = vmatpush.bf16.msra.mxu0 %v1874
  %1944 = vmatpush.bf16.msra.mxu0 %v1872
  %1945 = vmatpush.bf16.msra.mxu0 %v1870
  %1946 = vmatpush.bf16.msra.mxu0 %v1868
  %1947 = vmatpush.bf16.msra.mxu0 %v1866
  %1948 = vmatpush.bf16.msra.mxu0 %v1864
  %1949 = vmatpush.bf16.msra.mxu0 %v1862
  %1950 = vmatmul.bf16.gmra.mxu0 %v1789
  %v1951 = vpop.f32.mrf.mxu0
  %v1952 = vadd.f32 0.0, %v1951
  %v1953 = vpop.f32.mrf.mxu0
  %v1954 = vadd.f32 0.0, %v1953
  %1955 = vmatmul.bf16.gmra.mxu0 %v1790
  %v1956 = vpop.f32.mrf.mxu0
  %v1957 = vadd.f32 0.0, %v1956
  %v1958 = vpop.f32.mrf.mxu0
  %v1959 = vadd.f32 0.0, %v1958
  %1960 = vmatmul.bf16.gmra.mxu0 %v1791
  %v1961 = vpop.f32.mrf.mxu0
  %v1962 = vadd.f32 0.0, %v1961
  %v1963 = vpop.f32.mrf.mxu0
  %v1964 = vadd.f32 0.0, %v1963
  %1965 = vmatmul.bf16.gmra.mxu0 %v1792
  %v1966 = vpop.f32.mrf.mxu0
  %v1967 = vadd.f32 0.0, %v1966
  %v1968 = vpop.f32.mrf.mxu0
  %v1969 = vadd.f32 0.0, %v1968
  %1970 = vmatmul.bf16.gmra.mxu0 %v1793
  %v1971 = vpop.f32.mrf.mxu0
  %v1972 = vadd.f32 0.0, %v1971
  %v1973 = vpop.f32.mrf.mxu0
  %v1974 = vadd.f32 0.0, %v1973
  %1975 = vmatmul.bf16.gmra.mxu0 %v1794
  %v1976 = vpop.f32.mrf.mxu0
  %v1977 = vadd.f32 0.0, %v1976
  %v1978 = vpop.f32.mrf.mxu0
  %v1979 = vadd.f32 0.0, %v1978
  %1980 = vmatmul.bf16.gmra.mxu0 %v1795
  %v1981 = vpop.f32.mrf.mxu0
  %v1982 = vadd.f32 0.0, %v1981
  %v1983 = vpop.f32.mrf.mxu0
  %v1984 = vadd.f32 0.0, %v1983
  %1985 = vmatmul.bf16.gmra.mxu0 %v1796
  %v1986 = vpop.f32.mrf.mxu0
  %v1987 = vadd.f32 0.0, %v1986
  %v1988 = vpop.f32.mrf.mxu0
  %v1989 = vadd.f32 0.0, %v1988
  %1990 = vdwg.mxu0
  %1991 = vst.msk [vmem:[%s10] sm:$0xff] %vm1653, %v1952
  %1992 = vst.msk [vmem:[%s10 + $0x8] sm:$0xff] %vm1653, %v1954
  %1993 = vst.msk [vmem:[%s10 + $0x10] sm:$0xff] %vm1653, %v1957
  %1994 = vst.msk [vmem:[%s10 + $0x18] sm:$0xff] %vm1653, %v1959
  %1995 = vst.msk [vmem:[%s10 + $0x20] sm:$0xff] %vm1653, %v1962
  %1996 = vst.msk [vmem:[%s10 + $0x28] sm:$0xff] %vm1653, %v1964
  %1997 = vst.msk [vmem:[%s10 + $0x30] sm:$0xff] %vm1653, %v1967
  %1998 = vst.msk [vmem:[%s10 + $0x38] sm:$0xff] %vm1653, %v1969
  %1999 = vst.msk [vmem:[%s10 + $0x40] sm:$0xff] %vm1653, %v1972
  %2000 = vst.msk [vmem:[%s10 + $0x48] sm:$0xff] %vm1653, %v1974
  %2001 = vst.msk [vmem:[%s10 + $0x50] sm:$0xff] %vm1653, %v1977
  %2002 = vst.msk [vmem:[%s10 + $0x58] sm:$0xff] %vm1653, %v1979
  %2003 = vst.msk [vmem:[%s10 + $0x60] sm:$0xff] %vm1653, %v1982
  %2004 = vst.msk [vmem:[%s10 + $0x68] sm:$0xff] %vm1653, %v1984
  %2005 = vst.msk [vmem:[%s10 + $0x70] sm:$0xff] %vm1653, %v1987
  %2006 = vst.msk [vmem:[%s10 + $0x78] sm:$0xff] %vm1653, %v1989
  %v2007 = vsel %vm1653, %v1903, 0.0
  %v2008 = vsel %vm1653, %v1905, 0.0
  %v2009 = vadd.f32 %v2007, %v2008
  %v2010 = vsel %vm1653, %v1908, 0.0
  %v2011 = vadd.f32 %v2009, %v2010
  %v2012 = vsel %vm1653, %v1910, 0.0
  %v2013 = vadd.f32 %v2011, %v2012
  %v2014 = vsel %vm1653, %v1913, 0.0
  %v2015 = vadd.f32 %v2013, %v2014
  %v2016 = vsel %vm1653, %v1915, 0.0
  %v2017 = vadd.f32 %v2015, %v2016
  %v2018 = vsel %vm1653, %v1918, 0.0
  %v2019 = vadd.f32 %v2017, %v2018
  %v2020 = vsel %vm1653, %v1920, 0.0
  %v2021 = vadd.f32 %v2019, %v2020
  %v2022 = vsel %vm1653, %v1923, 0.0
  %v2023 = vadd.f32 %v2021, %v2022
  %v2024 = vsel %vm1653, %v1925, 0.0
  %v2025 = vadd.f32 %v2023, %v2024
  %v2026 = vsel %vm1653, %v1928, 0.0
  %v2027 = vadd.f32 %v2025, %v2026
  %v2028 = vsel %vm1653, %v1930, 0.0
  %v2029 = vadd.f32 %v2027, %v2028
  %v2030 = vsel %vm1653, %v1933, 0.0
  %v2031 = vadd.f32 %v2029, %v2030
  %v2032 = vsel %vm1653, %v1935, 0.0
  %v2033 = vadd.f32 %v2031, %v2032
  %v2034 = vsel %vm1653, %v1938, 0.0
  %v2035 = vadd.f32 %v2033, %v2034
  %v2036 = vsel %vm1653, %v1940, 0.0
  %v2037 = vadd.f32 %v2035, %v2036
  %v2038 = vrot.slane %v2037, 4
  %v2039 = vadd.f32 %v2037, %v2038
  %v2040 = vrot.slane %v2039, 2
  %v2041 = vadd.f32 %v2039, %v2040
  %v2042 = vrot.slane %v2041, 1
  %v2043 = vadd.f32 %v2041, %v2042
  %v2044 = vmul.f32 %v2043, 0.0078125
  %v2045 = vsub.f32 %v1903, %v2044
  %v2046 = vsub.f32 %v1905, %v2044
  %v2047 = vsub.f32 %v1908, %v2044
  %v2048 = vsub.f32 %v1910, %v2044
  %v2049 = vsub.f32 %v1913, %v2044
  %v2050 = vsub.f32 %v1915, %v2044
  %v2051 = vsub.f32 %v1918, %v2044
  %v2052 = vsub.f32 %v1920, %v2044
  %v2053 = vsub.f32 %v1923, %v2044
  %v2054 = vsub.f32 %v1925, %v2044
  %v2055 = vsub.f32 %v1928, %v2044
  %v2056 = vsub.f32 %v1930, %v2044
  %v2057 = vsub.f32 %v1933, %v2044
  %v2058 = vsub.f32 %v1935, %v2044
  %v2059 = vsub.f32 %v1938, %v2044
  %v2060 = vsub.f32 %v1940, %v2044
  %v2061 = vmul.f32 %v2045, %v2045
  %v2062 = vmul.f32 %v2046, %v2046
  %v2063 = vmul.f32 %v2047, %v2047
  %v2064 = vmul.f32 %v2048, %v2048
  %v2065 = vmul.f32 %v2049, %v2049
  %v2066 = vmul.f32 %v2050, %v2050
  %v2067 = vmul.f32 %v2051, %v2051
  %v2068 = vmul.f32 %v2052, %v2052
  %v2069 = vmul.f32 %v2053, %v2053
  %v2070 = vmul.f32 %v2054, %v2054
  %v2071 = vmul.f32 %v2055, %v2055
  %v2072 = vmul.f32 %v2056, %v2056
  %v2073 = vmul.f32 %v2057, %v2057
  %v2074 = vmul.f32 %v2058, %v2058
  %v2075 = vmul.f32 %v2059, %v2059
  %v2076 = vmul.f32 %v2060, %v2060
  %v2077 = vsel %vm1653, %v2061, 0.0
  %v2078 = vsel %vm1653, %v2062, 0.0
  %v2079 = vadd.f32 %v2077, %v2078
  %v2080 = vsel %vm1653, %v2063, 0.0
  %v2081 = vadd.f32 %v2079, %v2080
  %v2082 = vsel %vm1653, %v2064, 0.0
  %v2083 = vadd.f32 %v2081, %v2082
  %v2084 = vsel %vm1653, %v2065, 0.0
  %v2085 = vadd.f32 %v2083, %v2084
  %v2086 = vsel %vm1653, %v2066, 0.0
  %v2087 = vadd.f32 %v2085, %v2086
  %v2088 = vsel %vm1653, %v2067, 0.0
  %v2089 = vadd.f32 %v2087, %v2088
  %v2090 = vsel %vm1653, %v2068, 0.0
  %v2091 = vadd.f32 %v2089, %v2090
  %v2092 = vsel %vm1653, %v2069, 0.0
  %v2093 = vadd.f32 %v2091, %v2092
  %v2094 = vsel %vm1653, %v2070, 0.0
  %v2095 = vadd.f32 %v2093, %v2094
  %v2096 = vsel %vm1653, %v2071, 0.0
  %v2097 = vadd.f32 %v2095, %v2096
  %v2098 = vsel %vm1653, %v2072, 0.0
  %v2099 = vadd.f32 %v2097, %v2098
  %v2100 = vsel %vm1653, %v2073, 0.0
  %v2101 = vadd.f32 %v2099, %v2100
  %v2102 = vsel %vm1653, %v2074, 0.0
  %v2103 = vadd.f32 %v2101, %v2102
  %v2104 = vsel %vm1653, %v2075, 0.0
  %v2105 = vadd.f32 %v2103, %v2104
  %v2106 = vsel %vm1653, %v2076, 0.0
  %v2107 = vadd.f32 %v2105, %v2106
  %v2108 = vrot.slane %v2107, 4
  %v2109 = vadd.f32 %v2107, %v2108
  %v2110 = vrot.slane %v2109, 2
  %v2111 = vadd.f32 %v2109, %v2110
  %v2112 = vrot.slane %v2111, 1
  %v2113 = vadd.f32 %v2111, %v2112
  %v2114 = vmul.f32 %v2113, 0.0078125
  %v2115 = vmax.f32 %v2114, 0.0
  %v2116 = vld [vmem:[%s7] sm:$0x1]
  %v2117 = vadd.f32 %v2115, 1e-05
  %v2118 = vrsqrt.pop %v2117
  %v2119 = vmul.f32 %v2118, %v2117
  %v2120 = vmul.f32 %v2119, %v2118
  %v2121 = vmul.f32 0.5, %v2120
  %v2122 = vsub.f32 1.5, %v2121
  %v2123 = vmul.f32 %v2118, %v2122
  %vm2124 = vweird.f32 %v2117
  %vm2125 = vweird.f32 %v2118
  %vm2126 = vmor %vm2124, %vm2125
  %v2127 = vsel %vm2126, %v2118, %v2123
  %v2128 = vmul.f32 %v2116, %v2127
  %v2129 = vld [vmem:[%s8] sm:$0x1]
  %v2130 = vmul.f32 %v2044, %v2128
  %v2131 = vsub.f32 %v2129, %v2130
  %v2133 = vperm.slane %v2128, 0
  %v2135 = vmul.f32 %v1903, %v2133
  %v2136 = vmul.f32 %v1905, %v2133
  %v2137 = vmul.f32 %v1908, %v2133
  %v2138 = vmul.f32 %v1910, %v2133
  %v2139 = vmul.f32 %v1913, %v2133
  %v2140 = vmul.f32 %v1915, %v2133
  %v2141 = vmul.f32 %v1918, %v2133
  %v2142 = vmul.f32 %v1920, %v2133
  %v2143 = vmul.f32 %v1923, %v2133
  %v2144 = vmul.f32 %v1925, %v2133
  %v2145 = vmul.f32 %v1928, %v2133
  %v2146 = vmul.f32 %v1930, %v2133
  %v2147 = vmul.f32 %v1933, %v2133
  %v2148 = vmul.f32 %v1935, %v2133
  %v2149 = vmul.f32 %v1938, %v2133
  %v2150 = vmul.f32 %v1940, %v2133
  %v2152 = vperm.slane %v2131, 0
  %v2154 = vadd.f32 %v2135, %v2152
  %v2155 = vadd.f32 %v2136, %v2152
  %v2156 = vadd.f32 %v2137, %v2152
  %v2157 = vadd.f32 %v2138, %v2152
  %v2158 = vadd.f32 %v2139, %v2152
  %v2159 = vadd.f32 %v2140, %v2152
  %v2160 = vadd.f32 %v2141, %v2152
  %v2161 = vadd.f32 %v2142, %v2152
  %v2162 = vadd.f32 %v2143, %v2152
  %v2163 = vadd.f32 %v2144, %v2152
  %v2164 = vadd.f32 %v2145, %v2152
  %v2165 = vadd.f32 %v2146, %v2152
  %v2166 = vadd.f32 %v2147, %v2152
  %v2167 = vadd.f32 %v2148, %v2152
  %v2168 = vadd.f32 %v2149, %v2152
  %v2169 = vadd.f32 %v2150, %v2152
  %v2170 = vmax.f32 %v2154, 0.0
  %v2171 = vmax.f32 %v2155, 0.0
  %v2172 = vmax.f32 %v2156, 0.0
  %v2173 = vmax.f32 %v2157, 0.0
  %v2174 = vmax.f32 %v2158, 0.0
  %v2175 = vmax.f32 %v2159, 0.0
  %v2176 = vmax.f32 %v2160, 0.0
  %v2177 = vmax.f32 %v2161, 0.0
  %v2178 = vmax.f32 %v2162, 0.0
  %v2179 = vmax.f32 %v2163, 0.0
  %v2180 = vmax.f32 %v2164, 0.0
  %v2181 = vmax.f32 %v2165, 0.0
  %v2182 = vmax.f32 %v2166, 0.0
  %v2183 = vmax.f32 %v2167, 0.0
  %v2184 = vmax.f32 %v2168, 0.0
  %v2185 = vmax.f32 %v2169, 0.0
  %2186 = vst.msk [vmem:[#allocation6] sm:$0xff] %vm1653, 0.0
  %vm2187 = vcmask 58368
  %2188 = vst.msk [vmem:[#allocation6 + $0x8] sm:$0x3] %vm2187, 0.0
  %2189 = vst.msk [vmem:[#allocation6 + $0xa0] sm:$0xff] %vm1653, 0.0
  %2190 = vst.msk [vmem:[#allocation6 + $0xa8] sm:$0x3] %vm2187, 0.0
  %s2191 = scalar_lea.vmem [#allocation6], 144
  %2192 = vst.msk [vmem:[%s2191] sm:$0xff] %vm1653, 0.0
  %2193 = vst.msk [vmem:[%s2191 + $0x8] sm:$0x3] %vm2187, 0.0
  %2194 = vst.msk [vmem:[%s2191 + $0xa0] sm:$0xff] %vm1653, 0.0
  %2195 = vst.msk [vmem:[%s2191 + $0xa8] sm:$0x3] %vm2187, 0.0
  %s2196 = scalar_lea.vmem [#allocation6], 16
  %vm2197 = vcmask 57344
  %2198 = vst.msk [vmem:[%s2196] sm:$0x1] %vm2197, 0.0
  %2199 = vst.msk [vmem:[%s2196 + $0x10] sm:$0x1] %vm2197, 0.0
  %2200 = vst.msk [vmem:[%s2196 + $0x20] sm:$0x1] %vm2197, 0.0
  %2201 = vst.msk [vmem:[%s2196 + $0x30] sm:$0x1] %vm2197, 0.0
  %2202 = vst.msk [vmem:[%s2196 + $0x40] sm:$0x1] %vm2197, 0.0
  %2203 = vst.msk [vmem:[%s2196 + $0x50] sm:$0x1] %vm2197, 0.0
  %2204 = vst.msk [vmem:[%s2196 + $0x60] sm:$0x1] %vm2197, 0.0
  %2205 = vst.msk [vmem:[%s2196 + $0x70] sm:$0x1] %vm2197, 0.0
  %2206 = vst.msk [vmem:[%s2196 + $0xa0] sm:$0x1] %vm2197, 0.0
  %2207 = vst.msk [vmem:[%s2196 + $0xb0] sm:$0x1] %vm2197, 0.0
  %2208 = vst.msk [vmem:[%s2196 + $0xc0] sm:$0x1] %vm2197, 0.0
  %2209 = vst.msk [vmem:[%s2196 + $0xd0] sm:$0x1] %vm2197, 0.0
  %2210 = vst.msk [vmem:[%s2196 + $0xe0] sm:$0x1] %vm2197, 0.0
  %2211 = vst.msk [vmem:[%s2196 + $0xf0] sm:$0x1] %vm2197, 0.0
  %2212 = vst.msk [vmem:[%s2196 + $0x100] sm:$0x1] %vm2197, 0.0
  %2213 = vst.msk [vmem:[%s2196 + $0x110] sm:$0x1] %vm2197, 0.0
  %2214 = vst.msk [vmem:[%s2196 + $0x9] sm:$0x1] %vm2197, 0.0
  %2215 = vst.msk [vmem:[%s2196 + $0x19] sm:$0x1] %vm2197, 0.0
  %2216 = vst.msk [vmem:[%s2196 + $0x29] sm:$0x1] %vm2197, 0.0
  %2217 = vst.msk [vmem:[%s2196 + $0x39] sm:$0x1] %vm2197, 0.0
  %2218 = vst.msk [vmem:[%s2196 + $0x49] sm:$0x1] %vm2197, 0.0
  %2219 = vst.msk [vmem:[%s2196 + $0x59] sm:$0x1] %vm2197, 0.0
  %2220 = vst.msk [vmem:[%s2196 + $0x69] sm:$0x1] %vm2197, 0.0
  %2221 = vst.msk [vmem:[%s2196 + $0x79] sm:$0x1] %vm2197, 0.0
  %2222 = vst.msk [vmem:[%s2196 + $0xa9] sm:$0x1] %vm2197, 0.0
  %2223 = vst.msk [vmem:[%s2196 + $0xb9] sm:$0x1] %vm2197, 0.0
  %2224 = vst.msk [vmem:[%s2196 + $0xc9] sm:$0x1] %vm2197, 0.0
  %2225 = vst.msk [vmem:[%s2196 + $0xd9] sm:$0x1] %vm2197, 0.0
  %2226 = vst.msk [vmem:[%s2196 + $0xe9] sm:$0x1] %vm2197, 0.0
  %2227 = vst.msk [vmem:[%s2196 + $0xf9] sm:$0x1] %vm2197, 0.0
  %2228 = vst.msk [vmem:[%s2196 + $0x109] sm:$0x1] %vm2197, 0.0
  %2229 = vst.msk [vmem:[%s2196 + $0x119] sm:$0x1] %vm2197, 0.0
  %2230 = vst.msk [vmem:[%s2196 + $0x1] sm:$0xff] %vm1653, %v2170
  %2231 = vst.msk [vmem:[%s2196 + $0x11] sm:$0xff] %vm1653, %v2171
  %2232 = vst.msk [vmem:[%s2196 + $0x21] sm:$0xff] %vm1653, %v2172
  %2233 = vst.msk [vmem:[%s2196 + $0x31] sm:$0xff] %vm1653, %v2173
  %2234 = vst.msk [vmem:[%s2196 + $0x41] sm:$0xff] %vm1653, %v2174
  %2235 = vst.msk [vmem:[%s2196 + $0x51] sm:$0xff] %vm1653, %v2175
  %2236 = vst.msk [vmem:[%s2196 + $0x61] sm:$0xff] %vm1653, %v2176
  %2237 = vst.msk [vmem:[%s2196 + $0x71] sm:$0xff] %vm1653, %v2177
  %2238 = vst.msk [vmem:[%s2196 + $0xa1] sm:$0xff] %vm1653, %v2178
  %2239 = vst.msk [vmem:[%s2196 + $0xb1] sm:$0xff] %vm1653, %v2179
  %2240 = vst.msk [vmem:[%s2196 + $0xc1] sm:$0xff] %vm1653, %v2180
  %2241 = vst.msk [vmem:[%s2196 + $0xd1] sm:$0xff] %vm1653, %v2181
  %2242 = vst.msk [vmem:[%s2196 + $0xe1] sm:$0xff] %vm1653, %v2182
  %2243 = vst.msk [vmem:[%s2196 + $0xf1] sm:$0xff] %vm1653, %v2183
  %2244 = vst.msk [vmem:[%s2196 + $0x101] sm:$0xff] %vm1653, %v2184
  %2245 = vst.msk [vmem:[%s2196 + $0x111] sm:$0xff] %vm1653, %v2185
  %v2246 = vld [vmem:[#allocation6] sm:$0xff]
  %v2247 = vld [vmem:[#allocation6 + $0x10] sm:$0xff]
  %v2248 = vld [vmem:[#allocation6 + $0x20] sm:$0xff]
  %v2249 = vld [vmem:[#allocation6 + $0x30] sm:$0xff]
  %v2250 = vld [vmem:[#allocation6 + $0x40] sm:$0xff]
  %v2251 = vld [vmem:[#allocation6 + $0x50] sm:$0xff]
  %v2252 = vld [vmem:[#allocation6 + $0x60] sm:$0xff]
  %v2253 = vld [vmem:[#allocation6 + $0x70] sm:$0xff]
  %v2254 = vld [vmem:[#allocation6 + $0xa0] sm:$0xff]
  %v2255 = vld [vmem:[#allocation6 + $0xb0] sm:$0xff]
  %v2256 = vld [vmem:[#allocation6 + $0xc0] sm:$0xff]
  %v2257 = vld [vmem:[#allocation6 + $0xd0] sm:$0xff]
  %v2258 = vld [vmem:[#allocation6 + $0xe0] sm:$0xff]
  %v2259 = vld [vmem:[#allocation6 + $0xf0] sm:$0xff]
  %v2260 = vld [vmem:[#allocation6 + $0x100] sm:$0xff]
  %v2261 = vld [vmem:[#allocation6 + $0x110] sm:$0xff]
  %v2262 = vld [vmem:[#allocation6 + $0x1] sm:$0xff]
  %v2263 = vld [vmem:[#allocation6 + $0x11] sm:$0xff]
  %v2264 = vld [vmem:[#allocation6 + $0x21] sm:$0xff]
  %v2265 = vld [vmem:[#allocation6 + $0x31] sm:$0xff]
  %v2266 = vld [vmem:[#allocation6 + $0x41] sm:$0xff]
  %v2267 = vld [vmem:[#allocation6 + $0x51] sm:$0xff]
  %v2268 = vld [vmem:[#allocation6 + $0x61] sm:$0xff]
  %v2269 = vld [vmem:[#allocation6 + $0x71] sm:$0xff]
  %v2270 = vld [vmem:[#allocation6 + $0xa1] sm:$0xff]
  %v2271 = vld [vmem:[#allocation6 + $0xb1] sm:$0xff]
  %v2272 = vld [vmem:[#allocation6 + $0xc1] sm:$0xff]
  %v2273 = vld [vmem:[#allocation6 + $0xd1] sm:$0xff]
  %v2274 = vld [vmem:[#allocation6 + $0xe1] sm:$0xff]
  %v2275 = vld [vmem:[#allocation6 + $0xf1] sm:$0xff]
  %v2276 = vld [vmem:[#allocation6 + $0x101] sm:$0xff]
  %v2277 = vld [vmem:[#allocation6 + $0x111] sm:$0xff]
  %v2278 = vld [vmem:[#allocation6 + $0x2] sm:$0xff]
  %v2279 = vld [vmem:[#allocation6 + $0x12] sm:$0xff]
  %v2280 = vld [vmem:[#allocation6 + $0x22] sm:$0xff]
  %v2281 = vld [vmem:[#allocation6 + $0x32] sm:$0xff]
  %v2282 = vld [vmem:[#allocation6 + $0x42] sm:$0xff]
  %v2283 = vld [vmem:[#allocation6 + $0x52] sm:$0xff]
  %v2284 = vld [vmem:[#allocation6 + $0x62] sm:$0xff]
  %v2285 = vld [vmem:[#allocation6 + $0x72] sm:$0xff]
  %v2286 = vld [vmem:[#allocation6 + $0xa2] sm:$0xff]
  %v2287 = vld [vmem:[#allocation6 + $0xb2] sm:$0xff]
  %v2288 = vld [vmem:[#allocation6 + $0xc2] sm:$0xff]
  %v2289 = vld [vmem:[#allocation6 + $0xd2] sm:$0xff]
  %v2290 = vld [vmem:[#allocation6 + $0xe2] sm:$0xff]
  %v2291 = vld [vmem:[#allocation6 + $0xf2] sm:$0xff]
  %v2292 = vld [vmem:[#allocation6 + $0x102] sm:$0xff]
  %v2293 = vld [vmem:[#allocation6 + $0x112] sm:$0xff]
  %v2294 = vld [vmem:[%s2196] sm:$0xff]
  %v2295 = vld [vmem:[%s2196 + $0x10] sm:$0xff]
  %v2296 = vld [vmem:[%s2196 + $0x20] sm:$0xff]
  %v2297 = vld [vmem:[%s2196 + $0x30] sm:$0xff]
  %v2298 = vld [vmem:[%s2196 + $0x40] sm:$0xff]
  %v2299 = vld [vmem:[%s2196 + $0x50] sm:$0xff]
  %v2300 = vld [vmem:[%s2196 + $0x60] sm:$0xff]
  %v2301 = vld [vmem:[%s2196 + $0x70] sm:$0xff]
  %v2302 = vld [vmem:[%s2196 + $0xa0] sm:$0xff]
  %v2303 = vld [vmem:[%s2196 + $0xb0] sm:$0xff]
  %v2304 = vld [vmem:[%s2196 + $0xc0] sm:$0xff]
  %v2305 = vld [vmem:[%s2196 + $0xd0] sm:$0xff]
  %v2306 = vld [vmem:[%s2196 + $0xe0] sm:$0xff]
  %v2307 = vld [vmem:[%s2196 + $0xf0] sm:$0xff]
  %v2308 = vld [vmem:[%s2196 + $0x100] sm:$0xff]
  %v2309 = vld [vmem:[%s2196 + $0x110] sm:$0xff]
  %v2310 = vld [vmem:[%s2196 + $0x1] sm:$0xff]
  %v2311 = vld [vmem:[%s2196 + $0x11] sm:$0xff]
  %v2312 = vld [vmem:[%s2196 + $0x21] sm:$0xff]
  %v2313 = vld [vmem:[%s2196 + $0x31] sm:$0xff]
  %v2314 = vld [vmem:[%s2196 + $0x41] sm:$0xff]
  %v2315 = vld [vmem:[%s2196 + $0x51] sm:$0xff]
  %v2316 = vld [vmem:[%s2196 + $0x61] sm:$0xff]
  %v2317 = vld [vmem:[%s2196 + $0x71] sm:$0xff]
  %v2318 = vld [vmem:[%s2196 + $0xa1] sm:$0xff]
  %v2319 = vld [vmem:[%s2196 + $0xb1] sm:$0xff]
  %v2320 = vld [vmem:[%s2196 + $0xc1] sm:$0xff]
  %v2321 = vld [vmem:[%s2196 + $0xd1] sm:$0xff]
  %v2322 = vld [vmem:[%s2196 + $0xe1] sm:$0xff]
  %v2323 = vld [vmem:[%s2196 + $0xf1] sm:$0xff]
  %v2324 = vld [vmem:[%s2196 + $0x101] sm:$0xff]
  %v2325 = vld [vmem:[%s2196 + $0x111] sm:$0xff]
  %v2326 = vld [vmem:[%s2196 + $0x2] sm:$0xff]
  %v2327 = vld [vmem:[%s2196 + $0x12] sm:$0xff]
  %v2328 = vld [vmem:[%s2196 + $0x22] sm:$0xff]
  %v2329 = vld [vmem:[%s2196 + $0x32] sm:$0xff]
  %v2330 = vld [vmem:[%s2196 + $0x42] sm:$0xff]
  %v2331 = vld [vmem:[%s2196 + $0x52] sm:$0xff]
  %v2332 = vld [vmem:[%s2196 + $0x62] sm:$0xff]
  %v2333 = vld [vmem:[%s2196 + $0x72] sm:$0xff]
  %v2334 = vld [vmem:[%s2196 + $0xa2] sm:$0xff]
  %v2335 = vld [vmem:[%s2196 + $0xb2] sm:$0xff]
  %v2336 = vld [vmem:[%s2196 + $0xc2] sm:$0xff]
  %v2337 = vld [vmem:[%s2196 + $0xd2] sm:$0xff]
  %v2338 = vld [vmem:[%s2196 + $0xe2] sm:$0xff]
  %v2339 = vld [vmem:[%s2196 + $0xf2] sm:$0xff]
  %v2340 = vld [vmem:[%s2196 + $0x102] sm:$0xff]
  %v2341 = vld [vmem:[%s2196 + $0x112] sm:$0xff]
  %s2342 = scalar_lea.vmem [#allocation6], 32
  %v2343 = vld [vmem:[%s2342] sm:$0xff]
  %v2344 = vld [vmem:[%s2342 + $0x10] sm:$0xff]
  %v2345 = vld [vmem:[%s2342 + $0x20] sm:$0xff]
  %v2346 = vld [vmem:[%s2342 + $0x30] sm:$0xff]
  %v2347 = vld [vmem:[%s2342 + $0x40] sm:$0xff]
  %v2348 = vld [vmem:[%s2342 + $0x50] sm:$0xff]
  %v2349 = vld [vmem:[%s2342 + $0x60] sm:$0xff]
  %v2350 = vld [vmem:[%s2342 + $0x70] sm:$0xff]
  %v2351 = vld [vmem:[%s2342 + $0xa0] sm:$0xff]
  %v2352 = vld [vmem:[%s2342 + $0xb0] sm:$0xff]
  %v2353 = vld [vmem:[%s2342 + $0xc0] sm:$0xff]
  %v2354 = vld [vmem:[%s2342 + $0xd0] sm:$0xff]
  %v2355 = vld [vmem:[%s2342 + $0xe0] sm:$0xff]
  %v2356 = vld [vmem:[%s2342 + $0xf0] sm:$0xff]
  %v2357 = vld [vmem:[%s2342 + $0x100] sm:$0xff]
  %v2358 = vld [vmem:[%s2342 + $0x110] sm:$0xff]
  %v2359 = vld [vmem:[%s2342 + $0x1] sm:$0xff]
  %v2360 = vld [vmem:[%s2342 + $0x11] sm:$0xff]
  %v2361 = vld [vmem:[%s2342 + $0x21] sm:$0xff]
  %v2362 = vld [vmem:[%s2342 + $0x31] sm:$0xff]
  %v2363 = vld [vmem:[%s2342 + $0x41] sm:$0xff]
  %v2364 = vld [vmem:[%s2342 + $0x51] sm:$0xff]
  %v2365 = vld [vmem:[%s2342 + $0x61] sm:$0xff]
  %v2366 = vld [vmem:[%s2342 + $0x71] sm:$0xff]
  %v2367 = vld [vmem:[%s2342 + $0xa1] sm:$0xff]
  %v2368 = vld [vmem:[%s2342 + $0xb1] sm:$0xff]
  %v2369 = vld [vmem:[%s2342 + $0xc1] sm:$0xff]
  %v2370 = vld [vmem:[%s2342 + $0xd1] sm:$0xff]
  %v2371 = vld [vmem:[%s2342 + $0xe1] sm:$0xff]
  %v2372 = vld [vmem:[%s2342 + $0xf1] sm:$0xff]
  %v2373 = vld [vmem:[%s2342 + $0x101] sm:$0xff]
  %v2374 = vld [vmem:[%s2342 + $0x111] sm:$0xff]
  %v2375 = vld [vmem:[%s2342 + $0x2] sm:$0xff]
  %v2376 = vld [vmem:[%s2342 + $0x12] sm:$0xff]
  %v2377 = vld [vmem:[%s2342 + $0x22] sm:$0xff]
  %v2378 = vld [vmem:[%s2342 + $0x32] sm:$0xff]
  %v2379 = vld [vmem:[%s2342 + $0x42] sm:$0xff]
  %v2380 = vld [vmem:[%s2342 + $0x52] sm:$0xff]
  %v2381 = vld [vmem:[%s2342 + $0x62] sm:$0xff]
  %v2382 = vld [vmem:[%s2342 + $0x72] sm:$0xff]
  %v2383 = vld [vmem:[%s2342 + $0xa2] sm:$0xff]
  %v2384 = vld [vmem:[%s2342 + $0xb2] sm:$0xff]
  %v2385 = vld [vmem:[%s2342 + $0xc2] sm:$0xff]
  %v2386 = vld [vmem:[%s2342 + $0xd2] sm:$0xff]
  %v2387 = vld [vmem:[%s2342 + $0xe2] sm:$0xff]
  %v2388 = vld [vmem:[%s2342 + $0xf2] sm:$0xff]
  %v2389 = vld [vmem:[%s2342 + $0x102] sm:$0xff]
  %v2390 = vld [vmem:[%s2342 + $0x112] sm:$0xff]
  %2407 = vrot.lane.b32.xlu0 %v2262, 8
  %v2408 = vpop.permute.xlu0 %2407
  %2409 = vrot.lane.b32.xlu0 %v2263, 8
  %v2410 = vpop.permute.xlu0 %2409
  %2411 = vrot.lane.b32.xlu0 %v2264, 8
  %v2412 = vpop.permute.xlu0 %2411
  %2413 = vrot.lane.b32.xlu0 %v2265, 8
  %v2414 = vpop.permute.xlu0 %2413
  %2415 = vrot.lane.b32.xlu0 %v2266, 8
  %v2416 = vpop.permute.xlu0 %2415
  %2417 = vrot.lane.b32.xlu0 %v2267, 8
  %v2418 = vpop.permute.xlu0 %2417
  %2419 = vrot.lane.b32.xlu0 %v2268, 8
  %v2420 = vpop.permute.xlu0 %2419
  %2421 = vrot.lane.b32.xlu0 %v2269, 8
  %v2422 = vpop.permute.xlu0 %2421
  %2423 = vrot.lane.b32.xlu0 %v2270, 8
  %v2424 = vpop.permute.xlu0 %2423
  %2425 = vrot.lane.b32.xlu0 %v2271, 8
  %v2426 = vpop.permute.xlu0 %2425
  %2427 = vrot.lane.b32.xlu0 %v2272, 8
  %v2428 = vpop.permute.xlu0 %2427
  %2429 = vrot.lane.b32.xlu0 %v2273, 8
  %v2430 = vpop.permute.xlu0 %2429
  %2431 = vrot.lane.b32.xlu0 %v2274, 8
  %v2432 = vpop.permute.xlu0 %2431
  %2433 = vrot.lane.b32.xlu0 %v2275, 8
  %v2434 = vpop.permute.xlu0 %2433
  %2435 = vrot.lane.b32.xlu0 %v2276, 8
  %v2436 = vpop.permute.xlu0 %2435
  %2437 = vrot.lane.b32.xlu0 %v2277, 8
  %v2438 = vpop.permute.xlu0 %2437
  %2471 = vrot.lane.b32.xlu0 %v2278, 16
  %v2472 = vpop.permute.xlu0 %2471
  %2473 = vrot.lane.b32.xlu0 %v2279, 16
  %v2474 = vpop.permute.xlu0 %2473
  %2475 = vrot.lane.b32.xlu0 %v2280, 16
  %v2476 = vpop.permute.xlu0 %2475
  %2477 = vrot.lane.b32.xlu0 %v2281, 16
  %v2478 = vpop.permute.xlu0 %2477
  %2479 = vrot.lane.b32.xlu0 %v2282, 16
  %v2480 = vpop.permute.xlu0 %2479
  %2481 = vrot.lane.b32.xlu0 %v2283, 16
  %v2482 = vpop.permute.xlu0 %2481
  %2483 = vrot.lane.b32.xlu0 %v2284, 16
  %v2484 = vpop.permute.xlu0 %2483
  %2485 = vrot.lane.b32.xlu0 %v2285, 16
  %v2486 = vpop.permute.xlu0 %2485
  %2487 = vrot.lane.b32.xlu0 %v2286, 16
  %v2488 = vpop.permute.xlu0 %2487
  %2489 = vrot.lane.b32.xlu0 %v2287, 16
  %v2490 = vpop.permute.xlu0 %2489
  %2491 = vrot.lane.b32.xlu0 %v2288, 16
  %v2492 = vpop.permute.xlu0 %2491
  %2493 = vrot.lane.b32.xlu0 %v2289, 16
  %v2494 = vpop.permute.xlu0 %2493
  %2495 = vrot.lane.b32.xlu0 %v2290, 16
  %v2496 = vpop.permute.xlu0 %2495
  %2497 = vrot.lane.b32.xlu0 %v2291, 16
  %v2498 = vpop.permute.xlu0 %2497
  %2499 = vrot.lane.b32.xlu0 %v2292, 16
  %v2500 = vpop.permute.xlu0 %2499
  %2501 = vrot.lane.b32.xlu0 %v2293, 16
  %v2502 = vpop.permute.xlu0 %2501
  %2535 = vrot.lane.b32.xlu0 %v2294, 24
  %v2536 = vpop.permute.xlu0 %2535
  %2537 = vrot.lane.b32.xlu0 %v2295, 24
  %v2538 = vpop.permute.xlu0 %2537
  %2539 = vrot.lane.b32.xlu0 %v2296, 24
  %v2540 = vpop.permute.xlu0 %2539
  %2541 = vrot.lane.b32.xlu0 %v2297, 24
  %v2542 = vpop.permute.xlu0 %2541
  %2543 = vrot.lane.b32.xlu0 %v2298, 24
  %v2544 = vpop.permute.xlu0 %2543
  %2545 = vrot.lane.b32.xlu0 %v2299, 24
  %v2546 = vpop.permute.xlu0 %2545
  %2547 = vrot.lane.b32.xlu0 %v2300, 24
  %v2548 = vpop.permute.xlu0 %2547
  %2549 = vrot.lane.b32.xlu0 %v2301, 24
  %v2550 = vpop.permute.xlu0 %2549
  %2551 = vrot.lane.b32.xlu0 %v2302, 24
  %v2552 = vpop.permute.xlu0 %2551
  %2553 = vrot.lane.b32.xlu0 %v2303, 24
  %v2554 = vpop.permute.xlu0 %2553
  %2555 = vrot.lane.b32.xlu0 %v2304, 24
  %v2556 = vpop.permute.xlu0 %2555
  %2557 = vrot.lane.b32.xlu0 %v2305, 24
  %v2558 = vpop.permute.xlu0 %2557
  %2559 = vrot.lane.b32.xlu0 %v2306, 24
  %v2560 = vpop.permute.xlu0 %2559
  %2561 = vrot.lane.b32.xlu0 %v2307, 24
  %v2562 = vpop.permute.xlu0 %2561
  %2563 = vrot.lane.b32.xlu0 %v2308, 24
  %v2564 = vpop.permute.xlu0 %2563
  %2565 = vrot.lane.b32.xlu0 %v2309, 24
  %v2566 = vpop.permute.xlu0 %2565
  %2599 = vrot.lane.b32.xlu0 %v2310, 32
  %v2600 = vpop.permute.xlu0 %2599
  %2601 = vrot.lane.b32.xlu0 %v2311, 32
  %v2602 = vpop.permute.xlu0 %2601
  %2603 = vrot.lane.b32.xlu0 %v2312, 32
  %v2604 = vpop.permute.xlu0 %2603
  %2605 = vrot.lane.b32.xlu0 %v2313, 32
  %v2606 = vpop.permute.xlu0 %2605
  %2607 = vrot.lane.b32.xlu0 %v2314, 32
  %v2608 = vpop.permute.xlu0 %2607
  %2609 = vrot.lane.b32.xlu0 %v2315, 32
  %v2610 = vpop.permute.xlu0 %2609
  %2611 = vrot.lane.b32.xlu0 %v2316, 32
  %v2612 = vpop.permute.xlu0 %2611
  %2613 = vrot.lane.b32.xlu0 %v2317, 32
  %v2614 = vpop.permute.xlu0 %2613
  %2615 = vrot.lane.b32.xlu0 %v2318, 32
  %v2616 = vpop.permute.xlu0 %2615
  %2617 = vrot.lane.b32.xlu0 %v2319, 32
  %v2618 = vpop.permute.xlu0 %2617
  %2619 = vrot.lane.b32.xlu0 %v2320, 32
  %v2620 = vpop.permute.xlu0 %2619
  %2621 = vrot.lane.b32.xlu0 %v2321, 32
  %v2622 = vpop.permute.xlu0 %2621
  %2623 = vrot.lane.b32.xlu0 %v2322, 32
  %v2624 = vpop.permute.xlu0 %2623
  %2625 = vrot.lane.b32.xlu0 %v2323, 32
  %v2626 = vpop.permute.xlu0 %2625
  %2627 = vrot.lane.b32.xlu0 %v2324, 32
  %v2628 = vpop.permute.xlu0 %2627
  %2629 = vrot.lane.b32.xlu0 %v2325, 32
  %v2630 = vpop.permute.xlu0 %2629
  %2663 = vrot.lane.b32.xlu0 %v2326, 40
  %v2664 = vpop.permute.xlu0 %2663
  %2665 = vrot.lane.b32.xlu0 %v2327, 40
  %v2666 = vpop.permute.xlu0 %2665
  %2667 = vrot.lane.b32.xlu0 %v2328, 40
  %v2668 = vpop.permute.xlu0 %2667
  %2669 = vrot.lane.b32.xlu0 %v2329, 40
  %v2670 = vpop.permute.xlu0 %2669
  %2671 = vrot.lane.b32.xlu0 %v2330, 40
  %v2672 = vpop.permute.xlu0 %2671
  %2673 = vrot.lane.b32.xlu0 %v2331, 40
  %v2674 = vpop.permute.xlu0 %2673
  %2675 = vrot.lane.b32.xlu0 %v2332, 40
  %v2676 = vpop.permute.xlu0 %2675
  %2677 = vrot.lane.b32.xlu0 %v2333, 40
  %v2678 = vpop.permute.xlu0 %2677
  %2679 = vrot.lane.b32.xlu0 %v2334, 40
  %v2680 = vpop.permute.xlu0 %2679
  %2681 = vrot.lane.b32.xlu0 %v2335, 40
  %v2682 = vpop.permute.xlu0 %2681
  %2683 = vrot.lane.b32.xlu0 %v2336, 40
  %v2684 = vpop.permute.xlu0 %2683
  %2685 = vrot.lane.b32.xlu0 %v2337, 40
  %v2686 = vpop.permute.xlu0 %2685
  %2687 = vrot.lane.b32.xlu0 %v2338, 40
  %v2688 = vpop.permute.xlu0 %2687
  %2689 = vrot.lane.b32.xlu0 %v2339, 40
  %v2690 = vpop.permute.xlu0 %2689
  %2691 = vrot.lane.b32.xlu0 %v2340, 40
  %v2692 = vpop.permute.xlu0 %2691
  %2693 = vrot.lane.b32.xlu0 %v2341, 40
  %v2694 = vpop.permute.xlu0 %2693
  %2727 = vrot.lane.b32.xlu0 %v2343, 48
  %v2728 = vpop.permute.xlu0 %2727
  %2729 = vrot.lane.b32.xlu0 %v2344, 48
  %v2730 = vpop.permute.xlu0 %2729
  %2731 = vrot.lane.b32.xlu0 %v2345, 48
  %v2732 = vpop.permute.xlu0 %2731
  %2733 = vrot.lane.b32.xlu0 %v2346, 48
  %v2734 = vpop.permute.xlu0 %2733
  %2735 = vrot.lane.b32.xlu0 %v2347, 48
  %v2736 = vpop.permute.xlu0 %2735
  %2737 = vrot.lane.b32.xlu0 %v2348, 48
  %v2738 = vpop.permute.xlu0 %2737
  %2739 = vrot.lane.b32.xlu0 %v2349, 48
  %v2740 = vpop.permute.xlu0 %2739
  %2741 = vrot.lane.b32.xlu0 %v2350, 48
  %v2742 = vpop.permute.xlu0 %2741
  %2743 = vrot.lane.b32.xlu0 %v2351, 48
  %v2744 = vpop.permute.xlu0 %2743
  %2745 = vrot.lane.b32.xlu0 %v2352, 48
  %v2746 = vpop.permute.xlu0 %2745
  %2747 = vrot.lane.b32.xlu0 %v2353, 48
  %v2748 = vpop.permute.xlu0 %2747
  %2749 = vrot.lane.b32.xlu0 %v2354, 48
  %v2750 = vpop.permute.xlu0 %2749
  %2751 = vrot.lane.b32.xlu0 %v2355, 48
  %v2752 = vpop.permute.xlu0 %2751
  %2753 = vrot.lane.b32.xlu0 %v2356, 48
  %v2754 = vpop.permute.xlu0 %2753
  %2755 = vrot.lane.b32.xlu0 %v2357, 48
  %v2756 = vpop.permute.xlu0 %2755
  %2757 = vrot.lane.b32.xlu0 %v2358, 48
  %v2758 = vpop.permute.xlu0 %2757
  %2791 = vrot.lane.b32.xlu0 %v2359, 56
  %v2792 = vpop.permute.xlu0 %2791
  %2793 = vrot.lane.b32.xlu0 %v2360, 56
  %v2794 = vpop.permute.xlu0 %2793
  %2795 = vrot.lane.b32.xlu0 %v2361, 56
  %v2796 = vpop.permute.xlu0 %2795
  %2797 = vrot.lane.b32.xlu0 %v2362, 56
  %v2798 = vpop.permute.xlu0 %2797
  %2799 = vrot.lane.b32.xlu0 %v2363, 56
  %v2800 = vpop.permute.xlu0 %2799
  %2801 = vrot.lane.b32.xlu0 %v2364, 56
  %v2802 = vpop.permute.xlu0 %2801
  %2803 = vrot.lane.b32.xlu0 %v2365, 56
  %v2804 = vpop.permute.xlu0 %2803
  %2805 = vrot.lane.b32.xlu0 %v2366, 56
  %v2806 = vpop.permute.xlu0 %2805
  %2807 = vrot.lane.b32.xlu0 %v2367, 56
  %v2808 = vpop.permute.xlu0 %2807
  %2809 = vrot.lane.b32.xlu0 %v2368, 56
  %v2810 = vpop.permute.xlu0 %2809
  %2811 = vrot.lane.b32.xlu0 %v2369, 56
  %v2812 = vpop.permute.xlu0 %2811
  %2813 = vrot.lane.b32.xlu0 %v2370, 56
  %v2814 = vpop.permute.xlu0 %2813
  %2815 = vrot.lane.b32.xlu0 %v2371, 56
  %v2816 = vpop.permute.xlu0 %2815
  %2817 = vrot.lane.b32.xlu0 %v2372, 56
  %v2818 = vpop.permute.xlu0 %2817
  %2819 = vrot.lane.b32.xlu0 %v2373, 56
  %v2820 = vpop.permute.xlu0 %2819
  %2821 = vrot.lane.b32.xlu0 %v2374, 56
  %v2822 = vpop.permute.xlu0 %2821
  %2855 = vrot.lane.b32.xlu0 %v2375, 64
  %v2856 = vpop.permute.xlu0 %2855
  %2857 = vrot.lane.b32.xlu0 %v2376, 64
  %v2858 = vpop.permute.xlu0 %2857
  %2859 = vrot.lane.b32.xlu0 %v2377, 64
  %v2860 = vpop.permute.xlu0 %2859
  %2861 = vrot.lane.b32.xlu0 %v2378, 64
  %v2862 = vpop.permute.xlu0 %2861
  %2863 = vrot.lane.b32.xlu0 %v2379, 64
  %v2864 = vpop.permute.xlu0 %2863
  %2865 = vrot.lane.b32.xlu0 %v2380, 64
  %v2866 = vpop.permute.xlu0 %2865
  %2867 = vrot.lane.b32.xlu0 %v2381, 64
  %v2868 = vpop.permute.xlu0 %2867
  %2869 = vrot.lane.b32.xlu0 %v2382, 64
  %v2870 = vpop.permute.xlu0 %2869
  %2871 = vrot.lane.b32.xlu0 %v2383, 64
  %v2872 = vpop.permute.xlu0 %2871
  %2873 = vrot.lane.b32.xlu0 %v2384, 64
  %v2874 = vpop.permute.xlu0 %2873
  %2875 = vrot.lane.b32.xlu0 %v2385, 64
  %v2876 = vpop.permute.xlu0 %2875
  %2877 = vrot.lane.b32.xlu0 %v2386, 64
  %v2878 = vpop.permute.xlu0 %2877
  %2879 = vrot.lane.b32.xlu0 %v2387, 64
  %v2880 = vpop.permute.xlu0 %2879
  %2881 = vrot.lane.b32.xlu0 %v2388, 64
  %v2882 = vpop.permute.xlu0 %2881
  %2883 = vrot.lane.b32.xlu0 %v2389, 64
  %v2884 = vpop.permute.xlu0 %2883
  %2885 = vrot.lane.b32.xlu0 %v2390, 64
  %v2886 = vpop.permute.xlu0 %2885
  %v2903 = vsel %vm1653, %v2246, %v2408
  %v2904 = vsel %vm1653, %v2247, %v2410
  %v2905 = vsel %vm1653, %v2248, %v2412
  %v2906 = vsel %vm1653, %v2249, %v2414
  %v2907 = vsel %vm1653, %v2250, %v2416
  %v2908 = vsel %vm1653, %v2251, %v2418
  %v2909 = vsel %vm1653, %v2252, %v2420
  %v2910 = vsel %vm1653, %v2253, %v2422
  %v2911 = vsel %vm1653, %v2254, %v2424
  %v2912 = vsel %vm1653, %v2255, %v2426
  %v2913 = vsel %vm1653, %v2256, %v2428
  %v2914 = vsel %vm1653, %v2257, %v2430
  %v2915 = vsel %vm1653, %v2258, %v2432
  %v2916 = vsel %vm1653, %v2259, %v2434
  %v2917 = vsel %vm1653, %v2260, %v2436
  %v2918 = vsel %vm1653, %v2261, %v2438
  %v2919 = vsel %vm1687, %v2903, %v2472
  %v2920 = vsel %vm1687, %v2904, %v2474
  %v2921 = vsel %vm1687, %v2905, %v2476
  %v2922 = vsel %vm1687, %v2906, %v2478
  %v2923 = vsel %vm1687, %v2907, %v2480
  %v2924 = vsel %vm1687, %v2908, %v2482
  %v2925 = vsel %vm1687, %v2909, %v2484
  %v2926 = vsel %vm1687, %v2910, %v2486
  %v2927 = vsel %vm1687, %v2911, %v2488
  %v2928 = vsel %vm1687, %v2912, %v2490
  %v2929 = vsel %vm1687, %v2913, %v2492
  %v2930 = vsel %vm1687, %v2914, %v2494
  %v2931 = vsel %vm1687, %v2915, %v2496
  %v2932 = vsel %vm1687, %v2916, %v2498
  %v2933 = vsel %vm1687, %v2917, %v2500
  %v2934 = vsel %vm1687, %v2918, %v2502
  %v2935 = vsel %vm1721, %v2919, %v2536
  %v2936 = vsel %vm1721, %v2920, %v2538
  %v2937 = vsel %vm1721, %v2921, %v2540
  %v2938 = vsel %vm1721, %v2922, %v2542
  %v2939 = vsel %vm1721, %v2923, %v2544
  %v2940 = vsel %vm1721, %v2924, %v2546
  %v2941 = vsel %vm1721, %v2925, %v2548
  %v2942 = vsel %vm1721, %v2926, %v2550
  %v2943 = vsel %vm1721, %v2927, %v2552
  %v2944 = vsel %vm1721, %v2928, %v2554
  %v2945 = vsel %vm1721, %v2929, %v2556
  %v2946 = vsel %vm1721, %v2930, %v2558
  %v2947 = vsel %vm1721, %v2931, %v2560
  %v2948 = vsel %vm1721, %v2932, %v2562
  %v2949 = vsel %vm1721, %v2933, %v2564
  %v2950 = vsel %vm1721, %v2934, %v2566
  %v2951 = vsel %vm1755, %v2935, %v2600
  %v2952 = vsel %vm1755, %v2936, %v2602
  %v2953 = vsel %vm1755, %v2937, %v2604
  %v2954 = vsel %vm1755, %v2938, %v2606
  %v2955 = vsel %vm1755, %v2939, %v2608
  %v2956 = vsel %vm1755, %v2940, %v2610
  %v2957 = vsel %vm1755, %v2941, %v2612
  %v2958 = vsel %vm1755, %v2942, %v2614
  %v2959 = vsel %vm1755, %v2943, %v2616
  %v2960 = vsel %vm1755, %v2944, %v2618
  %v2961 = vsel %vm1755, %v2945, %v2620
  %v2962 = vsel %vm1755, %v2946, %v2622
  %v2963 = vsel %vm1755, %v2947, %v2624
  %v2964 = vsel %vm1755, %v2948, %v2626
  %v2965 = vsel %vm1755, %v2949, %v2628
  %v2966 = vsel %vm1755, %v2950, %v2630
  %vm2967 = vcmask 326656
  %v2968 = vsel %vm2967, %v2951, %v2664
  %v2969 = vsel %vm2967, %v2952, %v2666
  %v2970 = vsel %vm2967, %v2953, %v2668
  %v2971 = vsel %vm2967, %v2954, %v2670
  %v2972 = vsel %vm2967, %v2955, %v2672
  %v2973 = vsel %vm2967, %v2956, %v2674
  %v2974 = vsel %vm2967, %v2957, %v2676
  %v2975 = vsel %vm2967, %v2958, %v2678
  %v2976 = vsel %vm2967, %v2959, %v2680
  %v2977 = vsel %vm2967, %v2960, %v2682
  %v2978 = vsel %vm2967, %v2961, %v2684
  %v2979 = vsel %vm2967, %v2962, %v2686
  %v2980 = vsel %vm2967, %v2963, %v2688
  %v2981 = vsel %vm2967, %v2964, %v2690
  %v2982 = vsel %vm2967, %v2965, %v2692
  %v2983 = vsel %vm2967, %v2966, %v2694
  %vm2984 = vcmask 392192
  %v2985 = vsel %vm2984, %v2968, %v2728
  %v2986 = vsel %vm2984, %v2969, %v2730
  %v2987 = vsel %vm2984, %v2970, %v2732
  %v2988 = vsel %vm2984, %v2971, %v2734
  %v2989 = vsel %vm2984, %v2972, %v2736
  %v2990 = vsel %vm2984, %v2973, %v2738
  %v2991 = vsel %vm2984, %v2974, %v2740
  %v2992 = vsel %vm2984, %v2975, %v2742
  %v2993 = vsel %vm2984, %v2976, %v2744
  %v2994 = vsel %vm2984, %v2977, %v2746
  %v2995 = vsel %vm2984, %v2978, %v2748
  %v2996 = vsel %vm2984, %v2979, %v2750
  %v2997 = vsel %vm2984, %v2980, %v2752
  %v2998 = vsel %vm2984, %v2981, %v2754
  %v2999 = vsel %vm2984, %v2982, %v2756
  %v3000 = vsel %vm2984, %v2983, %v2758
  %vm3001 = vcmask 457728
  %v3002 = vsel %vm3001, %v2985, %v2792
  %v3003 = vsel %vm3001, %v2986, %v2794
  %v3004 = vsel %vm3001, %v2987, %v2796
  %v3005 = vsel %vm3001, %v2988, %v2798
  %v3006 = vsel %vm3001, %v2989, %v2800
  %v3007 = vsel %vm3001, %v2990, %v2802
  %v3008 = vsel %vm3001, %v2991, %v2804
  %v3009 = vsel %vm3001, %v2992, %v2806
  %v3010 = vsel %vm3001, %v2993, %v2808
  %v3011 = vsel %vm3001, %v2994, %v2810
  %v3012 = vsel %vm3001, %v2995, %v2812
  %v3013 = vsel %vm3001, %v2996, %v2814
  %v3014 = vsel %vm3001, %v2997, %v2816
  %v3015 = vsel %vm3001, %v2998, %v2818
  %v3016 = vsel %vm3001, %v2999, %v2820
  %v3017 = vsel %vm3001, %v3000, %v2822
  %vm3018 = vcmask 523264
  %v3019 = vsel %vm3018, %v3002, %v2856
  %v3020 = vsel %vm3018, %v3003, %v2858
  %v3021 = vsel %vm3018, %v3004, %v2860
  %v3022 = vsel %vm3018, %v3005, %v2862
  %v3023 = vsel %vm3018, %v3006, %v2864
  %v3024 = vsel %vm3018, %v3007, %v2866
  %v3025 = vsel %vm3018, %v3008, %v2868
  %v3026 = vsel %vm3018, %v3009, %v2870
  %v3027 = vsel %vm3018, %v3010, %v2872
  %v3028 = vsel %vm3018, %v3011, %v2874
  %v3029 = vsel %vm3018, %v3012, %v2876
  %v3030 = vsel %vm3018, %v3013, %v2878
  %v3031 = vsel %vm3018, %v3014, %v2880
  %v3032 = vsel %vm3018, %v3015, %v2882
  %v3033 = vsel %vm3018, %v3016, %v2884
  %v3034 = vsel %vm3018, %v3017, %v2886
  %vm3035 = vcmask 588800
  %v3036 = vsel %vm3035, %v3019, 0.0
  %v3037 = vsel %vm3035, %v3020, 0.0
  %v3038 = vsel %vm3035, %v3021, 0.0
  %v3039 = vsel %vm3035, %v3022, 0.0
  %v3040 = vsel %vm3035, %v3023, 0.0
  %v3041 = vsel %vm3035, %v3024, 0.0
  %v3042 = vsel %vm3035, %v3025, 0.0
  %v3043 = vsel %vm3035, %v3026, 0.0
  %v3044 = vsel %vm3035, %v3027, 0.0
  %v3045 = vsel %vm3035, %v3028, 0.0
  %v3046 = vsel %vm3035, %v3029, 0.0
  %v3047 = vsel %vm3035, %v3030, 0.0
  %v3048 = vsel %vm3035, %v3031, 0.0
  %v3049 = vsel %vm3035, %v3032, 0.0
  %v3050 = vsel %vm3035, %v3033, 0.0
  %v3051 = vsel %vm3035, %v3034, 0.0
  %v3052 = vpack.c.bf16 %v3037, %v3036
  %v3053 = vpack.c.bf16 %v3039, %v3038
  %v3054 = vpack.c.bf16 %v3041, %v3040
  %v3055 = vpack.c.bf16 %v3043, %v3042
  %v3056 = vpack.c.bf16 %v3045, %v3044
  %v3057 = vpack.c.bf16 %v3047, %v3046
  %v3058 = vpack.c.bf16 %v3049, %v3048
  %v3059 = vpack.c.bf16 %v3051, %v3050
  %v3060 = vld [vmem:[%s9] sm:$0xf]
  %v3061 = vld [vmem:[%s9 + $0x4] sm:$0xf]
  %v3062 = vld [vmem:[%s9 + $0x8] sm:$0xf]
  %v3063 = vld [vmem:[%s9 + $0xc] sm:$0xf]
  %v3064 = vld [vmem:[%s9 + $0x10] sm:$0xf]
  %v3065 = vld [vmem:[%s9 + $0x14] sm:$0xf]
  %v3066 = vld [vmem:[%s9 + $0x18] sm:$0xf]
  %v3067 = vld [vmem:[%s9 + $0x1c] sm:$0xf]
  %v3068 = vld [vmem:[%s9 + $0x20] sm:$0xf]
  %v3069 = vld [vmem:[%s9 + $0x24] sm:$0xf]
  %v3070 = vld [vmem:[%s9 + $0x28] sm:$0xf]
  %v3071 = vld [vmem:[%s9 + $0x2c] sm:$0xf]
  %v3072 = vld [vmem:[%s9 + $0x30] sm:$0xf]
  %v3073 = vld [vmem:[%s9 + $0x34] sm:$0xf]
  %v3074 = vld [vmem:[%s9 + $0x38] sm:$0xf]
  %v3075 = vld [vmem:[%s9 + $0x3c] sm:$0xf]
  %v3092 = vunpack.c.l.b16 %v3060
  %v3093 = vunpack.c.l.b16 %v3061
  %v3094 = vunpack.c.l.b16 %v3062
  %v3095 = vunpack.c.l.b16 %v3063
  %v3096 = vunpack.c.l.b16 %v3064
  %v3097 = vunpack.c.l.b16 %v3065
  %v3098 = vunpack.c.l.b16 %v3066
  %v3099 = vunpack.c.l.b16 %v3067
  %v3100 = vunpack.c.l.b16 %v3068
  %v3101 = vunpack.c.l.b16 %v3069
  %v3102 = vunpack.c.l.b16 %v3070
  %v3103 = vunpack.c.l.b16 %v3071
  %v3104 = vunpack.c.l.b16 %v3072
  %v3105 = vunpack.c.l.b16 %v3073
  %v3106 = vunpack.c.l.b16 %v3074
  %v3107 = vunpack.c.l.b16 %v3075
  %v3108 = vpack.c.b16 %v3093, %v3092
  %v3109 = vpack.c.b16 %v3095, %v3094
  %v3110 = vpack.c.b16 %v3097, %v3096
  %v3111 = vpack.c.b16 %v3099, %v3098
  %v3112 = vpack.c.b16 %v3101, %v3100
  %v3113 = vpack.c.b16 %v3103, %v3102
  %v3114 = vpack.c.b16 %v3105, %v3104
  %v3115 = vpack.c.b16 %v3107, %v3106
  %3124 = vmatpush.bf16.msra.mxu0 %v3115
  %3125 = vmatpush.bf16.msra.mxu0 %v3114
  %3126 = vmatpush.bf16.msra.mxu0 %v3113
  %3127 = vmatpush.bf16.msra.mxu0 %v3112
  %3128 = vmatpush.bf16.msra.mxu0 %v3111
  %3129 = vmatpush.bf16.msra.mxu0 %v3110
  %3130 = vmatpush.bf16.msra.mxu0 %v3109
  %3131 = vmatpush.bf16.msra.mxu0 %v3108
  %3132 = vmatmul.bf16.gmra.mxu0 %v3052
  %v3133 = vpop.f32.mrf.mxu0
  %v3134 = vadd.f32 0.0, %v3133
  %v3135 = vpop.f32.mrf.mxu0
  %v3136 = vadd.f32 0.0, %v3135
  %3137 = vmatmul.bf16.gmra.mxu0 %v3053
  %v3138 = vpop.f32.mrf.mxu0
  %v3139 = vadd.f32 0.0, %v3138
  %v3140 = vpop.f32.mrf.mxu0
  %v3141 = vadd.f32 0.0, %v3140
  %3142 = vmatmul.bf16.gmra.mxu0 %v3054
  %v3143 = vpop.f32.mrf.mxu0
  %v3144 = vadd.f32 0.0, %v3143
  %v3145 = vpop.f32.mrf.mxu0
  %v3146 = vadd.f32 0.0, %v3145
  %3147 = vmatmul.bf16.gmra.mxu0 %v3055
  %v3148 = vpop.f32.mrf.mxu0
  %v3149 = vadd.f32 0.0, %v3148
  %v3150 = vpop.f32.mrf.mxu0
  %v3151 = vadd.f32 0.0, %v3150
  %3152 = vmatmul.bf16.gmra.mxu0 %v3056
  %v3153 = vpop.f32.mrf.mxu0
  %v3154 = vadd.f32 0.0, %v3153
  %v3155 = vpop.f32.mrf.mxu0
  %v3156 = vadd.f32 0.0, %v3155
  %3157 = vmatmul.bf16.gmra.mxu0 %v3057
  %v3158 = vpop.f32.mrf.mxu0
  %v3159 = vadd.f32 0.0, %v3158
  %v3160 = vpop.f32.mrf.mxu0
  %v3161 = vadd.f32 0.0, %v3160
  %3162 = vmatmul.bf16.gmra.mxu0 %v3058
  %v3163 = vpop.f32.mrf.mxu0
  %v3164 = vadd.f32 0.0, %v3163
  %v3165 = vpop.f32.mrf.mxu0
  %v3166 = vadd.f32 0.0, %v3165
  %3167 = vmatmul.bf16.gmra.mxu0 %v3059
  %v3168 = vpop.f32.mrf.mxu0
  %v3169 = vadd.f32 0.0, %v3168
  %v3170 = vpop.f32.mrf.mxu0
  %v3171 = vadd.f32 0.0, %v3170
  %3172 = vdwg.mxu0
  %v3173 = vld [vmem:[%s10] sm:$0xff]
  %v3174 = vld [vmem:[%s10 + $0x8] sm:$0xff]
  %v3175 = vld [vmem:[%s10 + $0x10] sm:$0xff]
  %v3176 = vld [vmem:[%s10 + $0x18] sm:$0xff]
  %v3177 = vld [vmem:[%s10 + $0x20] sm:$0xff]
  %v3178 = vld [vmem:[%s10 + $0x28] sm:$0xff]
  %v3179 = vld [vmem:[%s10 + $0x30] sm:$0xff]
  %v3180 = vld [vmem:[%s10 + $0x38] sm:$0xff]
  %v3181 = vld [vmem:[%s10 + $0x40] sm:$0xff]
  %v3182 = vld [vmem:[%s10 + $0x48] sm:$0xff]
  %v3183 = vld [vmem:[%s10 + $0x50] sm:$0xff]
  %v3184 = vld [vmem:[%s10 + $0x58] sm:$0xff]
  %v3185 = vld [vmem:[%s10 + $0x60] sm:$0xff]
  %v3186 = vld [vmem:[%s10 + $0x68] sm:$0xff]
  %v3187 = vld [vmem:[%s10 + $0x70] sm:$0xff]
  %v3188 = vld [vmem:[%s10 + $0x78] sm:$0xff]
  %v3189 = vadd.f32 %v3173, %v3134
  %v3190 = vadd.f32 %v3174, %v3136
  %v3191 = vadd.f32 %v3175, %v3139
  %v3192 = vadd.f32 %v3176, %v3141
  %v3193 = vadd.f32 %v3177, %v3144
  %v3194 = vadd.f32 %v3178, %v3146
  %v3195 = vadd.f32 %v3179, %v3149
  %v3196 = vadd.f32 %v3180, %v3151
  %v3197 = vadd.f32 %v3181, %v3154
  %v3198 = vadd.f32 %v3182, %v3156
  %v3199 = vadd.f32 %v3183, %v3159
  %v3200 = vadd.f32 %v3184, %v3161
  %v3201 = vadd.f32 %v3185, %v3164
  %v3202 = vadd.f32 %v3186, %v3166
  %v3203 = vadd.f32 %v3187, %v3169
  %v3204 = vadd.f32 %v3188, %v3171
  %3205 = vst.msk [vmem:[%s10] sm:$0xff] %vm1653, %v3189
  %3206 = vst.msk [vmem:[%s10 + $0x8] sm:$0xff] %vm1653, %v3190
  %3207 = vst.msk [vmem:[%s10 + $0x10] sm:$0xff] %vm1653, %v3191
  %3208 = vst.msk [vmem:[%s10 + $0x18] sm:$0xff] %vm1653, %v3192
  %3209 = vst.msk [vmem:[%s10 + $0x20] sm:$0xff] %vm1653, %v3193
  %3210 = vst.msk [vmem:[%s10 + $0x28] sm:$0xff] %vm1653, %v3194
  %3211 = vst.msk [vmem:[%s10 + $0x30] sm:$0xff] %vm1653, %v3195
  %3212 = vst.msk [vmem:[%s10 + $0x38] sm:$0xff] %vm1653, %v3196
  %3213 = vst.msk [vmem:[%s10 + $0x40] sm:$0xff] %vm1653, %v3197
  %3214 = vst.msk [vmem:[%s10 + $0x48] sm:$0xff] %vm1653, %v3198
  %3215 = vst.msk [vmem:[%s10 + $0x50] sm:$0xff] %vm1653, %v3199
  %3216 = vst.msk [vmem:[%s10 + $0x58] sm:$0xff] %vm1653, %v3200
  %3217 = vst.msk [vmem:[%s10 + $0x60] sm:$0xff] %vm1653, %v3201
  %3218 = vst.msk [vmem:[%s10 + $0x68] sm:$0xff] %vm1653, %v3202
  %3219 = vst.msk [vmem:[%s10 + $0x70] sm:$0xff] %vm1653, %v3203
  %3220 = vst.msk [vmem:[%s10 + $0x78] sm:$0xff] %vm1653, %v3204
  // Predicated region
  $region42: #{wrn_basic_block_forward.1} parent=0 // pred_check
    _
  $region43: #{wrn_basic_block_forward.1} parent=0 // pred_check_branch
    %3222 = sbr.rel (0) target = $region45
  $region44: #{wrn_basic_block_forward.1} parent=0 // pred_region
    _
  $region45: #{wrn_basic_block_forward.1} parent=0 // pred_fallthru
    _
  // Predicated region
  $region46: #{wrn_basic_block_forward.1} parent=0 // pred_check
    _
  $region47: #{wrn_basic_block_forward.1} parent=0 // pred_check_branch
    %3224 = sbr.rel (0) target = $region49
  $region48: #{wrn_basic_block_forward.1} parent=0 // pred_region
    _
  $region49: #{wrn_basic_block_forward.1} parent=0 // pred_fallthru
    _

</llo_original>
